<compile_context>
chip_gen: v7x
topology: tpu7x:2x2x1
jax: 0.10.0
libtpu: 0.0.40
codegen_flags: <defaults>
</compile_context>

<pallas_src>
import functools
import math

import jax
import jax.numpy as jnp
from jax import lax
from jax.experimental import pallas as pl
from jax.experimental.pallas import tpu as pltpu

LN_EPS = 1e-12   # BERT-style LayerNorm eps
NEG_BIG = -1e30


# ----------------------------- in-kernel helpers -----------------------------

def _layer_norm(x, w, b):
    mu = jnp.mean(x, axis=-1, keepdims=True)
    var = jnp.mean((x - mu) ** 2, axis=-1, keepdims=True)
    return (x - mu) * lax.rsqrt(var + LN_EPS) * w + b


def _gelu(x):
    # tanh approximation of GELU (BERT-style gelu in the reference codebase)
    c = math.sqrt(2.0 / math.pi)
    return 0.5 * x * (1.0 + jnp.tanh(c * (x + 0.044715 * x * x * x)))


# ----------------------- capability probe / VMEM budgeting --------------------

_PIPELINE_MODE_PROBED = False
_PIPELINE_MODE = None


def _weight_pipeline_mode():
    """pl.Buffered(1) if single-buffering grid-invariant inputs is supported by
    the top-level pallas_call pipeline, else None (default double-buffering).
    Probed once with a tiny kernel so an unsupported API can never break the
    real forward pass."""
    global _PIPELINE_MODE_PROBED, _PIPELINE_MODE
    if _PIPELINE_MODE_PROBED:
        return _PIPELINE_MODE
    _PIPELINE_MODE_PROBED = True
    try:
        mode = pl.Buffered(1)

        def _probe(a_ref, o_ref):
            o_ref[...] = a_ref[...] * 2.0

        out = pl.pallas_call(
            _probe,
            out_shape=jax.ShapeDtypeStruct((16, 128), jnp.float32),
            grid=(2,),
            in_specs=[pl.BlockSpec((8, 128), lambda i: (0, 0), pipeline_mode=mode)],
            out_specs=pl.BlockSpec((8, 128), lambda i: (i, 0)),
        )(jnp.ones((8, 128), jnp.float32))
        jax.block_until_ready(out)
        _PIPELINE_MODE = mode
    except Exception:
        _PIPELINE_MODE = None
    return _PIPELINE_MODE


def _nbytes(shape, dtype):
    return math.prod(shape) * jnp.dtype(dtype).itemsize


def _vmem_cap_bytes():
    # 3/4 of physical VMEM (leaves headroom for compiler internal scratch):
    # ~48 MiB on v7x (64 MiB physical), ~96 MiB on v5e/v6e (128 MiB physical).
    try:
        phys = int(pltpu.get_tpu_info().vmem_capacity_bytes)
    except Exception:
        phys = 64 << 20   # conservative fallback (v7x)
    return (phys * 3) // 4


def _vmem_limit(est_bytes):
    return int(min(max(est_bytes + (4 << 20), 16 << 20), _vmem_cap_bytes()))


# --------------------------------- kernels ------------------------------------

def make_transformer_stack_kernel(num_heads, rows_per_block):
    """Embedding-LN + L transformer layers, grid=(B/RB, L), l innermost.

    The running activation is carried across the l axis in a f32 VMEM scratch;
    the bf16 output block is written only at l == L-1.
    """
    H = num_heads
    RB = rows_per_block

    def kernel(x_ref, amask_ref, elnw_ref, elnb_ref,
               qkvw_ref, qkvb_ref, ow_ref, ob_ref, alnw_ref, alnb_ref,
               f1w_ref, f1b_ref, f2w_ref, f2b_ref, flnw_ref, flnb_ref,
               o_ref, acc_ref):
        l = pl.program_id(1)
        _, S, D = x_ref.shape
        hd = D // H

        # layer 0: load the (bf16) embedding block and apply the embedding LN.
        @pl.when(l == 0)
        def _():
            x0 = x_ref[...].astype(jnp.float32).reshape(RB * S, D)
            acc_ref[...] = _layer_norm(x0, elnw_ref[...], elnb_ref[...])

        x = acc_ref[...]                                   # (RB*S, D) f32
        xb = x.astype(jnp.bfloat16)

        # fused QKV in-projection (q columns pre-scaled by 1/sqrt(hd) at init)
        qkv = jnp.dot(xb, qkvw_ref[0],
                      preferred_element_type=jnp.float32) + qkvb_ref[0]  # (RB*S, 3D)
        q = qkv[:, :D]
        k = qkv[:, D:2 * D]
        v = qkv[:, 2 * D:]

        # attention per sequence row (RB small); heads batched into 3-D einsums.
        ctx_rows = []
        for r in range(RB):
            qr = q[r * S:(r + 1) * S, :]
            kr = k[r * S:(r + 1) * S, :]
            vr = v[r * S:(r + 1) * S, :]
            q3 = jnp.stack([qr[:, h * hd:(h + 1) * hd] for h in range(H)], 0).astype(jnp.bfloat16)
            k3 = jnp.stack([kr[:, h * hd:(h + 1) * hd] for h in range(H)], 0).astype(jnp.bfloat16)
            v3 = jnp.stack([vr[:, h * hd:(h + 1) * hd] for h in range(H)], 0).astype(jnp.bfloat16)

            scores = jnp.einsum('hqd,hkd->hqk', q3, k3,
                                preferred_element_type=jnp.float32)       # (H,S,S)
            scores = scores + amask_ref[r]                                # additive key mask (1,S)
            scores = scores - jnp.max(scores, axis=-1, keepdims=True)
            p = jnp.exp(scores)
            p = p * pl.reciprocal(jnp.sum(p, axis=-1, keepdims=True), approx=True)
            ctx = jnp.einsum('hqk,hkd->hqd', p.astype(jnp.bfloat16), v3,
                             preferred_element_type=jnp.float32)          # (H,S,hd)
            ctx_rows.append(jnp.concatenate([ctx[h] for h in range(H)], axis=-1))
        attn = ctx_rows[0] if RB == 1 else jnp.concatenate(ctx_rows, axis=0)  # (RB*S, D)

        attn = jnp.dot(attn.astype(jnp.bfloat16), ow_ref[0],
                       preferred_element_type=jnp.float32) + ob_ref[0]

        # residual + post-LN, FFN + residual + post-LN
        h1 = _layer_norm(x + attn, alnw_ref[0], alnb_ref[0])
        f = jnp.dot(h1.astype(jnp.bfloat16), f1w_ref[0],
                    preferred_element_type=jnp.float32) + f1b_ref[0]
        f = _gelu(f)
        f = jnp.dot(f.astype(jnp.bfloat16), f2w_ref[0],
                    preferred_element_type=jnp.float32) + f2b_ref[0]
        acc_ref[...] = _layer_norm(h1 + f, flnw_ref[0], flnb_ref[0])

        @pl.when(l == pl.num_programs(1) - 1)
        def _():
            o_ref[...] = acc_ref[...].reshape(RB, S, D).astype(o_ref.dtype)

    return kernel


def make_classifier_kernel(num_tags):
    """Linear + log-softmax + NLL(ignore_index=-1) + first-argmax.

    Logits are computed transposed (T_pad, S) so all tag-axis reductions give
    lane-dense (1, S) results and pred/nll are stored with S on lanes.
    """

    def kernel(x_ref, tgt_ref, wT_ref, bT_ref, pred_ref, nll_ref):
        x = x_ref[0].astype(jnp.bfloat16)                    # (S, D)
        tgt = tgt_ref[0]                                     # (1, S) int32

        # (T_pad, D) @ (S, D)^T -> (T_pad, S); bf16 MXU, f32 accumulate.
        logits_t = lax.dot_general(wT_ref[...], x, (((1,), (1,)), ((), ())),
                                   preferred_element_type=jnp.float32) + bT_ref[...]
        Tp, S = logits_t.shape
        tag_iota = lax.broadcasted_iota(jnp.int32, (Tp, S), 0)

        m = jnp.max(logits_t, axis=0, keepdims=True)         # (1, S)
        z = logits_t - m
        lse = jnp.log(jnp.sum(jnp.exp(z), axis=0, keepdims=True))
        logp_t = z - lse                                     # (Tp, S)

        # NLL gather via one-hot compare (padded tag rows never match a target;
        # target == -1 (ignore_index) matches nothing -> 0, masked in wrapper).
        onehot = tag_iota == tgt
        nll_ref[0] = -jnp.sum(jnp.where(onehot, logp_t, 0.0), axis=0, keepdims=True)

        # first-argmax over real tags only (padded rows have bias -1e30)
        valid_tag = tag_iota < num_tags
        idx = jnp.where((logits_t == m) & valid_tag, tag_iota, jnp.int32(Tp))
        pred_ref[0] = jnp.min(idx, axis=0, keepdims=True)

    return kernel


# ------------------------------ pallas wrappers --------------------------------

_LAYER_KEYS = ("qkv_w", "qkv_b", "out_w", "out_b", "aln_w", "aln_b",
               "fc1_w", "fc1_b", "fc2_w", "fc2_b", "fln_w", "fln_b")


def run_transformer_stack(x, add_mask, params, num_heads):
    """x: (B,S,D) bf16 embeddings (pre-LN), add_mask: (B,1,S) f32 additive mask."""
    B, S, D = x.shape
    L = params["qkv_w"].shape[0]
    FF = params["fc1_w"].shape[-1]
    RB = 2 if (B % 2 == 0 and B >= 2) else 1      # rows per grid step (MXU M fill)
    mode = _weight_pipeline_mode()

    weights = [params[k] for k in _LAYER_KEYS]

    def row_spec(shape):
        return pl.BlockSpec(shape, lambda b, l: (b, 0, 0))

    def const_spec(a):
        zeros = (0,) * a.ndim
        if mode is None:
            return pl.BlockSpec(a.shape, lambda b, l, _z=zeros: _z)
        return pl.BlockSpec(a.shape, lambda b, l, _z=zeros: _z, pipeline_mode=mode)

    def layer_spec(a):
        zeros = (0,) * (a.ndim - 1)
        return pl.BlockSpec((1,) + a.shape[1:], lambda b, l, _z=zeros: (l,) + _z)

    in_specs = ([row_spec((RB, S, D)), row_spec((RB, 1, S)),
                 const_spec(params["emb_ln_w"]), const_spec(params["emb_ln_b"])]
                + [layer_spec(w) for w in weights])

    # VMEM budget: double-buffered activation/mask/out blocks + double-buffered
    # per-layer weight slab (prefetch layer l+1) + single/double emb-LN params
    # + attention & FFN intermediates + the f32 activation scratch.
    blk_bytes = (2 * (_nbytes((RB, S, D), x.dtype) * 2 + _nbytes((RB, 1, S), jnp.float32))
                 + 2 * sum(_nbytes((1,) + w.shape[1:], w.dtype) for w in weights)
                 + (1 if mode is not None else 2)
                 * 2 * _nbytes(params["emb_ln_w"].shape, jnp.float32))
    interm = (RB * 3 * num_heads * S * S * 4            # scores / p / exp temps
              + 2 * RB * S * (3 * D + FF) * 4           # qkv + ffn intermediates
              + 6 * RB * S * D * 4)                     # scratch, residuals, temps
    vmem_limit_bytes = _vmem_limit(blk_bytes + interm)

    hd = D // num_heads
    cost = pl.CostEstimate(
        flops=int(B * L * (2 * S * (4 * D * D + 2 * D * FF)
                           + 4 * num_heads * S * S * hd)),
        transcendentals=int(B * L * (num_heads * S * S + S * FF)),
        bytes_accessed=int(2 * _nbytes((B, S, D), x.dtype)
                           + (B // RB) * sum(_nbytes(w.shape, w.dtype) for w in weights)),
    )

    return pl.pallas_call(
        make_transformer_stack_kernel(num_heads, RB),
        out_shape=jax.ShapeDtypeStruct((B, S, D), jnp.bfloat16),
        grid=(B // RB, L),
        in_specs=in_specs,
        out_specs=row_spec((RB, S, D)),
        scratch_shapes=[pltpu.VMEM((RB * S, D), jnp.float32)],
        compiler_params=pltpu.CompilerParams(
            dimension_semantics=("parallel", "arbitrary"),
            vmem_limit_bytes=vmem_limit_bytes),
        cost_estimate=cost,
    )(x, add_mask, params["emb_ln_w"], params["emb_ln_b"], *weights)


def run_classifier(x, tgt, wT, bT, num_tags):
    B, S, D = x.shape
    Tp = wT.shape[0]
    mode = _weight_pipeline_mode()
    tgt3 = tgt.astype(jnp.int32).reshape(B, 1, S)            # lane-dense targets

    def wspec(a):
        zeros = (0,) * a.ndim
        if mode is None:
            return pl.BlockSpec(a.shape, lambda b, _z=zeros: _z)
        return pl.BlockSpec(a.shape, lambda b, _z=zeros: _z, pipeline_mode=mode)

    est = (2 * (_nbytes((1, S, D), x.dtype) + 3 * _nbytes((1, 1, S), jnp.float32))
           + (1 if mode is not None else 2)
           * (_nbytes(wT.shape, wT.dtype) + _nbytes(bT.shape, bT.dtype))
           + 8 * Tp * S * 4)
    cost = pl.CostEstimate(
        flops=int(2 * B * S * D * Tp),
        transcendentals=int(B * S * Tp),
        bytes_accessed=int(_nbytes(x.shape, x.dtype) + _nbytes(wT.shape, wT.dtype)
                           + 3 * B * S * 4),
    )

    pred3, nll3 = pl.pallas_call(
        make_classifier_kernel(num_tags),
        out_shape=(jax.ShapeDtypeStruct((B, 1, S), jnp.int32),
                   jax.ShapeDtypeStruct((B, 1, S), jnp.float32)),
        grid=(B,),
        in_specs=[pl.BlockSpec((1, S, D), lambda b: (b, 0, 0)),
                  pl.BlockSpec((1, 1, S), lambda b: (b, 0, 0)),
                  wspec(wT), wspec(bT)],
        out_specs=(pl.BlockSpec((1, 1, S), lambda b: (b, 0, 0)),
                   pl.BlockSpec((1, 1, S), lambda b: (b, 0, 0))),
        compiler_params=pltpu.CompilerParams(
            dimension_semantics=("parallel",),
            vmem_limit_bytes=_vmem_limit(est)),
        cost_estimate=cost,
    )(x, tgt3, wT, bT)
    return pred3[:, 0, :], nll3[:, 0, :]


# ---------------------------- parameters / forward ------------------------------

def init_params(key, vocab_size, D, FF, L, T, max_seq, padding_id, num_heads):
    ks = jax.random.split(key, 8)

    def nrm(k, shape):
        return 0.02 * jax.random.normal(k, shape, dtype=jnp.float32)

    tok = nrm(ks[0], (vocab_size, D)).at[padding_id].set(0.0)   # Embedding padding row
    pos = nrm(ks[1], (max_seq, D))
    seg = nrm(ks[2], (2, D))

    hd = D // num_heads
    scaling = 1.0 / math.sqrt(hd)
    # fold the 1/sqrt(hd) attention scaling into the q columns of the QKV weight
    qkv_w = nrm(ks[3], (L, D, 3 * D)).at[:, :, :D].multiply(scaling)
    out_w = nrm(ks[4], (L, D, D))
    fc1_w = nrm(ks[5], (L, D, FF))
    fc2_w = nrm(ks[6], (L, FF, D))

    # classifier stored as (T_pad, D) bf16 (PyTorch (out,in) layout); tag dim is
    # only padded to the sublane pack (16), padded rows get a -1e30 bias.
    T_pad = ((T + 15) // 16) * 16
    cls_wT = jnp.zeros((T_pad, D), jnp.float32).at[:T].set(nrm(ks[7], (T, D)))
    cls_bT = jnp.full((T_pad, 1), NEG_BIG, jnp.float32).at[:T].set(0.0)

    return dict(
        tok=tok, pos=pos, seg=seg,
        emb_ln_w=jnp.ones((1, D), jnp.float32), emb_ln_b=jnp.zeros((1, D), jnp.float32),
        qkv_w=qkv_w.astype(jnp.bfloat16), qkv_b=jnp.zeros((L, 1, 3 * D), jnp.float32),
        out_w=out_w.astype(jnp.bfloat16), out_b=jnp.zeros((L, 1, D), jnp.float32),
        aln_w=jnp.ones((L, 1, D), jnp.float32), aln_b=jnp.zeros((L, 1, D), jnp.float32),
        fc1_w=fc1_w.astype(jnp.bfloat16), fc1_b=jnp.zeros((L, 1, FF), jnp.float32),
        fc2_w=fc2_w.astype(jnp.bfloat16), fc2_b=jnp.zeros((L, 1, D), jnp.float32),
        fln_w=jnp.ones((L, 1, D), jnp.float32), fln_b=jnp.zeros((L, 1, D), jnp.float32),
        cls_wT=cls_wT.astype(jnp.bfloat16), cls_bT=cls_bT,
    )


def lasertagger_forward(params, src_tokens, tgt_tokens, *, num_heads, num_tags, padding_id):
    """src_tokens, tgt_tokens: (B, S) int32.  Returns (pred (B,S) int32, loss scalar)."""
    B, S = src_tokens.shape
    # BERTLM.work embeddings: tok + seg(=0) + pos  (glue: gathers in plain JAX)
    tok_e = params["tok"][src_tokens]
    seg_e = params["seg"][jnp.zeros_like(src_tokens)]
    pos_e = params["pos"][jnp.arange(S)][None, :, :]
    x = (tok_e + seg_e + pos_e).astype(jnp.bfloat16)          # bf16 HBM activation

    # additive key-padding mask (0 for real keys, -1e30 for padded keys)
    add_mask = jnp.where(src_tokens == padding_id,
                         jnp.float32(NEG_BIG), jnp.float32(0.0)).reshape(B, 1, S)

    # fused embedding-LN + L transformer layers (single pallas_call)
    h = run_transformer_stack(x, add_mask, params, num_heads)

    # classifier + CrossEntropyLoss(ignore_index=-1) + argmax
    pred, nll = run_classifier(h, tgt_tokens, params["cls_wT"], params["cls_bT"], num_tags)
    valid = (tgt_tokens != -1).astype(jnp.float32)
    loss = jnp.sum(nll * valid) / jnp.maximum(jnp.sum(valid), 1.0)
    return pred, loss


# ------------------------------------ main --------------------------------------

if __name__ == "__main__":
    B, S, D, FF, H, L = 2, 8, 32, 64, 4, 2
    vocab_size, num_tags, max_seq, padding_id = 50, 6, 16, 0

    key = jax.random.PRNGKey(0)
    kp, ksrc, ktgt = jax.random.split(key, 3)
    params = init_params(kp, vocab_size, D, FF, L, num_tags, max_seq, padding_id, H)

    # token ids avoid padding_id (so PyTorch's padding_mask would be None -> no masking)
    src = jax.random.randint(ksrc, (B, S), 1, vocab_size, dtype=jnp.int32)
    tgt = jax.random.randint(ktgt, (B, S), 0, num_tags, dtype=jnp.int32)

    _weight_pipeline_mode()   # probe Buffered(1) support once, outside jit

    fwd = jax.jit(functools.partial(lasertagger_forward, num_heads=H,
                                    num_tags=num_tags, padding_id=padding_id))
    pred, loss = fwd(params, src, tgt)
    jax.block_until_ready((pred, loss))

    assert pred.shape == (B, S) and loss.shape == ()
    assert bool(jnp.isfinite(loss))
    assert int(pred.min()) >= 0 and int(pred.max()) < num_tags
    print("KERNEL_OK")
</pallas_src>

<mosaic_0001>
module attributes {stable_mosaic.version = 11 : i64} {
  func.func @_probe(%arg0: i32, %arg1: memref<8x128xf32, #tpu.memory_space<vmem>>, %arg2: memref<8x128xf32, #tpu.memory_space<vmem>>) attributes {dimension_semantics = [#tpu.dimension_semantics<arbitrary>], iteration_bounds = array<i64: 2>, scalar_prefetch = 0 : i64, scratch_operands = 0 : i64, tpu.core_type = #tpu.core_type<tc>, window_params = [{pipeline_mode = #tpu.pipeline_mode<synchronous>, transform_indices = @transform_0, window_bounds = array<i64: 8, 128>}, {transform_indices = @transform_1, window_bounds = array<i64: 8, 128>}]} {
    %c0 = arith.constant 0 : index
    %c0_0 = arith.constant 0 : index
    %0 = vector.load %arg1[%c0, %c0_0] : memref<8x128xf32, #tpu.memory_space<vmem>>, vector<8x128xf32>
    %cst = arith.constant 2.000000e+00 : f32
    %1 = vector.broadcast %cst : f32 to vector<8x128xf32>
    %2 = arith.mulf %0, %1 : vector<8x128xf32>
    %c0_1 = arith.constant 0 : index
    %c0_2 = arith.constant 0 : index
    %3 = vector.load %arg2[%c0_1, %c0_2] : memref<8x128xf32, #tpu.memory_space<vmem>>, vector<8x128xf32>
    tpu.vector_store %arg2[%c0_1, %c0_2], %2 {strides = array<i32>} : memref<8x128xf32, #tpu.memory_space<vmem>>, vector<8x128xf32>,
    return
  }
  func.func @transform_0(%arg0: i32) -> (i32, i32) {
    %c0_i32 = arith.constant 0 : i32
    %c0_i32_0 = arith.constant 0 : i32
    %c0_i32_1 = arith.constant 0 : i32
    return %c0_i32, %c0_i32_0 : i32, i32
  }
  func.func @transform_1(%arg0: i32) -> (i32, i32) {
    %c0_i32 = arith.constant 0 : i32
    %c0_i32_0 = arith.constant 0 : i32
    return %arg0, %c0_i32 : i32, i32
  }
}

module attributes {stable_mosaic.version = 11 : i64} {
  func.func @kernel(%arg0: i32, %arg1: i32, %arg2: memref<2x8x32xbf16, #tpu.memory_space<vmem>>, %arg3: memref<2x1x8xf32, #tpu.memory_space<vmem>>, %arg4: memref<1x32xf32, #tpu.memory_space<vmem>>, %arg5: memref<1x32xf32, #tpu.memory_space<vmem>>, %arg6: memref<1x32x96xbf16, #tpu.memory_space<vmem>>, %arg7: memref<1x1x96xf32, #tpu.memory_space<vmem>>, %arg8: memref<1x32x32xbf16, #tpu.memory_space<vmem>>, %arg9: memref<1x1x32xf32, #tpu.memory_space<vmem>>, %arg10: memref<1x1x32xf32, #tpu.memory_space<vmem>>, %arg11: memref<1x1x32xf32, #tpu.memory_space<vmem>>, %arg12: memref<1x32x64xbf16, #tpu.memory_space<vmem>>, %arg13: memref<1x1x64xf32, #tpu.memory_space<vmem>>, %arg14: memref<1x64x32xbf16, #tpu.memory_space<vmem>>, %arg15: memref<1x1x32xf32, #tpu.memory_space<vmem>>, %arg16: memref<1x1x32xf32, #tpu.memory_space<vmem>>, %arg17: memref<1x1x32xf32, #tpu.memory_space<vmem>>, %arg18: memref<2x8x32xbf16, #tpu.memory_space<vmem>>, %arg19: memref<16x32xf32, #tpu.memory_space<vmem>>) attributes {dimension_semantics = [#tpu.dimension_semantics<parallel>, #tpu.dimension_semantics<arbitrary>], iteration_bounds = array<i64: 1, 2>, scalar_prefetch = 0 : i64, scratch_operands = 1 : i64, tpu.core_type = #tpu.core_type<tc>, window_params = [{transform_indices = @transform_0, window_bounds = array<i64: 2, 8, 32>}, {transform_indices = @transform_1, window_bounds = array<i64: 2, 1, 8>}, {pipeline_mode = #tpu.pipeline_mode<synchronous>, transform_indices = @transform_2, window_bounds = array<i64: 1, 32>}, {pipeline_mode = #tpu.pipeline_mode<synchronous>, transform_indices = @transform_3, window_bounds = array<i64: 1, 32>}, {transform_indices = @transform_4, window_bounds = array<i64: 1, 32, 96>}, {transform_indices = @transform_5, window_bounds = array<i64: 1, 1, 96>}, {transform_indices = @transform_6, window_bounds = array<i64: 1, 32, 32>}, {transform_indices = @transform_7, window_bounds = array<i64: 1, 1, 32>}, {transform_indices = @transform_8, window_bounds = array<i64: 1, 1, 32>}, {transform_indices = @transform_9, window_bounds = array<i64: 1, 1, 32>}, {transform_indices = @transform_10, window_bounds = array<i64: 1, 32, 64>}, {transform_indices = @transform_11, window_bounds = array<i64: 1, 1, 64>}, {transform_indices = @transform_12, window_bounds = array<i64: 1, 64, 32>}, {transform_indices = @transform_13, window_bounds = array<i64: 1, 1, 32>}, {transform_indices = @transform_14, window_bounds = array<i64: 1, 1, 32>}, {transform_indices = @transform_15, window_bounds = array<i64: 1, 1, 32>}, {transform_indices = @transform_16, window_bounds = array<i64: 2, 8, 32>}]} {
    %c0_i32 = arith.constant 0 : i32
    %0 = arith.cmpi eq, %arg1, %c0_i32 : i32
    %1 = arith.extui %0 : i1 to i32
    %c0_i32_0 = arith.constant 0 : i32
    %2 = arith.cmpi ne, %1, %c0_i32_0 : i32
    scf.if %2 {
      %c0_71 = arith.constant 0 : index
      %c0_72 = arith.constant 0 : index
      %c0_73 = arith.constant 0 : index
      %231 = vector.load %arg2[%c0_71, %c0_72, %c0_73] : memref<2x8x32xbf16, #tpu.memory_space<vmem>>, vector<2x8x32xbf16>
      %232 = arith.extf %231 : vector<2x8x32xbf16> to vector<2x8x32xf32>
      %233 = vector.shape_cast %232 : vector<2x8x32xf32> to vector<16x32xf32>
      %c0_74 = arith.constant 0 : index
      %c0_75 = arith.constant 0 : index
      %234 = vector.load %arg4[%c0_74, %c0_75] : memref<1x32xf32, #tpu.memory_space<vmem>>, vector<1x32xf32>
      %c0_76 = arith.constant 0 : index
      %c0_77 = arith.constant 0 : index
      %235 = vector.load %arg5[%c0_76, %c0_77] : memref<1x32xf32, #tpu.memory_space<vmem>>, vector<1x32xf32>
      %cst_78 = arith.constant dense<0.000000e+00> : vector<16xf32>
      %236 = vector.multi_reduction <add>, %233, %cst_78 [1] : vector<16x32xf32> to vector<16xf32>
      %237 = vector.shape_cast %236 : vector<16xf32> to vector<16x1xf32>
      %cst_79 = arith.constant 3.200000e+01 : f32
      %238 = vector.broadcast %cst_79 : f32 to vector<16x1xf32>
      %239 = arith.divf %237, %238 : vector<16x1xf32>
      %240 = vector.broadcast %239 : vector<16x1xf32> to vector<16x32xf32>
      %241 = arith.subf %233, %240 : vector<16x32xf32>
      %242 = arith.mulf %241, %241 : vector<16x32xf32>
      %cst_80 = arith.constant dense<0.000000e+00> : vector<16xf32>
      %243 = vector.multi_reduction <add>, %242, %cst_80 [1] : vector<16x32xf32> to vector<16xf32>
      %244 = vector.shape_cast %243 : vector<16xf32> to vector<16x1xf32>
      %cst_81 = arith.constant 3.200000e+01 : f32
      %245 = vector.broadcast %cst_81 : f32 to vector<16x1xf32>
      %246 = arith.divf %244, %245 : vector<16x1xf32>
      %247 = vector.broadcast %239 : vector<16x1xf32> to vector<16x32xf32>
      %248 = arith.subf %233, %247 : vector<16x32xf32>
      %cst_82 = arith.constant 9.99999996E-13 : f32
      %249 = vector.broadcast %cst_82 : f32 to vector<16x1xf32>
      %250 = arith.addf %246, %249 : vector<16x1xf32>
      %251 = math.rsqrt %250 : vector<16x1xf32>
      %252 = vector.broadcast %251 : vector<16x1xf32> to vector<16x32xf32>
      %253 = arith.mulf %248, %252 : vector<16x32xf32>
      %254 = vector.broadcast %234 : vector<1x32xf32> to vector<16x32xf32>
      %255 = arith.mulf %253, %254 : vector<16x32xf32>
      %256 = vector.broadcast %235 : vector<1x32xf32> to vector<16x32xf32>
      %257 = arith.addf %255, %256 : vector<16x32xf32>
      %c0_83 = arith.constant 0 : index
      %c0_84 = arith.constant 0 : index
      %258 = vector.load %arg19[%c0_83, %c0_84] : memref<16x32xf32, #tpu.memory_space<vmem>>, vector<16x32xf32>
      tpu.vector_store %arg19[%c0_83, %c0_84], %257 {strides = array<i32>} : memref<16x32xf32, #tpu.memory_space<vmem>>, vector<16x32xf32>,
    } else {
    }
    %c0 = arith.constant 0 : index
    %c0_1 = arith.constant 0 : index
    %3 = vector.load %arg19[%c0, %c0_1] : memref<16x32xf32, #tpu.memory_space<vmem>>, vector<16x32xf32>
    %4 = arith.truncf %3 : vector<16x32xf32> to vector<16x32xbf16>
    %c0_2 = arith.constant 0 : index
    %c0_3 = arith.constant 0 : index
    %c0_4 = arith.constant 0 : index
    %5 = vector.load %arg6[%c0_2, %c0_3, %c0_4] : memref<1x32x96xbf16, #tpu.memory_space<vmem>>, vector<1x32x96xbf16>
    %6 = vector.shape_cast %5 : vector<1x32x96xbf16> to vector<32x96xbf16>
    %cst = arith.constant dense<0.000000e+00> : vector<16x96xf32>
    %7 = tpu.matmul %4, %6, %cst {dimension_numbers = #tpu.dot_dimension_numbers<[1], [0], [0], [1], [0, 0, 1, 1], [], []>} : vector<16x32xbf16>, vector<32x96xbf16>, vector<16x96xf32> -> vector<16x96xf32>
    %c0_5 = arith.constant 0 : index
    %c0_6 = arith.constant 0 : index
    %c0_7 = arith.constant 0 : index
    %8 = vector.load %arg7[%c0_5, %c0_6, %c0_7] : memref<1x1x96xf32, #tpu.memory_space<vmem>>, vector<1x1x96xf32>
    %9 = vector.shape_cast %8 : vector<1x1x96xf32> to vector<1x96xf32>
    %10 = vector.broadcast %9 : vector<1x96xf32> to vector<16x96xf32>
    %11 = arith.addf %7, %10 : vector<16x96xf32>
    %12 = vector.extract_strided_slice %11 {offsets = [0, 0], sizes = [16, 32], strides = [1, 1]} : vector<16x96xf32> to vector<16x32xf32>
    %13 = vector.extract_strided_slice %11 {offsets = [0, 32], sizes = [16, 32], strides = [1, 1]} : vector<16x96xf32> to vector<16x32xf32>
    %14 = vector.extract_strided_slice %11 {offsets = [0, 64], sizes = [16, 32], strides = [1, 1]} : vector<16x96xf32> to vector<16x32xf32>
    %15 = vector.extract_strided_slice %12 {offsets = [0, 0], sizes = [8, 32], strides = [1, 1]} : vector<16x32xf32> to vector<8x32xf32>
    %16 = vector.extract_strided_slice %13 {offsets = [0, 0], sizes = [8, 32], strides = [1, 1]} : vector<16x32xf32> to vector<8x32xf32>
    %17 = vector.extract_strided_slice %14 {offsets = [0, 0], sizes = [8, 32], strides = [1, 1]} : vector<16x32xf32> to vector<8x32xf32>
    %18 = vector.extract_strided_slice %15 {offsets = [0, 0], sizes = [8, 8], strides = [1, 1]} : vector<8x32xf32> to vector<8x8xf32>
    %19 = vector.extract_strided_slice %15 {offsets = [0, 8], sizes = [8, 8], strides = [1, 1]} : vector<8x32xf32> to vector<8x8xf32>
    %20 = vector.extract_strided_slice %15 {offsets = [0, 16], sizes = [8, 8], strides = [1, 1]} : vector<8x32xf32> to vector<8x8xf32>
    %21 = vector.extract_strided_slice %15 {offsets = [0, 24], sizes = [8, 8], strides = [1, 1]} : vector<8x32xf32> to vector<8x8xf32>
    %22 = vector.shape_cast %18 : vector<8x8xf32> to vector<1x8x8xf32>
    %23 = vector.shape_cast %19 : vector<8x8xf32> to vector<1x8x8xf32>
    %24 = vector.shape_cast %20 : vector<8x8xf32> to vector<1x8x8xf32>
    %25 = vector.shape_cast %21 : vector<8x8xf32> to vector<1x8x8xf32>
    %26 = tpu.concatenate %22, %23, %24, %25 in 0 : vector<1x8x8xf32>, vector<1x8x8xf32>, vector<1x8x8xf32>, vector<1x8x8xf32> -> vector<4x8x8xf32>
    %27 = arith.truncf %26 : vector<4x8x8xf32> to vector<4x8x8xbf16>
    %28 = vector.extract_strided_slice %16 {offsets = [0, 0], sizes = [8, 8], strides = [1, 1]} : vector<8x32xf32> to vector<8x8xf32>
    %29 = vector.extract_strided_slice %16 {offsets = [0, 8], sizes = [8, 8], strides = [1, 1]} : vector<8x32xf32> to vector<8x8xf32>
    %30 = vector.extract_strided_slice %16 {offsets = [0, 16], sizes = [8, 8], strides = [1, 1]} : vector<8x32xf32> to vector<8x8xf32>
    %31 = vector.extract_strided_slice %16 {offsets = [0, 24], sizes = [8, 8], strides = [1, 1]} : vector<8x32xf32> to vector<8x8xf32>
    %32 = vector.shape_cast %28 : vector<8x8xf32> to vector<1x8x8xf32>
    %33 = vector.shape_cast %29 : vector<8x8xf32> to vector<1x8x8xf32>
    %34 = vector.shape_cast %30 : vector<8x8xf32> to vector<1x8x8xf32>
    %35 = vector.shape_cast %31 : vector<8x8xf32> to vector<1x8x8xf32>
    %36 = tpu.concatenate %32, %33, %34, %35 in 0 : vector<1x8x8xf32>, vector<1x8x8xf32>, vector<1x8x8xf32>, vector<1x8x8xf32> -> vector<4x8x8xf32>
    %37 = arith.truncf %36 : vector<4x8x8xf32> to vector<4x8x8xbf16>
    %38 = vector.extract_strided_slice %17 {offsets = [0, 0], sizes = [8, 8], strides = [1, 1]} : vector<8x32xf32> to vector<8x8xf32>
    %39 = vector.extract_strided_slice %17 {offsets = [0, 8], sizes = [8, 8], strides = [1, 1]} : vector<8x32xf32> to vector<8x8xf32>
    %40 = vector.extract_strided_slice %17 {offsets = [0, 16], sizes = [8, 8], strides = [1, 1]} : vector<8x32xf32> to vector<8x8xf32>
    %41 = vector.extract_strided_slice %17 {offsets = [0, 24], sizes = [8, 8], strides = [1, 1]} : vector<8x32xf32> to vector<8x8xf32>
    %42 = vector.shape_cast %38 : vector<8x8xf32> to vector<1x8x8xf32>
    %43 = vector.shape_cast %39 : vector<8x8xf32> to vector<1x8x8xf32>
    %44 = vector.shape_cast %40 : vector<8x8xf32> to vector<1x8x8xf32>
    %45 = vector.shape_cast %41 : vector<8x8xf32> to vector<1x8x8xf32>
    %46 = tpu.concatenate %42, %43, %44, %45 in 0 : vector<1x8x8xf32>, vector<1x8x8xf32>, vector<1x8x8xf32>, vector<1x8x8xf32> -> vector<4x8x8xf32>
    %47 = arith.truncf %46 : vector<4x8x8xf32> to vector<4x8x8xbf16>
    "tpu.trace_start"() <{level = 10 : i32, message = "hqd,hkd->hqk"}> : () -> ()
    %cst_8 = arith.constant dense<0.000000e+00> : vector<4x8x8xf32>
    %48 = tpu.matmul %27, %37, %cst_8 {dimension_numbers = #tpu.dot_dimension_numbers<[2], [2], [1], [1], [0, 0, 0, 1, 1, 1], [0], [0]>} : vector<4x8x8xbf16>, vector<4x8x8xbf16>, vector<4x8x8xf32> -> vector<4x8x8xf32>
    "tpu.trace_stop"() : () -> ()
    %c0_9 = arith.constant 0 : index
    %c0_10 = arith.constant 0 : index
    %c0_11 = arith.constant 0 : index
    %49 = vector.load %arg3[%c0_9, %c0_10, %c0_11] : memref<2x1x8xf32, #tpu.memory_space<vmem>>, vector<1x1x8xf32>
    %50 = vector.shape_cast %49 : vector<1x1x8xf32> to vector<1x8xf32>
    %51 = vector.shape_cast %50 : vector<1x8xf32> to vector<1x1x8xf32>
    %52 = vector.broadcast %51 : vector<1x1x8xf32> to vector<4x8x8xf32>
    %53 = arith.addf %48, %52 : vector<4x8x8xf32>
    %cst_12 = arith.constant dense<0xFF800000> : vector<4x8xf32>
    %54 = vector.multi_reduction <maximumf>, %53, %cst_12 [2] : vector<4x8x8xf32> to vector<4x8xf32>
    %55 = vector.shape_cast %54 : vector<4x8xf32> to vector<4x8x1xf32>
    %56 = vector.broadcast %55 : vector<4x8x1xf32> to vector<4x8x8xf32>
    %57 = arith.subf %53, %56 : vector<4x8x8xf32>
    %58 = math.exp %57 : vector<4x8x8xf32>
    %cst_13 = arith.constant dense<0.000000e+00> : vector<4x8xf32>
    %59 = vector.multi_reduction <add>, %58, %cst_13 [2] : vector<4x8x8xf32> to vector<4x8xf32>
    %60 = vector.shape_cast %59 : vector<4x8xf32> to vector<4x8x1xf32>
    %61 = tpu.reciprocal %60 {approx = true} : vector<4x8x1xf32> -> vector<4x8x1xf32>
    %62 = vector.broadcast %61 : vector<4x8x1xf32> to vector<4x8x8xf32>
    %63 = arith.mulf %58, %62 : vector<4x8x8xf32>
    %64 = arith.truncf %63 : vector<4x8x8xf32> to vector<4x8x8xbf16>
    "tpu.trace_start"() <{level = 10 : i32, message = "hqk,hkd->hqd"}> : () -> ()
    %cst_14 = arith.constant dense<0.000000e+00> : vector<4x8x8xf32>
    %65 = tpu.matmul %64, %47, %cst_14 {dimension_numbers = #tpu.dot_dimension_numbers<[2], [1], [1], [2], [0, 0, 0, 1, 1, 2], [0], [0]>} : vector<4x8x8xbf16>, vector<4x8x8xbf16>, vector<4x8x8xf32> -> vector<4x8x8xf32>
    "tpu.trace_stop"() : () -> ()
    %66 = vector.extract_strided_slice %65 {offsets = [0, 0, 0], sizes = [1, 8, 8], strides = [1, 1, 1]} : vector<4x8x8xf32> to vector<1x8x8xf32>
    %67 = vector.shape_cast %66 : vector<1x8x8xf32> to vector<8x8xf32>
    %68 = vector.extract_strided_slice %65 {offsets = [1, 0, 0], sizes = [1, 8, 8], strides = [1, 1, 1]} : vector<4x8x8xf32> to vector<1x8x8xf32>
    %69 = vector.shape_cast %68 : vector<1x8x8xf32> to vector<8x8xf32>
    %70 = vector.extract_strided_slice %65 {offsets = [2, 0, 0], sizes = [1, 8, 8], strides = [1, 1, 1]} : vector<4x8x8xf32> to vector<1x8x8xf32>
    %71 = vector.shape_cast %70 : vector<1x8x8xf32> to vector<8x8xf32>
    %72 = vector.extract_strided_slice %65 {offsets = [3, 0, 0], sizes = [1, 8, 8], strides = [1, 1, 1]} : vector<4x8x8xf32> to vector<1x8x8xf32>
    %73 = vector.shape_cast %72 : vector<1x8x8xf32> to vector<8x8xf32>
    %74 = tpu.concatenate %67, %69, %71, %73 in 1 : vector<8x8xf32>, vector<8x8xf32>, vector<8x8xf32>, vector<8x8xf32> -> vector<8x32xf32>
    %75 = vector.extract_strided_slice %12 {offsets = [8, 0], sizes = [8, 32], strides = [1, 1]} : vector<16x32xf32> to vector<8x32xf32>
    %76 = vector.extract_strided_slice %13 {offsets = [8, 0], sizes = [8, 32], strides = [1, 1]} : vector<16x32xf32> to vector<8x32xf32>
    %77 = vector.extract_strided_slice %14 {offsets = [8, 0], sizes = [8, 32], strides = [1, 1]} : vector<16x32xf32> to vector<8x32xf32>
    %78 = vector.extract_strided_slice %75 {offsets = [0, 0], sizes = [8, 8], strides = [1, 1]} : vector<8x32xf32> to vector<8x8xf32>
    %79 = vector.extract_strided_slice %75 {offsets = [0, 8], sizes = [8, 8], strides = [1, 1]} : vector<8x32xf32> to vector<8x8xf32>
    %80 = vector.extract_strided_slice %75 {offsets = [0, 16], sizes = [8, 8], strides = [1, 1]} : vector<8x32xf32> to vector<8x8xf32>
    %81 = vector.extract_strided_slice %75 {offsets = [0, 24], sizes = [8, 8], strides = [1, 1]} : vector<8x32xf32> to vector<8x8xf32>
    %82 = vector.shape_cast %78 : vector<8x8xf32> to vector<1x8x8xf32>
    %83 = vector.shape_cast %79 : vector<8x8xf32> to vector<1x8x8xf32>
    %84 = vector.shape_cast %80 : vector<8x8xf32> to vector<1x8x8xf32>
    %85 = vector.shape_cast %81 : vector<8x8xf32> to vector<1x8x8xf32>
    %86 = tpu.concatenate %82, %83, %84, %85 in 0 : vector<1x8x8xf32>, vector<1x8x8xf32>, vector<1x8x8xf32>, vector<1x8x8xf32> -> vector<4x8x8xf32>
    %87 = arith.truncf %86 : vector<4x8x8xf32> to vector<4x8x8xbf16>
    %88 = vector.extract_strided_slice %76 {offsets = [0, 0], sizes = [8, 8], strides = [1, 1]} : vector<8x32xf32> to vector<8x8xf32>
    %89 = vector.extract_strided_slice %76 {offsets = [0, 8], sizes = [8, 8], strides = [1, 1]} : vector<8x32xf32> to vector<8x8xf32>
    %90 = vector.extract_strided_slice %76 {offsets = [0, 16], sizes = [8, 8], strides = [1, 1]} : vector<8x32xf32> to vector<8x8xf32>
    %91 = vector.extract_strided_slice %76 {offsets = [0, 24], sizes = [8, 8], strides = [1, 1]} : vector<8x32xf32> to vector<8x8xf32>
    %92 = vector.shape_cast %88 : vector<8x8xf32> to vector<1x8x8xf32>
    %93 = vector.shape_cast %89 : vector<8x8xf32> to vector<1x8x8xf32>
    %94 = vector.shape_cast %90 : vector<8x8xf32> to vector<1x8x8xf32>
    %95 = vector.shape_cast %91 : vector<8x8xf32> to vector<1x8x8xf32>
    %96 = tpu.concatenate %92, %93, %94, %95 in 0 : vector<1x8x8xf32>, vector<1x8x8xf32>, vector<1x8x8xf32>, vector<1x8x8xf32> -> vector<4x8x8xf32>
    %97 = arith.truncf %96 : vector<4x8x8xf32> to vector<4x8x8xbf16>
    %98 = vector.extract_strided_slice %77 {offsets = [0, 0], sizes = [8, 8], strides = [1, 1]} : vector<8x32xf32> to vector<8x8xf32>
    %99 = vector.extract_strided_slice %77 {offsets = [0, 8], sizes = [8, 8], strides = [1, 1]} : vector<8x32xf32> to vector<8x8xf32>
    %100 = vector.extract_strided_slice %77 {offsets = [0, 16], sizes = [8, 8], strides = [1, 1]} : vector<8x32xf32> to vector<8x8xf32>
    %101 = vector.extract_strided_slice %77 {offsets = [0, 24], sizes = [8, 8], strides = [1, 1]} : vector<8x32xf32> to vector<8x8xf32>
    %102 = vector.shape_cast %98 : vector<8x8xf32> to vector<1x8x8xf32>
    %103 = vector.shape_cast %99 : vector<8x8xf32> to vector<1x8x8xf32>
    %104 = vector.shape_cast %100 : vector<8x8xf32> to vector<1x8x8xf32>
    %105 = vector.shape_cast %101 : vector<8x8xf32> to vector<1x8x8xf32>
    %106 = tpu.concatenate %102, %103, %104, %105 in 0 : vector<1x8x8xf32>, vector<1x8x8xf32>, vector<1x8x8xf32>, vector<1x8x8xf32> -> vector<4x8x8xf32>
    %107 = arith.truncf %106 : vector<4x8x8xf32> to vector<4x8x8xbf16>
    "tpu.trace_start"() <{level = 10 : i32, message = "hqd,hkd->hqk"}> : () -> ()
    %cst_15 = arith.constant dense<0.000000e+00> : vector<4x8x8xf32>
    %108 = tpu.matmul %87, %97, %cst_15 {dimension_numbers = #tpu.dot_dimension_numbers<[2], [2], [1], [1], [0, 0, 0, 1, 1, 1], [0], [0]>} : vector<4x8x8xbf16>, vector<4x8x8xbf16>, vector<4x8x8xf32> -> vector<4x8x8xf32>
    "tpu.trace_stop"() : () -> ()
    %c1 = arith.constant 1 : index
    %c0_16 = arith.constant 0 : index
    %c0_17 = arith.constant 0 : index
    %109 = vector.load %arg3[%c1, %c0_16, %c0_17] : memref<2x1x8xf32, #tpu.memory_space<vmem>>, vector<1x1x8xf32>
    %110 = vector.shape_cast %109 : vector<1x1x8xf32> to vector<1x8xf32>
    %111 = vector.shape_cast %110 : vector<1x8xf32> to vector<1x1x8xf32>
    %112 = vector.broadcast %111 : vector<1x1x8xf32> to vector<4x8x8xf32>
    %113 = arith.addf %108, %112 : vector<4x8x8xf32>
    %cst_18 = arith.constant dense<0xFF800000> : vector<4x8xf32>
    %114 = vector.multi_reduction <maximumf>, %113, %cst_18 [2] : vector<4x8x8xf32> to vector<4x8xf32>
    %115 = vector.shape_cast %114 : vector<4x8xf32> to vector<4x8x1xf32>
    %116 = vector.broadcast %115 : vector<4x8x1xf32> to vector<4x8x8xf32>
    %117 = arith.subf %113, %116 : vector<4x8x8xf32>
    %118 = math.exp %117 : vector<4x8x8xf32>
    %cst_19 = arith.constant dense<0.000000e+00> : vector<4x8xf32>
    %119 = vector.multi_reduction <add>, %118, %cst_19 [2] : vector<4x8x8xf32> to vector<4x8xf32>
    %120 = vector.shape_cast %119 : vector<4x8xf32> to vector<4x8x1xf32>
    %121 = tpu.reciprocal %120 {approx = true} : vector<4x8x1xf32> -> vector<4x8x1xf32>
    %122 = vector.broadcast %121 : vector<4x8x1xf32> to vector<4x8x8xf32>
    %123 = arith.mulf %118, %122 : vector<4x8x8xf32>
    %124 = arith.truncf %123 : vector<4x8x8xf32> to vector<4x8x8xbf16>
    "tpu.trace_start"() <{level = 10 : i32, message = "hqk,hkd->hqd"}> : () -> ()
    %cst_20 = arith.constant dense<0.000000e+00> : vector<4x8x8xf32>
    %125 = tpu.matmul %124, %107, %cst_20 {dimension_numbers = #tpu.dot_dimension_numbers<[2], [1], [1], [2], [0, 0, 0, 1, 1, 2], [0], [0]>} : vector<4x8x8xbf16>, vector<4x8x8xbf16>, vector<4x8x8xf32> -> vector<4x8x8xf32>
    "tpu.trace_stop"() : () -> ()
    %126 = vector.extract_strided_slice %125 {offsets = [0, 0, 0], sizes = [1, 8, 8], strides = [1, 1, 1]} : vector<4x8x8xf32> to vector<1x8x8xf32>
    %127 = vector.shape_cast %126 : vector<1x8x8xf32> to vector<8x8xf32>
    %128 = vector.extract_strided_slice %125 {offsets = [1, 0, 0], sizes = [1, 8, 8], strides = [1, 1, 1]} : vector<4x8x8xf32> to vector<1x8x8xf32>
    %129 = vector.shape_cast %128 : vector<1x8x8xf32> to vector<8x8xf32>
    %130 = vector.extract_strided_slice %125 {offsets = [2, 0, 0], sizes = [1, 8, 8], strides = [1, 1, 1]} : vector<4x8x8xf32> to vector<1x8x8xf32>
    %131 = vector.shape_cast %130 : vector<1x8x8xf32> to vector<8x8xf32>
    %132 = vector.extract_strided_slice %125 {offsets = [3, 0, 0], sizes = [1, 8, 8], strides = [1, 1, 1]} : vector<4x8x8xf32> to vector<1x8x8xf32>
    %133 = vector.shape_cast %132 : vector<1x8x8xf32> to vector<8x8xf32>
    %134 = tpu.concatenate %127, %129, %131, %133 in 1 : vector<8x8xf32>, vector<8x8xf32>, vector<8x8xf32>, vector<8x8xf32> -> vector<8x32xf32>
    %135 = tpu.concatenate %74, %134 in 0 : vector<8x32xf32>, vector<8x32xf32> -> vector<16x32xf32>
    %136 = arith.truncf %135 : vector<16x32xf32> to vector<16x32xbf16>
    %c0_21 = arith.constant 0 : index
    %c0_22 = arith.constant 0 : index
    %c0_23 = arith.constant 0 : index
    %137 = vector.load %arg8[%c0_21, %c0_22, %c0_23] : memref<1x32x32xbf16, #tpu.memory_space<vmem>>, vector<1x32x32xbf16>
    %138 = vector.shape_cast %137 : vector<1x32x32xbf16> to vector<32x32xbf16>
    %cst_24 = arith.constant dense<0.000000e+00> : vector<16x32xf32>
    %139 = tpu.matmul %136, %138, %cst_24 {dimension_numbers = #tpu.dot_dimension_numbers<[1], [0], [0], [1], [0, 0, 1, 1], [], []>} : vector<16x32xbf16>, vector<32x32xbf16>, vector<16x32xf32> -> vector<16x32xf32>
    %c0_25 = arith.constant 0 : index
    %c0_26 = arith.constant 0 : index
    %c0_27 = arith.constant 0 : index
    %140 = vector.load %arg9[%c0_25, %c0_26, %c0_27] : memref<1x1x32xf32, #tpu.memory_space<vmem>>, vector<1x1x32xf32>
    %141 = vector.shape_cast %140 : vector<1x1x32xf32> to vector<1x32xf32>
    %142 = vector.broadcast %141 : vector<1x32xf32> to vector<16x32xf32>
    %143 = arith.addf %139, %142 : vector<16x32xf32>
    %144 = arith.addf %3, %143 : vector<16x32xf32>
    %c0_28 = arith.constant 0 : index
    %c0_29 = arith.constant 0 : index
    %c0_30 = arith.constant 0 : index
    %145 = vector.load %arg10[%c0_28, %c0_29, %c0_30] : memref<1x1x32xf32, #tpu.memory_space<vmem>>, vector<1x1x32xf32>
    %146 = vector.shape_cast %145 : vector<1x1x32xf32> to vector<1x32xf32>
    %c0_31 = arith.constant 0 : index
    %c0_32 = arith.constant 0 : index
    %c0_33 = arith.constant 0 : index
    %147 = vector.load %arg11[%c0_31, %c0_32, %c0_33] : memref<1x1x32xf32, #tpu.memory_space<vmem>>, vector<1x1x32xf32>
    %148 = vector.shape_cast %147 : vector<1x1x32xf32> to vector<1x32xf32>
    %cst_34 = arith.constant dense<0.000000e+00> : vector<16xf32>
    %149 = vector.multi_reduction <add>, %144, %cst_34 [1] : vector<16x32xf32> to vector<16xf32>
    %150 = vector.shape_cast %149 : vector<16xf32> to vector<16x1xf32>
    %cst_35 = arith.constant 3.200000e+01 : f32
    %151 = vector.broadcast %cst_35 : f32 to vector<16x1xf32>
    %152 = arith.divf %150, %151 : vector<16x1xf32>
    %153 = vector.broadcast %152 : vector<16x1xf32> to vector<16x32xf32>
    %154 = arith.subf %144, %153 : vector<16x32xf32>
    %155 = arith.mulf %154, %154 : vector<16x32xf32>
    %cst_36 = arith.constant dense<0.000000e+00> : vector<16xf32>
    %156 = vector.multi_reduction <add>, %155, %cst_36 [1] : vector<16x32xf32> to vector<16xf32>
    %157 = vector.shape_cast %156 : vector<16xf32> to vector<16x1xf32>
    %cst_37 = arith.constant 3.200000e+01 : f32
    %158 = vector.broadcast %cst_37 : f32 to vector<16x1xf32>
    %159 = arith.divf %157, %158 : vector<16x1xf32>
    %160 = vector.broadcast %152 : vector<16x1xf32> to vector<16x32xf32>
    %161 = arith.subf %144, %160 : vector<16x32xf32>
    %cst_38 = arith.constant 9.99999996E-13 : f32
    %162 = vector.broadcast %cst_38 : f32 to vector<16x1xf32>
    %163 = arith.addf %159, %162 : vector<16x1xf32>
    %164 = math.rsqrt %163 : vector<16x1xf32>
    %165 = vector.broadcast %164 : vector<16x1xf32> to vector<16x32xf32>
    %166 = arith.mulf %161, %165 : vector<16x32xf32>
    %167 = vector.broadcast %146 : vector<1x32xf32> to vector<16x32xf32>
    %168 = arith.mulf %166, %167 : vector<16x32xf32>
    %169 = vector.broadcast %148 : vector<1x32xf32> to vector<16x32xf32>
    %170 = arith.addf %168, %169 : vector<16x32xf32>
    %171 = arith.truncf %170 : vector<16x32xf32> to vector<16x32xbf16>
    %c0_39 = arith.constant 0 : index
    %c0_40 = arith.constant 0 : index
    %c0_41 = arith.constant 0 : index
    %172 = vector.load %arg12[%c0_39, %c0_40, %c0_41] : memref<1x32x64xbf16, #tpu.memory_space<vmem>>, vector<1x32x64xbf16>
    %173 = vector.shape_cast %172 : vector<1x32x64xbf16> to vector<32x64xbf16>
    %cst_42 = arith.constant dense<0.000000e+00> : vector<16x64xf32>
    %174 = tpu.matmul %171, %173, %cst_42 {dimension_numbers = #tpu.dot_dimension_numbers<[1], [0], [0], [1], [0, 0, 1, 1], [], []>} : vector<16x32xbf16>, vector<32x64xbf16>, vector<16x64xf32> -> vector<16x64xf32>
    %c0_43 = arith.constant 0 : index
    %c0_44 = arith.constant 0 : index
    %c0_45 = arith.constant 0 : index
    %175 = vector.load %arg13[%c0_43, %c0_44, %c0_45] : memref<1x1x64xf32, #tpu.memory_space<vmem>>, vector<1x1x64xf32>
    %176 = vector.shape_cast %175 : vector<1x1x64xf32> to vector<1x64xf32>
    %177 = vector.broadcast %176 : vector<1x64xf32> to vector<16x64xf32>
    %178 = arith.addf %174, %177 : vector<16x64xf32>
    %cst_46 = arith.constant 5.000000e-01 : f32
    %179 = vector.broadcast %cst_46 : f32 to vector<16x64xf32>
    %180 = arith.mulf %179, %178 : vector<16x64xf32>
    %cst_47 = arith.constant 4.471500e-02 : f32
    %181 = vector.broadcast %cst_47 : f32 to vector<16x64xf32>
    %182 = arith.mulf %181, %178 : vector<16x64xf32>
    %183 = arith.mulf %182, %178 : vector<16x64xf32>
    %184 = arith.mulf %183, %178 : vector<16x64xf32>
    %185 = arith.addf %178, %184 : vector<16x64xf32>
    %cst_48 = arith.constant 0.797884583 : f32
    %186 = vector.broadcast %cst_48 : f32 to vector<16x64xf32>
    %187 = arith.mulf %186, %185 : vector<16x64xf32>
    %188 = math.tanh %187 : vector<16x64xf32>
    %cst_49 = arith.constant 1.000000e+00 : f32
    %189 = vector.broadcast %cst_49 : f32 to vector<16x64xf32>
    %190 = arith.addf %189, %188 : vector<16x64xf32>
    %191 = arith.mulf %180, %190 : vector<16x64xf32>
    %192 = arith.truncf %191 : vector<16x64xf32> to vector<16x64xbf16>
    %c0_50 = arith.constant 0 : index
    %c0_51 = arith.constant 0 : index
    %c0_52 = arith.constant 0 : index
    %193 = vector.load %arg14[%c0_50, %c0_51, %c0_52] : memref<1x64x32xbf16, #tpu.memory_space<vmem>>, vector<1x64x32xbf16>
    %194 = vector.shape_cast %193 : vector<1x64x32xbf16> to vector<64x32xbf16>
    %cst_53 = arith.constant dense<0.000000e+00> : vector<16x32xf32>
    %195 = tpu.matmul %192, %194, %cst_53 {dimension_numbers = #tpu.dot_dimension_numbers<[1], [0], [0], [1], [0, 0, 1, 1], [], []>} : vector<16x64xbf16>, vector<64x32xbf16>, vector<16x32xf32> -> vector<16x32xf32>
    %c0_54 = arith.constant 0 : index
    %c0_55 = arith.constant 0 : index
    %c0_56 = arith.constant 0 : index
    %196 = vector.load %arg15[%c0_54, %c0_55, %c0_56] : memref<1x1x32xf32, #tpu.memory_space<vmem>>, vector<1x1x32xf32>
    %197 = vector.shape_cast %196 : vector<1x1x32xf32> to vector<1x32xf32>
    %198 = vector.broadcast %197 : vector<1x32xf32> to vector<16x32xf32>
    %199 = arith.addf %195, %198 : vector<16x32xf32>
    %200 = arith.addf %170, %199 : vector<16x32xf32>
    %c0_57 = arith.constant 0 : index
    %c0_58 = arith.constant 0 : index
    %c0_59 = arith.constant 0 : index
    %201 = vector.load %arg16[%c0_57, %c0_58, %c0_59] : memref<1x1x32xf32, #tpu.memory_space<vmem>>, vector<1x1x32xf32>
    %202 = vector.shape_cast %201 : vector<1x1x32xf32> to vector<1x32xf32>
    %c0_60 = arith.constant 0 : index
    %c0_61 = arith.constant 0 : index
    %c0_62 = arith.constant 0 : index
    %203 = vector.load %arg17[%c0_60, %c0_61, %c0_62] : memref<1x1x32xf32, #tpu.memory_space<vmem>>, vector<1x1x32xf32>
    %204 = vector.shape_cast %203 : vector<1x1x32xf32> to vector<1x32xf32>
    %cst_63 = arith.constant dense<0.000000e+00> : vector<16xf32>
    %205 = vector.multi_reduction <add>, %200, %cst_63 [1] : vector<16x32xf32> to vector<16xf32>
    %206 = vector.shape_cast %205 : vector<16xf32> to vector<16x1xf32>
    %cst_64 = arith.constant 3.200000e+01 : f32
    %207 = vector.broadcast %cst_64 : f32 to vector<16x1xf32>
    %208 = arith.divf %206, %207 : vector<16x1xf32>
    %209 = vector.broadcast %208 : vector<16x1xf32> to vector<16x32xf32>
    %210 = arith.subf %200, %209 : vector<16x32xf32>
    %211 = arith.mulf %210, %210 : vector<16x32xf32>
    %cst_65 = arith.constant dense<0.000000e+00> : vector<16xf32>
    %212 = vector.multi_reduction <add>, %211, %cst_65 [1] : vector<16x32xf32> to vector<16xf32>
    %213 = vector.shape_cast %212 : vector<16xf32> to vector<16x1xf32>
    %cst_66 = arith.constant 3.200000e+01 : f32
    %214 = vector.broadcast %cst_66 : f32 to vector<16x1xf32>
    %215 = arith.divf %213, %214 : vector<16x1xf32>
    %216 = vector.broadcast %208 : vector<16x1xf32> to vector<16x32xf32>
    %217 = arith.subf %200, %216 : vector<16x32xf32>
    %cst_67 = arith.constant 9.99999996E-13 : f32
    %218 = vector.broadcast %cst_67 : f32 to vector<16x1xf32>
    %219 = arith.addf %215, %218 : vector<16x1xf32>
    %220 = math.rsqrt %219 : vector<16x1xf32>
    %221 = vector.broadcast %220 : vector<16x1xf32> to vector<16x32xf32>
    %222 = arith.mulf %217, %221 : vector<16x32xf32>
    %223 = vector.broadcast %202 : vector<1x32xf32> to vector<16x32xf32>
    %224 = arith.mulf %222, %223 : vector<16x32xf32>
    %225 = vector.broadcast %204 : vector<1x32xf32> to vector<16x32xf32>
    %226 = arith.addf %224, %225 : vector<16x32xf32>
    %c0_68 = arith.constant 0 : index
    %c0_69 = arith.constant 0 : index
    %227 = vector.load %arg19[%c0_68, %c0_69] : memref<16x32xf32, #tpu.memory_space<vmem>>, vector<16x32xf32>
    tpu.vector_store %arg19[%c0_68, %c0_69], %226 {strides = array<i32>} : memref<16x32xf32, #tpu.memory_space<vmem>>, vector<16x32xf32>,
    %c1_i32 = arith.constant 1 : i32
    %228 = arith.cmpi eq, %arg1, %c1_i32 : i32
    %229 = arith.extui %228 : i1 to i32
    %c0_i32_70 = arith.constant 0 : i32
    %230 = arith.cmpi ne, %229, %c0_i32_70 : i32
    scf.if %230 {
      %c0_71 = arith.constant 0 : index
      %c0_72 = arith.constant 0 : index
      %231 = vector.load %arg19[%c0_71, %c0_72] : memref<16x32xf32, #tpu.memory_space<vmem>>, vector<16x32xf32>
      %232 = vector.shape_cast %231 : vector<16x32xf32> to vector<2x8x32xf32>
      %233 = arith.truncf %232 : vector<2x8x32xf32> to vector<2x8x32xbf16>
      %c0_73 = arith.constant 0 : index
      %c0_74 = arith.constant 0 : index
      %c0_75 = arith.constant 0 : index
      %234 = vector.load %arg18[%c0_73, %c0_74, %c0_75] : memref<2x8x32xbf16, #tpu.memory_space<vmem>>, vector<2x8x32xbf16>
      tpu.vector_store %arg18[%c0_73, %c0_74, %c0_75], %233 {strides = array<i32>} : memref<2x8x32xbf16, #tpu.memory_space<vmem>>, vector<2x8x32xbf16>,
    } else {
    }
    return
  }
  func.func @transform_0(%arg0: i32, %arg1: i32) -> (i32, i32, i32) {
    %c0_i32 = arith.constant 0 : i32
    %c0_i32_0 = arith.constant 0 : i32
    %c0_i32_1 = arith.constant 0 : i32
    return %arg0, %c0_i32, %c0_i32_0 : i32, i32, i32
  }
  func.func @transform_1(%arg0: i32, %arg1: i32) -> (i32, i32, i32) {
    %c0_i32 = arith.constant 0 : i32
    %c0_i32_0 = arith.constant 0 : i32
    %c0_i32_1 = arith.constant 0 : i32
    return %arg0, %c0_i32, %c0_i32_0 : i32, i32, i32
  }
  func.func @transform_2(%arg0: i32, %arg1: i32) -> (i32, i32) {
    %c0_i32 = arith.constant 0 : i32
    %c0_i32_0 = arith.constant 0 : i32
    %c0_i32_1 = arith.constant 0 : i32
    return %c0_i32, %c0_i32_0 : i32, i32
  }
  func.func @transform_3(%arg0: i32, %arg1: i32) -> (i32, i32) {
    %c0_i32 = arith.constant 0 : i32
    %c0_i32_0 = arith.constant 0 : i32
    %c0_i32_1 = arith.constant 0 : i32
    return %c0_i32, %c0_i32_0 : i32, i32
  }
  func.func @transform_4(%arg0: i32, %arg1: i32) -> (i32, i32, i32) {
    %c0_i32 = arith.constant 0 : i32
    %c0_i32_0 = arith.constant 0 : i32
    %c0_i32_1 = arith.constant 0 : i32
    return %arg1, %c0_i32, %c0_i32_0 : i32, i32, i32
  }
  func.func @transform_5(%arg0: i32, %arg1: i32) -> (i32, i32, i32) {
    %c0_i32 = arith.constant 0 : i32
    %c0_i32_0 = arith.constant 0 : i32
    %c0_i32_1 = arith.constant 0 : i32
    return %arg1, %c0_i32, %c0_i32_0 : i32, i32, i32
  }
  func.func @transform_6(%arg0: i32, %arg1: i32) -> (i32, i32, i32) {
    %c0_i32 = arith.constant 0 : i32
    %c0_i32_0 = arith.constant 0 : i32
    %c0_i32_1 = arith.constant 0 : i32
    return %arg1, %c0_i32, %c0_i32_0 : i32, i32, i32
  }
  func.func @transform_7(%arg0: i32, %arg1: i32) -> (i32, i32, i32) {
    %c0_i32 = arith.constant 0 : i32
    %c0_i32_0 = arith.constant 0 : i32
    %c0_i32_1 = arith.constant 0 : i32
    return %arg1, %c0_i32, %c0_i32_0 : i32, i32, i32
  }
  func.func @transform_8(%arg0: i32, %arg1: i32) -> (i32, i32, i32) {
    %c0_i32 = arith.constant 0 : i32
    %c0_i32_0 = arith.constant 0 : i32
    %c0_i32_1 = arith.constant 0 : i32
    return %arg1, %c0_i32, %c0_i32_0 : i32, i32, i32
  }
  func.func @transform_9(%arg0: i32, %arg1: i32) -> (i32, i32, i32) {
    %c0_i32 = arith.constant 0 : i32
    %c0_i32_0 = arith.constant 0 : i32
    %c0_i32_1 = arith.constant 0 : i32
    return %arg1, %c0_i32, %c0_i32_0 : i32, i32, i32
  }
  func.func @transform_10(%arg0: i32, %arg1: i32) -> (i32, i32, i32) {
    %c0_i32 = arith.constant 0 : i32
    %c0_i32_0 = arith.constant 0 : i32
    %c0_i32_1 = arith.constant 0 : i32
    return %arg1, %c0_i32, %c0_i32_0 : i32, i32, i32
  }
  func.func @transform_11(%arg0: i32, %arg1: i32) -> (i32, i32, i32) {
    %c0_i32 = arith.constant 0 : i32
    %c0_i32_0 = arith.constant 0 : i32
    %c0_i32_1 = arith.constant 0 : i32
    return %arg1, %c0_i32, %c0_i32_0 : i32, i32, i32
  }
  func.func @transform_12(%arg0: i32, %arg1: i32) -> (i32, i32, i32) {
    %c0_i32 = arith.constant 0 : i32
    %c0_i32_0 = arith.constant 0 : i32
    %c0_i32_1 = arith.constant 0 : i32
    return %arg1, %c0_i32, %c0_i32_0 : i32, i32, i32
  }
  func.func @transform_13(%arg0: i32, %arg1: i32) -> (i32, i32, i32) {
    %c0_i32 = arith.constant 0 : i32
    %c0_i32_0 = arith.constant 0 : i32
    %c0_i32_1 = arith.constant 0 : i32
    return %arg1, %c0_i32, %c0_i32_0 : i32, i32, i32
  }
  func.func @transform_14(%arg0: i32, %arg1: i32) -> (i32, i32, i32) {
    %c0_i32 = arith.constant 0 : i32
    %c0_i32_0 = arith.constant 0 : i32
    %c0_i32_1 = arith.constant 0 : i32
    return %arg1, %c0_i32, %c0_i32_0 : i32, i32, i32
  }
  func.func @transform_15(%arg0: i32, %arg1: i32) -> (i32, i32, i32) {
    %c0_i32 = arith.constant 0 : i32
    %c0_i32_0 = arith.constant 0 : i32
    %c0_i32_1 = arith.constant 0 : i32
    return %arg1, %c0_i32, %c0_i32_0 : i32, i32, i32
  }
  func.func @transform_16(%arg0: i32, %arg1: i32) -> (i32, i32, i32) {
    %c0_i32 = arith.constant 0 : i32
    %c0_i32_0 = arith.constant 0 : i32
    %c0_i32_1 = arith.constant 0 : i32
    return %arg0, %c0_i32, %c0_i32_0 : i32, i32, i32
  }
}

module attributes {stable_mosaic.version = 11 : i64} {
  func.func @kernel(%arg0: i32, %arg1: memref<1x8x32xbf16, #tpu.memory_space<vmem>>, %arg2: memref<1x1x8xi32, #tpu.memory_space<vmem>>, %arg3: memref<16x32xbf16, #tpu.memory_space<vmem>>, %arg4: memref<16x1xf32, #tpu.memory_space<vmem>>, %arg5: memref<1x1x8xi32, #tpu.memory_space<vmem>>, %arg6: memref<1x1x8xf32, #tpu.memory_space<vmem>>) attributes {dimension_semantics = [#tpu.dimension_semantics<parallel>], iteration_bounds = array<i64: 2>, scalar_prefetch = 0 : i64, scratch_operands = 0 : i64, tpu.core_type = #tpu.core_type<tc>, window_params = [{transform_indices = @transform_0, window_bounds = array<i64: 1, 8, 32>}, {transform_indices = @transform_1, window_bounds = array<i64: 1, 1, 8>}, {pipeline_mode = #tpu.pipeline_mode<synchronous>, transform_indices = @transform_2, window_bounds = array<i64: 16, 32>}, {pipeline_mode = #tpu.pipeline_mode<synchronous>, transform_indices = @transform_3, window_bounds = array<i64: 16, 1>}, {transform_indices = @transform_4, window_bounds = array<i64: 1, 1, 8>}, {transform_indices = @transform_5, window_bounds = array<i64: 1, 1, 8>}]} {
    %c0 = arith.constant 0 : index
    %c0_0 = arith.constant 0 : index
    %c0_1 = arith.constant 0 : index
    %0 = vector.load %arg1[%c0, %c0_0, %c0_1] : memref<1x8x32xbf16, #tpu.memory_space<vmem>>, vector<1x8x32xbf16>
    %1 = vector.shape_cast %0 : vector<1x8x32xbf16> to vector<8x32xbf16>
    %c0_2 = arith.constant 0 : index
    %c0_3 = arith.constant 0 : index
    %c0_4 = arith.constant 0 : index
    %2 = vector.load %arg2[%c0_2, %c0_3, %c0_4] : memref<1x1x8xi32, #tpu.memory_space<vmem>>, vector<1x1x8xi32>
    %3 = vector.shape_cast %2 : vector<1x1x8xi32> to vector<1x8xi32>
    %c0_5 = arith.constant 0 : index
    %c0_6 = arith.constant 0 : index
    %4 = vector.load %arg3[%c0_5, %c0_6] : memref<16x32xbf16, #tpu.memory_space<vmem>>, vector<16x32xbf16>
    %cst = arith.constant dense<0.000000e+00> : vector<16x8xf32>
    %5 = tpu.matmul %4, %1, %cst {dimension_numbers = #tpu.dot_dimension_numbers<[1], [1], [0], [0], [0, 0, 1, 0], [], []>} : vector<16x32xbf16>, vector<8x32xbf16>, vector<16x8xf32> -> vector<16x8xf32>
    %c0_7 = arith.constant 0 : index
    %c0_8 = arith.constant 0 : index
    %6 = vector.load %arg4[%c0_7, %c0_8] : memref<16x1xf32, #tpu.memory_space<vmem>>, vector<16x1xf32>
    %7 = vector.broadcast %6 : vector<16x1xf32> to vector<16x8xf32>
    %8 = arith.addf %5, %7 : vector<16x8xf32>
    %9 = tpu.iota {dimensions = array<i32: 0>} : vector<16x8xi32>
    %cst_9 = arith.constant dense<0xFF800000> : vector<8xf32>
    %10 = vector.multi_reduction <maximumf>, %8, %cst_9 [0] : vector<16x8xf32> to vector<8xf32>
    %11 = vector.shape_cast %10 : vector<8xf32> to vector<1x8xf32>
    %12 = vector.broadcast %11 : vector<1x8xf32> to vector<16x8xf32>
    %13 = arith.subf %8, %12 : vector<16x8xf32>
    %14 = math.exp %13 : vector<16x8xf32>
    %cst_10 = arith.constant dense<0.000000e+00> : vector<8xf32>
    %15 = vector.multi_reduction <add>, %14, %cst_10 [0] : vector<16x8xf32> to vector<8xf32>
    %16 = vector.shape_cast %15 : vector<8xf32> to vector<1x8xf32>
    %17 = math.log %16 : vector<1x8xf32>
    %18 = vector.broadcast %17 : vector<1x8xf32> to vector<16x8xf32>
    %19 = arith.subf %13, %18 : vector<16x8xf32>
    %20 = vector.broadcast %3 : vector<1x8xi32> to vector<16x8xi32>
    %21 = arith.cmpi eq, %9, %20 : vector<16x8xi32>
    %cst_11 = arith.constant 0.000000e+00 : f32
    %22 = vector.broadcast %cst_11 : f32 to vector<16x8xf32>
    %23 = arith.select %21, %19, %22 : vector<16x8xi1>, vector<16x8xf32>
    %cst_12 = arith.constant dense<0.000000e+00> : vector<8xf32>
    %24 = vector.multi_reduction <add>, %23, %cst_12 [0] : vector<16x8xf32> to vector<8xf32>
    %25 = vector.shape_cast %24 : vector<8xf32> to vector<1x8xf32>
    %cst_13 = arith.constant 0.000000e+00 : f32
    %26 = vector.broadcast %cst_13 : f32 to vector<1x8xf32>
    %27 = arith.subf %26, %25 : vector<1x8xf32>
    %c0_14 = arith.constant 0 : index
    %c0_15 = arith.constant 0 : index
    %c0_16 = arith.constant 0 : index
    %28 = vector.load %arg6[%c0_14, %c0_15, %c0_16] : memref<1x1x8xf32, #tpu.memory_space<vmem>>, vector<1x1x8xf32>
    %29 = vector.shape_cast %28 : vector<1x1x8xf32> to vector<1x8xf32>
    %30 = vector.shape_cast %27 : vector<1x8xf32> to vector<1x1x8xf32>
    tpu.vector_store %arg6[%c0_14, %c0_15, %c0_16], %30 {strides = array<i32>} : memref<1x1x8xf32, #tpu.memory_space<vmem>>, vector<1x1x8xf32>,
    %c6_i32 = arith.constant 6 : i32
    %31 = vector.broadcast %c6_i32 : i32 to vector<16x8xi32>
    %32 = arith.cmpi slt, %9, %31 : vector<16x8xi32>
    %33 = vector.broadcast %11 : vector<1x8xf32> to vector<16x8xf32>
    %34 = arith.cmpf oeq, %8, %33 : vector<16x8xf32>
    %35 = arith.andi %34, %32 : vector<16x8xi1>
    %c16_i32 = arith.constant 16 : i32
    %36 = vector.broadcast %c16_i32 : i32 to vector<16x8xi32>
    %37 = arith.select %35, %9, %36 : vector<16x8xi1>, vector<16x8xi32>
    %cst_17 = arith.constant dense<2147483647> : vector<8xi32>
    %38 = vector.multi_reduction <minsi>, %37, %cst_17 [0] : vector<16x8xi32> to vector<8xi32>
    %39 = vector.shape_cast %38 : vector<8xi32> to vector<1x8xi32>
    %c0_18 = arith.constant 0 : index
    %c0_19 = arith.constant 0 : index
    %c0_20 = arith.constant 0 : index
    %40 = vector.load %arg5[%c0_18, %c0_19, %c0_20] : memref<1x1x8xi32, #tpu.memory_space<vmem>>, vector<1x1x8xi32>
    %41 = vector.shape_cast %40 : vector<1x1x8xi32> to vector<1x8xi32>
    %42 = vector.shape_cast %39 : vector<1x8xi32> to vector<1x1x8xi32>
    tpu.vector_store %arg5[%c0_18, %c0_19, %c0_20], %42 {strides = array<i32>} : memref<1x1x8xi32, #tpu.memory_space<vmem>>, vector<1x1x8xi32>,
    return
  }
  func.func @transform_0(%arg0: i32) -> (i32, i32, i32) {
    %c0_i32 = arith.constant 0 : i32
    %c0_i32_0 = arith.constant 0 : i32
    %c0_i32_1 = arith.constant 0 : i32
    return %arg0, %c0_i32, %c0_i32_0 : i32, i32, i32
  }
  func.func @transform_1(%arg0: i32) -> (i32, i32, i32) {
    %c0_i32 = arith.constant 0 : i32
    %c0_i32_0 = arith.constant 0 : i32
    %c0_i32_1 = arith.constant 0 : i32
    return %arg0, %c0_i32, %c0_i32_0 : i32, i32, i32
  }
  func.func @transform_2(%arg0: i32) -> (i32, i32) {
    %c0_i32 = arith.constant 0 : i32
    %c0_i32_0 = arith.constant 0 : i32
    %c0_i32_1 = arith.constant 0 : i32
    return %c0_i32, %c0_i32_0 : i32, i32
  }
  func.func @transform_3(%arg0: i32) -> (i32, i32) {
    %c0_i32 = arith.constant 0 : i32
    %c0_i32_0 = arith.constant 0 : i32
    %c0_i32_1 = arith.constant 0 : i32
    return %c0_i32, %c0_i32_0 : i32, i32
  }
  func.func @transform_4(%arg0: i32) -> (i32, i32, i32) {
    %c0_i32 = arith.constant 0 : i32
    %c0_i32_0 = arith.constant 0 : i32
    %c0_i32_1 = arith.constant 0 : i32
    return %arg0, %c0_i32, %c0_i32_0 : i32, i32, i32
  }
  func.func @transform_5(%arg0: i32) -> (i32, i32, i32) {
    %c0_i32 = arith.constant 0 : i32
    %c0_i32_0 = arith.constant 0 : i32
    %c0_i32_1 = arith.constant 0 : i32
    return %arg0, %c0_i32, %c0_i32_0 : i32, i32, i32
  }
}

</mosaic_0001>

<llo_original>
// kernel: tpu_custom_call.1
$region0: #{tpu_custom_call.1}
  #allocation0 [shape = 'u32[]', space=smem, size = 0x4, offset = 0x4, fixed_abs, tag = 'smem constant byte address 0x4 - core index']
  #allocation1 [shape = 'u32[144,128]{1,0:T(1,128)}', space=vmem, size = 0x12000, scoped, tag = 'internal scratch']
  %s0 = inlined_call_operand.hbm [shape: f32[8,128], index: 0, kind: input, shape index: {}]
  %s1 = inlined_call_operand.hbm [shape: f32[16,128], index: 1, kind: output, shape index: {}]
  %s2 = sld [smem:[#allocation0]]
  $region41: #{tpu_custom_call.1} parent=0
    _
  %s4 = ssub.s32 1, %s2
  %s5 = scalar_select 0, %s4, %s2
  $region1: #{tpu_custom_call.1} parent=0
    #allocation2 [shape = 'u8[4096]{0}', space=vmem, size = 0x1000, scoped, tag = 'input window, operand 0, single buffered']
    #allocation3 [shape = 's32[2]{0}', space=sflag, size = 0x8, scoped, tag = 'scoped memory for tpu_custom_call.1']
    #allocation4 [shape = 's32[2]{0}', space=sflag, size = 0x8, scoped, tag = 'scoped memory for tpu_custom_call.1']
    #allocation5 [shape = 'u8[8192]{0}', space=vmem, size = 0x2000, scoped, tag = 'output window, operand 0']
    %6 = vsyncpa [#allocation3], 0
    %7 = vsyncpa [#allocation4], 0
    %s8 = scalar_lea.sflag [#allocation4], 1
    %9 = vsyncpa %s8, 0
    loop: start=0, step=1, limit=4
    $region2: #{tpu_custom_call.1} parent=1 // loop_pre_header
      _
    $region3: #{tpu_custom_call.1} parent=1 // loop_header
      %s11 = sphi 0, %s15
      %p12 = scmp.ge.s32.totalorder %s11, 4
      %s19 = sphi 0, %s19
      %s21 = sphi 0, %s19
      %s22 = sphi 0, %s21
      %s36 = sphi 0, %s22
      %s42 = sphi 0, %s44
      %s45 = sphi 0, %s42
      %s46 = sphi 0, %s45
      %s62 = sphi 0, %s46
    $region4: #{tpu_custom_call.1} parent=1 // loop_header_branch
      %14 = sbr.rel (%p12) target = $region8
    $region5: #{tpu_custom_call.1} parent=1 // loop_body
      %s16 = ssub.s32 %s11, 1
      %s17 = ssub.s32 %s11, 2
      %s18 = sadd.s32 %s11, 1
      %s20 = sadd.s32 %s19, 1
      %p23 = scmp.eq.s32.totalorder %s11, 1
      %p24 = scmp.ne.s32.totalorder %s19, %s21
      %p25 = scmp.eq.s32.totalorder %s11, 0
      %p26 = por %p24, %p25
      %p27 = scmp.ne.s32.totalorder %s19, %s21
      %p28 = scmp.eq.s32.totalorder %s16, 1
      %p29 = por %p27, %p28
      %p30 = scmp.ne.s32.totalorder %s21, %s22
      %p31 = scmp.eq.s32.totalorder %s16, 0
      %p32 = por %p30, %p31
      %p33 = scmp.ne.s32.totalorder %s21, %s22
      %p34 = scmp.eq.s32.totalorder %s17, 1
      %p35 = por %p33, %p34
      %p37 = scmp.ne.s32.totalorder %s22, %s36
      %p38 = scmp.eq.s32.totalorder %s17, 0
      %p39 = por %p37, %p38
      %s40 = ssub.s32 %s11, %s18
      %p41 = scmp.eq.s32.totalorder %s40, 0
      %s43 = sadd.s32 %s42, 1
      %s44 = scalar_select %p41, %s42, %s43
      %p47 = pneg %p41
      %p48 = scmp.eq.s32.totalorder %s11, 1
      %p49 = por %p47, %p48
      %p50 = scmp.ne.s32.totalorder %s42, %s45
      %p51 = scmp.eq.s32.totalorder %s11, 0
      %p52 = por %p50, %p51
      %p53 = scmp.ne.s32.totalorder %s42, %s45
      %p54 = scmp.eq.s32.totalorder %s16, 1
      %p55 = por %p53, %p54
      %p56 = scmp.ne.s32.totalorder %s45, %s46
      %p57 = scmp.eq.s32.totalorder %s16, 0
      %p58 = por %p56, %p57
      %p59 = scmp.ne.s32.totalorder %s45, %s46
      %p60 = scmp.eq.s32.totalorder %s17, 1
      %p61 = por %p59, %p60
      %p63 = scmp.ne.s32.totalorder %s46, %s62
      %p64 = scmp.eq.s32.totalorder %s17, 0
      %p65 = por %p63, %p64
      %p66 = scmp.le.s32.totalorder 1, %s11
      %p67 = scmp.lt.s32.totalorder %s11, 3
      %p68 = pnand %p66, %p67
      %p69 = pneg %p68
      // Predicated region
      $region9: #{tpu_custom_call.1} parent=5 // pred_check
        _
      $region10: #{tpu_custom_call.1} parent=5 // pred_check_branch
        %71 = sbr.rel (%p68) target = $region12
      $region11: #{tpu_custom_call.1} parent=5 // pred_region
        %s72 = ssub.s32 %s11, 1
        // Predicated region
        $region13: #{tpu_custom_call.1} parent=11 // pred_check
          %p73 = pneg %p32
        $region14: #{tpu_custom_call.1} parent=11 // pred_check_branch
          %75 = sbr.rel (%p73) target = $region16
        $region15: #{tpu_custom_call.1} parent=11 // pred_region
          %s77 = ssub.s32 128, 128
          %78 = vsyncadd [#allocation3], %s77
          %s80 = sshll.u32 [#allocation2], 4
          %s81 = int_to_ptr.vmem [resolvable:$true] %s80
          %83 = dma.hbm_to_vmem [thread:$0]  %s0, 128, %s81, [#allocation3]
        $region16: #{tpu_custom_call.1} parent=11 // pred_fallthru
          _
      $region12: #{tpu_custom_call.1} parent=5 // pred_fallthru
        _
      %p84 = scmp.lt.s32.totalorder %s11, 2
      // Predicated region
      $region17: #{tpu_custom_call.1} parent=5 // pred_check
        %p85 = pneg %p84
      $region18: #{tpu_custom_call.1} parent=5 // pred_check_branch
        %87 = sbr.rel (%p85) target = $region20
      $region19: #{tpu_custom_call.1} parent=5 // pred_region
        _
      $region20: #{tpu_custom_call.1} parent=5 // pred_fallthru
        _
      %p88 = scmp.le.s32.totalorder 1, %s11
      %p89 = scmp.lt.s32.totalorder %s11, 3
      %p90 = pnand %p88, %p89
      %p91 = pneg %p90
      // Predicated region
      $region21: #{tpu_custom_call.1} parent=5 // pred_check
        _
      $region22: #{tpu_custom_call.1} parent=5 // pred_check_branch
        %93 = sbr.rel (%p90) target = $region24
      $region23: #{tpu_custom_call.1} parent=5 // pred_region
        %s94 = ssub.s32 %s11, 1
        // Predicated region
        $region25: #{tpu_custom_call.1} parent=23 // pred_check
          %p95 = pneg %p32
        $region26: #{tpu_custom_call.1} parent=23 // pred_check_branch
          %97 = sbr.rel (%p95) target = $region28
        $region27: #{tpu_custom_call.1} parent=23 // pred_region
          %98 = dma.done [#allocation3], 128
        $region28: #{tpu_custom_call.1} parent=23 // pred_fallthru
          _
        %p99 = pneg %p32
        %p100 = pneg %p29
        %p101 = pneg %p58
        %p102 = pneg %p55
        %s103 = sand.u32 %s45, 1
        %s104 = scalar_lea.sflag [#allocation4], %s103
        %s105 = sand.u32 %s45, 1
        %s106 = smul.addr %s105, 8
        %s107 = scalar_lea.vmem [#allocation5], %s106
        %v108 = vld [vmem:[#allocation2] sm:$0xff]
        %v109 = vmul.f32 %v108, 2.0
        %110 = vst [vmem:[%s107] sm:$0xff] %v109
        %s111 = sand.u32 %s45, 1
        %s112 = scalar_lea.sflag [#allocation4], %s111
        %s113 = sand.u32 %s45, 1
        %s114 = smul.addr %s113, 8
        %s115 = scalar_lea.vmem [#allocation5], %s114
        // Predicated region
        $region29: #{tpu_custom_call.1} parent=23 // pred_check
          %p116 = pneg %p55
        $region30: #{tpu_custom_call.1} parent=23 // pred_check_branch
          %118 = sbr.rel (%p116) target = $region32
        $region31: #{tpu_custom_call.1} parent=23 // pred_region
          %s120 = ssub.s32 128, 128
          %121 = vsyncadd %s112, %s120
          %s122 = smul.addr %s16, 128
          %s123 = scalar_lea.hbm %s1, %s122
          %s125 = sshll.u32 %s115, 4
          %s126 = int_to_ptr.vmem [resolvable:$true] %s125
          %128 = dma.vmem_to_hbm [thread:$0]  %s126, 128, %s123, %s112
        $region32: #{tpu_custom_call.1} parent=23 // pred_fallthru
          _
      $region24: #{tpu_custom_call.1} parent=5 // pred_fallthru
        _
      %p129 = scmp.le.s32.totalorder 2, %s11
      // Predicated region
      $region33: #{tpu_custom_call.1} parent=5 // pred_check
        %p130 = pneg %p129
      $region34: #{tpu_custom_call.1} parent=5 // pred_check_branch
        %132 = sbr.rel (%p130) target = $region36
      $region35: #{tpu_custom_call.1} parent=5 // pred_region
        %s133 = ssub.s32 %s11, 2
        // Predicated region
        $region37: #{tpu_custom_call.1} parent=35 // pred_check
          %p134 = pneg %p61
        $region38: #{tpu_custom_call.1} parent=35 // pred_check_branch
          %136 = sbr.rel (%p134) target = $region40
        $region39: #{tpu_custom_call.1} parent=35 // pred_region
          %s137 = sand.u32 %s46, 1
          %s138 = scalar_lea.sflag [#allocation4], %s137
          %s139 = sand.u32 %s46, 1
          %s140 = smul.addr %s139, 8
          %s141 = scalar_lea.vmem [#allocation5], %s140
          %142 = dma.done %s138, 128
        $region40: #{tpu_custom_call.1} parent=35 // pred_fallthru
          _
      $region36: #{tpu_custom_call.1} parent=5 // pred_fallthru
        _
    $region6: #{tpu_custom_call.1} parent=1 // loop_footer
      %s15 = sadd.s32 1, %s11
    $region7: #{tpu_custom_call.1} parent=1 // loop_footer_branch
      %10 = sbr.rel target = $region3
    $region8: #{tpu_custom_call.1} parent=1 // loop_exit
      _
    %143 = vsyncpa [#allocation3], 1
    %s144 = scalar_lea.sflag [#allocation3], 1
    %145 = vsyncpa %s144, 1
    %146 = vsyncpa [#allocation4], 1
    %s147 = scalar_lea.sflag [#allocation4], 1
    %148 = vsyncpa %s147, 1

// kernel: lasertagger_forward.3
$region0: #{lasertagger_forward.3}
  #allocation0 [shape = 'u32[]', space=smem, size = 0x4, offset = 0x4, fixed_abs, tag = 'smem constant byte address 0x4 - core index']
  #allocation1 [shape = 'u32[144,128]{1,0:T(1,128)}', space=vmem, size = 0x12000, scoped, tag = 'internal scratch']
  %s0 = inlined_call_operand.vmem [shape: bf16[2,8,32], index: 0, kind: input, shape index: {}]
  %s1 = inlined_call_operand.vmem [shape: s32[2,1,8], index: 1, kind: input, shape index: {}]
  %s2 = inlined_call_operand.vmem [shape: bf16[16,32], index: 2, kind: input, shape index: {}]
  %s3 = inlined_call_operand.vmem [shape: f32[16,1], index: 3, kind: input, shape index: {}]
  %s4 = inlined_call_operand.hbm [shape: s32[2,1,8], index: 4, kind: output, shape index: {0}]
  %s5 = inlined_call_operand.vmem [shape: f32[2,1,8], index: 5, kind: output, shape index: {1}]
  %6 = xla_tuple %s4, %s5
  %s7 = sld [smem:[#allocation0]]
  $region57: #{lasertagger_forward.3} parent=0
    _
  %s9 = ssub.s32 1, %s7
  %s10 = scalar_select 0, %s9, %s7
  $region1: #{lasertagger_forward.3} parent=0
    #allocation2 [shape = 'u8[1024]{0}', space=vmem, size = 0x400, scoped, tag = 'output window, operand 0']
    #allocation3 [shape = 's32[2]{0}', space=sflag, size = 0x8, scoped, tag = 'scoped memory for lasertagger_forward.3']
    %11 = vsyncpa [#allocation3], 0
    %s12 = scalar_lea.sflag [#allocation3], 1
    %13 = vsyncpa %s12, 0
    loop: start=0, step=1, limit=4
    $region2: #{lasertagger_forward.3} parent=1 // loop_pre_header
      _
    $region3: #{lasertagger_forward.3} parent=1 // loop_header
      %s15 = sphi 0, %s19
      %p16 = scmp.ge.s32.totalorder %s15, 4
      %s25 = sphi 0, %s27
      %s28 = sphi 0, %s25
      %s29 = sphi 0, %s28
      %s45 = sphi 0, %s29
      %s51 = sphi 0, %s53
      %s54 = sphi 0, %s51
      %s55 = sphi 0, %s54
      %s71 = sphi 0, %s55
      %s75 = sphi 0, %s75
      %s77 = sphi 0, %s75
      %s78 = sphi 0, %s77
      %s92 = sphi 0, %s78
      %s96 = sphi 0, %s96
      %s98 = sphi 0, %s96
      %s99 = sphi 0, %s98
      %s113 = sphi 0, %s99
      %s119 = sphi 0, %s121
      %s122 = sphi 0, %s119
      %s123 = sphi 0, %s122
      %s139 = sphi 0, %s123
      %s145 = sphi 0, %s147
      %s148 = sphi 0, %s145
      %s149 = sphi 0, %s148
      %s165 = sphi 0, %s149
    $region4: #{lasertagger_forward.3} parent=1 // loop_header_branch
      %18 = sbr.rel (%p16) target = $region8
    $region5: #{lasertagger_forward.3} parent=1 // loop_body
      %s20 = ssub.s32 %s15, 1
      %s21 = ssub.s32 %s15, 2
      %s22 = sadd.s32 %s15, 1
      %s23 = ssub.s32 %s15, %s22
      %p24 = scmp.eq.s32.totalorder %s23, 0
      %s26 = sadd.s32 %s25, 1
      %s27 = scalar_select %p24, %s25, %s26
      %p30 = pneg %p24
      %p31 = scmp.eq.s32.totalorder %s15, 1
      %p32 = por %p30, %p31
      %p33 = scmp.ne.s32.totalorder %s25, %s28
      %p34 = scmp.eq.s32.totalorder %s15, 0
      %p35 = por %p33, %p34
      %p36 = scmp.ne.s32.totalorder %s25, %s28
      %p37 = scmp.eq.s32.totalorder %s20, 1
      %p38 = por %p36, %p37
      %p39 = scmp.ne.s32.totalorder %s28, %s29
      %p40 = scmp.eq.s32.totalorder %s20, 0
      %p41 = por %p39, %p40
      %p42 = scmp.ne.s32.totalorder %s28, %s29
      %p43 = scmp.eq.s32.totalorder %s21, 1
      %p44 = por %p42, %p43
      %p46 = scmp.ne.s32.totalorder %s29, %s45
      %p47 = scmp.eq.s32.totalorder %s21, 0
      %p48 = por %p46, %p47
      %s49 = ssub.s32 %s15, %s22
      %p50 = scmp.eq.s32.totalorder %s49, 0
      %s52 = sadd.s32 %s51, 1
      %s53 = scalar_select %p50, %s51, %s52
      %p56 = pneg %p50
      %p57 = scmp.eq.s32.totalorder %s15, 1
      %p58 = por %p56, %p57
      %p59 = scmp.ne.s32.totalorder %s51, %s54
      %p60 = scmp.eq.s32.totalorder %s15, 0
      %p61 = por %p59, %p60
      %p62 = scmp.ne.s32.totalorder %s51, %s54
      %p63 = scmp.eq.s32.totalorder %s20, 1
      %p64 = por %p62, %p63
      %p65 = scmp.ne.s32.totalorder %s54, %s55
      %p66 = scmp.eq.s32.totalorder %s20, 0
      %p67 = por %p65, %p66
      %p68 = scmp.ne.s32.totalorder %s54, %s55
      %p69 = scmp.eq.s32.totalorder %s21, 1
      %p70 = por %p68, %p69
      %p72 = scmp.ne.s32.totalorder %s55, %s71
      %p73 = scmp.eq.s32.totalorder %s21, 0
      %p74 = por %p72, %p73
      %s76 = sadd.s32 %s75, 1
      %p79 = scmp.eq.s32.totalorder %s15, 1
      %p80 = scmp.ne.s32.totalorder %s75, %s77
      %p81 = scmp.eq.s32.totalorder %s15, 0
      %p82 = por %p80, %p81
      %p83 = scmp.ne.s32.totalorder %s75, %s77
      %p84 = scmp.eq.s32.totalorder %s20, 1
      %p85 = por %p83, %p84
      %p86 = scmp.ne.s32.totalorder %s77, %s78
      %p87 = scmp.eq.s32.totalorder %s20, 0
      %p88 = por %p86, %p87
      %p89 = scmp.ne.s32.totalorder %s77, %s78
      %p90 = scmp.eq.s32.totalorder %s21, 1
      %p91 = por %p89, %p90
      %p93 = scmp.ne.s32.totalorder %s78, %s92
      %p94 = scmp.eq.s32.totalorder %s21, 0
      %p95 = por %p93, %p94
      %s97 = sadd.s32 %s96, 1
      %p100 = scmp.eq.s32.totalorder %s15, 1
      %p101 = scmp.ne.s32.totalorder %s96, %s98
      %p102 = scmp.eq.s32.totalorder %s15, 0
      %p103 = por %p101, %p102
      %p104 = scmp.ne.s32.totalorder %s96, %s98
      %p105 = scmp.eq.s32.totalorder %s20, 1
      %p106 = por %p104, %p105
      %p107 = scmp.ne.s32.totalorder %s98, %s99
      %p108 = scmp.eq.s32.totalorder %s20, 0
      %p109 = por %p107, %p108
      %p110 = scmp.ne.s32.totalorder %s98, %s99
      %p111 = scmp.eq.s32.totalorder %s21, 1
      %p112 = por %p110, %p111
      %p114 = scmp.ne.s32.totalorder %s99, %s113
      %p115 = scmp.eq.s32.totalorder %s21, 0
      %p116 = por %p114, %p115
      %s117 = ssub.s32 %s15, %s22
      %p118 = scmp.eq.s32.totalorder %s117, 0
      %s120 = sadd.s32 %s119, 1
      %s121 = scalar_select %p118, %s119, %s120
      %p124 = pneg %p118
      %p125 = scmp.eq.s32.totalorder %s15, 1
      %p126 = por %p124, %p125
      %p127 = scmp.ne.s32.totalorder %s119, %s122
      %p128 = scmp.eq.s32.totalorder %s15, 0
      %p129 = por %p127, %p128
      %p130 = scmp.ne.s32.totalorder %s119, %s122
      %p131 = scmp.eq.s32.totalorder %s20, 1
      %p132 = por %p130, %p131
      %p133 = scmp.ne.s32.totalorder %s122, %s123
      %p134 = scmp.eq.s32.totalorder %s20, 0
      %p135 = por %p133, %p134
      %p136 = scmp.ne.s32.totalorder %s122, %s123
      %p137 = scmp.eq.s32.totalorder %s21, 1
      %p138 = por %p136, %p137
      %p140 = scmp.ne.s32.totalorder %s123, %s139
      %p141 = scmp.eq.s32.totalorder %s21, 0
      %p142 = por %p140, %p141
      %s143 = ssub.s32 %s15, %s22
      %p144 = scmp.eq.s32.totalorder %s143, 0
      %s146 = sadd.s32 %s145, 1
      %s147 = scalar_select %p144, %s145, %s146
      %p150 = pneg %p144
      %p151 = scmp.eq.s32.totalorder %s15, 1
      %p152 = por %p150, %p151
      %p153 = scmp.ne.s32.totalorder %s145, %s148
      %p154 = scmp.eq.s32.totalorder %s15, 0
      %p155 = por %p153, %p154
      %p156 = scmp.ne.s32.totalorder %s145, %s148
      %p157 = scmp.eq.s32.totalorder %s20, 1
      %p158 = por %p156, %p157
      %p159 = scmp.ne.s32.totalorder %s148, %s149
      %p160 = scmp.eq.s32.totalorder %s20, 0
      %p161 = por %p159, %p160
      %p162 = scmp.ne.s32.totalorder %s148, %s149
      %p163 = scmp.eq.s32.totalorder %s21, 1
      %p164 = por %p162, %p163
      %p166 = scmp.ne.s32.totalorder %s149, %s165
      %p167 = scmp.eq.s32.totalorder %s21, 0
      %p168 = por %p166, %p167
      %p169 = scmp.le.s32.totalorder 1, %s15
      %p170 = scmp.lt.s32.totalorder %s15, 3
      %p171 = pnand %p169, %p170
      %p172 = pneg %p171
      // Predicated region
      $region9: #{lasertagger_forward.3} parent=5 // pred_check
        _
      $region10: #{lasertagger_forward.3} parent=5 // pred_check_branch
        %174 = sbr.rel (%p171) target = $region12
      $region11: #{lasertagger_forward.3} parent=5 // pred_region
        %s175 = ssub.s32 %s15, 1
        // Predicated region
        $region13: #{lasertagger_forward.3} parent=11 // pred_check
          %p176 = pneg %p88
        $region14: #{lasertagger_forward.3} parent=11 // pred_check_branch
          %178 = sbr.rel (%p176) target = $region16
        $region15: #{lasertagger_forward.3} parent=11 // pred_region
          _
        $region16: #{lasertagger_forward.3} parent=11 // pred_fallthru
          _
        // Predicated region
        $region17: #{lasertagger_forward.3} parent=11 // pred_check
          %p179 = pneg %p109
        $region18: #{lasertagger_forward.3} parent=11 // pred_check_branch
          %181 = sbr.rel (%p179) target = $region20
        $region19: #{lasertagger_forward.3} parent=11 // pred_region
          _
        $region20: #{lasertagger_forward.3} parent=11 // pred_fallthru
          _
      $region12: #{lasertagger_forward.3} parent=5 // pred_fallthru
        _
      %p182 = scmp.lt.s32.totalorder %s15, 2
      // Predicated region
      $region21: #{lasertagger_forward.3} parent=5 // pred_check
        %p183 = pneg %p182
      $region22: #{lasertagger_forward.3} parent=5 // pred_check_branch
        %185 = sbr.rel (%p183) target = $region24
      $region23: #{lasertagger_forward.3} parent=5 // pred_region
        // Predicated region
        $region25: #{lasertagger_forward.3} parent=23 // pred_check
          %p186 = pneg %p35
        $region26: #{lasertagger_forward.3} parent=23 // pred_check_branch
          %188 = sbr.rel (%p186) target = $region28
        $region27: #{lasertagger_forward.3} parent=23 // pred_region
          %p189 = scmp.lt.s32.totalorder %s15, 1
          %s190 = scalar_select %p189, %s15, 1
          %s191 = smul.addr %s190, 4
          %s192 = scalar_lea.vmem %s0, %s191
        $region28: #{lasertagger_forward.3} parent=23 // pred_fallthru
          _
        // Predicated region
        $region29: #{lasertagger_forward.3} parent=23 // pred_check
          %p193 = pneg %p61
        $region30: #{lasertagger_forward.3} parent=23 // pred_check_branch
          %195 = sbr.rel (%p193) target = $region32
        $region31: #{lasertagger_forward.3} parent=23 // pred_region
          %p196 = scmp.lt.s32.totalorder %s15, 1
          %s197 = scalar_select %p196, %s15, 1
          %s198 = scalar_lea.vmem %s1, %s197
        $region32: #{lasertagger_forward.3} parent=23 // pred_fallthru
          _
      $region24: #{lasertagger_forward.3} parent=5 // pred_fallthru
        _
      %p199 = scmp.le.s32.totalorder 1, %s15
      %p200 = scmp.lt.s32.totalorder %s15, 3
      %p201 = pnand %p199, %p200
      %p202 = pneg %p201
      // Predicated region
      $region33: #{lasertagger_forward.3} parent=5 // pred_check
        _
      $region34: #{lasertagger_forward.3} parent=5 // pred_check_branch
        %204 = sbr.rel (%p201) target = $region36
      $region35: #{lasertagger_forward.3} parent=5 // pred_region
        %s205 = ssub.s32 %s15, 1
        %p206 = scmp.lt.s32.totalorder %s20, 1
        %s207 = scalar_select %p206, %s20, 1
        %s208 = smul.addr %s207, 4
        %s209 = scalar_lea.vmem %s0, %s208
        %p210 = pneg %p41
        %p211 = pneg %p38
        %p212 = scmp.lt.s32.totalorder %s20, 1
        %s213 = scalar_select %p212, %s20, 1
        %s214 = scalar_lea.vmem %s1, %s213
        %p215 = pneg %p67
        %p216 = pneg %p64
        %p217 = pneg %p88
        %p218 = pneg %p85
        %p219 = pneg %p109
        %p220 = pneg %p106
        %p221 = pneg %p135
        %p222 = pneg %p132
        %s223 = sand.u32 %s122, 1
        %s224 = scalar_lea.sflag [#allocation3], %s223
        %s225 = sand.u32 %s122, 1
        %s226 = scalar_lea.vmem [#allocation2], %s225
        %p227 = pneg %p161
        %p228 = pneg %p158
        %p229 = scmp.lt.s32.totalorder %s20, 1
        %s230 = scalar_select %p229, %s20, 1
        %s231 = scalar_lea.vmem %s5, %s230
        %p232 = scmp.lt.s32.totalorder %s20, 1
        %s233 = scalar_select %p232, %s20, 1
        %s234 = smul.addr %s233, 4
        %s235 = scalar_lea.vmem %s0, %s234
        %p236 = scmp.lt.s32.totalorder %s20, 1
        %s237 = scalar_select %p236, %s20, 1
        %s238 = scalar_lea.vmem %s1, %s237
        %p239 = scmp.lt.s32.totalorder %s20, 1
        %s240 = scalar_select %p239, %s20, 1
        %s241 = scalar_lea.vmem %s5, %s240
        %v243 = vld [vmem:[%s235] sm:$0xf]
        %v244 = vld [vmem:[%s238] sm:$0x1]
        %v245 = vld [vmem:[%s2] sm:$0xf]
        %v246 = vld [vmem:[%s2 + $0x4] sm:$0xf]
        %v247 = vld [vmem:[%s3] sm:$0xff]
        %v248 = vld [vmem:[%s3 + $0x8] sm:$0xff]
        %250 = vset.pattern.permute.xlu0 0
        %251 = vperm.xlu0 %250, %v247
        %v252 = vpop.permute.xlu0 %251
        %255 = vset.pattern.permute.xlu0 0
        %256 = vperm.xlu0 %255, %v248
        %v257 = vpop.permute.xlu0 %256
        %v261 = vunpack.c.l.b16 %v245
        %v262 = vunpack.c.l.b16 %v246
        %v263 = vpack.c.b16 %v262, %v261
        %vm264 = vcmask 261120
        %v266 = vsel %vm264, %v263, 0
        %v269 = vsel %vm264, %v243, 0
        %271 = vmatprep.subr.bf16.mxu0 0
        %272 = vmatpush1.bf16.xpose.msra.mxu0 %v269
        %273 = vmatprep.subr.bf16.mxu0 0
        %274 = vmatpush1.bf16.xpose.msra.mxu0 0
        %275 = vmatprep.subr.bf16.mxu0 0
        %276 = vmatpush1.bf16.xpose.msra.mxu0 0
        %277 = vmatprep.subr.bf16.mxu0 0
        %278 = vmatpush1.bf16.xpose.msra.mxu0 0
        %279 = vmatprep.subr.bf16.mxu0 0
        %280 = vmatpush1.bf16.xpose.msra.mxu0 0
        %281 = vmatprep.subr.bf16.mxu0 0
        %282 = vmatpush1.bf16.xpose.msra.mxu0 0
        %283 = vmatprep.subr.bf16.mxu0 0
        %284 = vmatpush1.bf16.xpose.msra.mxu0 0
        %285 = vmatprep.subr.bf16.mxu0 0
        %286 = vmatpush1.bf16.xpose.msra.mxu0 0
        %287 = vmatprep.subr.bf16.mxu0 0
        %288 = vmatpush1.bf16.xpose.msra.mxu0 0
        %289 = vmatprep.subr.bf16.mxu0 0
        %290 = vmatpush1.bf16.xpose.msra.mxu0 0
        %291 = vmatprep.subr.bf16.mxu0 0
        %292 = vmatpush1.bf16.xpose.msra.mxu0 0
        %293 = vmatprep.subr.bf16.mxu0 0
        %294 = vmatpush1.bf16.xpose.msra.mxu0 0
        %295 = vmatprep.subr.bf16.mxu0 0
        %296 = vmatpush1.bf16.xpose.msra.mxu0 0
        %297 = vmatprep.subr.bf16.mxu0 0
        %298 = vmatpush1.bf16.xpose.msra.mxu0 0
        %299 = vmatprep.subr.bf16.mxu0 0
        %300 = vmatpush1.bf16.xpose.msra.mxu0 0
        %301 = vmatprep.subr.bf16.mxu0 0
        %302 = vmatpush1.bf16.xpose.msra.mxu0 0
        %303 = vmatprep.mubr.bf16.mxu0 0
        %304 = vmatmul.mubr.bf16.gmra.mrb[0].mxu0 %v266
        %v305 = vpop.f32.mrb[0].mxu0
        %v306 = vadd.f32 %v252, %v305
        %v307 = vpop.f32.mrb[0].mxu0
        %v308 = vpop.f32.mrb[0].mxu0
        %v309 = vadd.f32 %v257, %v308
        %v310 = vpop.f32.mrb[0].mxu0
        %311 = vdwg.mxu0
        %v312 = vlaneseq
        %v313 = vshrl.u32 %v312, 7
        %v314 = vadd.s32 %v313, 8
        %vm315 = vcmask 64512
        %v316 = vsel %vm315, %v306, -inf
        %v317 = vsel %vm315, %v309, -inf
        %v318 = vmax.f32 %v316, %v317
        %v319 = vrot.slane %v318, 4
        %v320 = vmax.f32 %v318, %v319
        %v321 = vrot.slane %v320, 2
        %v322 = vmax.f32 %v320, %v321
        %v323 = vrot.slane %v322, 1
        %v324 = vmax.f32 %v322, %v323
        %v325 = vsub.f32 %v306, %v324
        %v326 = vsub.f32 %v309, %v324
        %v327 = vmul.f32 %v325, 1.442695
        %v328 = vpow.pop %v327
        %v329 = vmul.f32 %v326, 1.442695
        %v330 = vpow.pop %v329
        %v331 = vsel %vm315, %v328, 0.0
        %v332 = vsel %vm315, %v330, 0.0
        %v333 = vadd.f32 %v331, %v332
        %v334 = vrot.slane %v333, 4
        %v335 = vadd.f32 %v333, %v334
        %v336 = vrot.slane %v335, 2
        %v337 = vadd.f32 %v335, %v336
        %v338 = vrot.slane %v337, 1
        %v339 = vadd.f32 %v337, %v338
        %v340 = vlog2.pop %v339
        %v341 = vmul.f32 %v340, 0.6931472
        %v342 = vsub.f32 %v325, %v341
        %v343 = vsub.f32 %v326, %v341
        %v344 = vlaneseq
        %v345 = vshrl.u32 %v344, 7
        %v346 = vsub.s32 0, %v345
        %v347 = vrot.slane %v244, %v346
        %vm348 = vcmp.eq.s32.totalorder %v313, %v347
        %vm349 = vcmp.eq.s32.totalorder %v314, %v347
        %v350 = vsel %vm348, %v342, 0.0
        %v351 = vsel %vm349, %v343, 0.0
        %v352 = vsel %vm315, %v350, 0.0
        %v353 = vsel %vm315, %v351, 0.0
        %v354 = vadd.f32 %v352, %v353
        %v355 = vrot.slane %v354, 4
        %v356 = vadd.f32 %v354, %v355
        %v357 = vrot.slane %v356, 2
        %v358 = vadd.f32 %v356, %v357
        %v359 = vrot.slane %v358, 1
        %v360 = vadd.f32 %v358, %v359
        %v361 = vsub.f32 0.0, %v360
        %vm362 = vcmask 57344
        %363 = vst.msk [vmem:[%s241] sm:$0x1] %vm362, %v361
        %vm364 = vcmp.lt.s32.totalorder %v313, 6
        %vm365 = vcmp.lt.s32.totalorder %v314, 6
        %vm366 = vcmp.eq.f32.partialorder %v306, %v324
        %vm367 = vcmp.eq.f32.partialorder %v309, %v324
        %vm368 = vmand %vm366, %vm364
        %vm369 = vmand %vm367, %vm365
        %v370 = vsel %vm368, %v313, 16
        %v371 = vsel %vm369, %v314, 16
        %v372 = vsel %vm315, %v370, 2147483647
        %v373 = vsel %vm315, %v371, 2147483647
        %vm374 = vcmp.lt.s32.totalorder %v372, %v373
        %v375 = vsel %vm374, %v372, %v373
        %v376 = vrot.slane %v375, 4
        %vm377 = vcmp.lt.s32.totalorder %v375, %v376
        %v378 = vsel %vm377, %v375, %v376
        %v379 = vrot.slane %v378, 2
        %vm380 = vcmp.lt.s32.totalorder %v378, %v379
        %v381 = vsel %vm380, %v378, %v379
        %v382 = vrot.slane %v381, 1
        %vm383 = vcmp.lt.s32.totalorder %v381, %v382
        %v384 = vsel %vm383, %v381, %v382
        %385 = vst.msk [vmem:[%s226] sm:$0x1] %vm362, %v384
        %s386 = sand.u32 %s122, 1
        %s387 = scalar_lea.sflag [#allocation3], %s386
        %s388 = sand.u32 %s122, 1
        %s389 = scalar_lea.vmem [#allocation2], %s388
        %p390 = scmp.lt.s32.totalorder %s20, 1
        %s391 = scalar_select %p390, %s20, 1
        %s392 = scalar_lea.vmem %s5, %s391
        // Predicated region
        $region37: #{lasertagger_forward.3} parent=35 // pred_check
          %p393 = pneg %p132
        $region38: #{lasertagger_forward.3} parent=35 // pred_check_branch
          %395 = sbr.rel (%p393) target = $region40
        $region39: #{lasertagger_forward.3} parent=35 // pred_region
          %s397 = ssub.s32 16, 16
          %398 = vsyncadd %s387, %s397
          %s399 = smul.addr %s20, 16
          %s400 = scalar_lea.hbm %s4, %s399
          %s402 = sshll.u32 %s389, 4
          %s403 = int_to_ptr.vmem [resolvable:$true] %s402
          %405 = dma.vmem_to_hbm [thread:$0]  %s403, 16, %s400, %s387
        $region40: #{lasertagger_forward.3} parent=35 // pred_fallthru
          _
        // Predicated region
        $region41: #{lasertagger_forward.3} parent=35 // pred_check
          %p406 = pneg %p158
        $region42: #{lasertagger_forward.3} parent=35 // pred_check_branch
          %408 = sbr.rel (%p406) target = $region44
        $region43: #{lasertagger_forward.3} parent=35 // pred_region
          _
        $region44: #{lasertagger_forward.3} parent=35 // pred_fallthru
          _
      $region36: #{lasertagger_forward.3} parent=5 // pred_fallthru
        _
      %p409 = scmp.le.s32.totalorder 2, %s15
      // Predicated region
      $region45: #{lasertagger_forward.3} parent=5 // pred_check
        %p410 = pneg %p409
      $region46: #{lasertagger_forward.3} parent=5 // pred_check_branch
        %412 = sbr.rel (%p410) target = $region48
      $region47: #{lasertagger_forward.3} parent=5 // pred_region
        %s413 = ssub.s32 %s15, 2
        // Predicated region
        $region49: #{lasertagger_forward.3} parent=47 // pred_check
          %p414 = pneg %p138
        $region50: #{lasertagger_forward.3} parent=47 // pred_check_branch
          %416 = sbr.rel (%p414) target = $region52
        $region51: #{lasertagger_forward.3} parent=47 // pred_region
          %s417 = sand.u32 %s123, 1
          %s418 = scalar_lea.sflag [#allocation3], %s417
          %s419 = sand.u32 %s123, 1
          %s420 = scalar_lea.vmem [#allocation2], %s419
          %421 = dma.done %s418, 16
        $region52: #{lasertagger_forward.3} parent=47 // pred_fallthru
          _
        // Predicated region
        $region53: #{lasertagger_forward.3} parent=47 // pred_check
          %p422 = pneg %p164
        $region54: #{lasertagger_forward.3} parent=47 // pred_check_branch
          %424 = sbr.rel (%p422) target = $region56
        $region55: #{lasertagger_forward.3} parent=47 // pred_region
          %p425 = scmp.lt.s32.totalorder %s21, 1
          %s426 = scalar_select %p425, %s21, 1
          %s427 = scalar_lea.vmem %s5, %s426
        $region56: #{lasertagger_forward.3} parent=47 // pred_fallthru
          _
      $region48: #{lasertagger_forward.3} parent=5 // pred_fallthru
        _
    $region6: #{lasertagger_forward.3} parent=1 // loop_footer
      %s19 = sadd.s32 1, %s15
    $region7: #{lasertagger_forward.3} parent=1 // loop_footer_branch
      %14 = sbr.rel target = $region3
    $region8: #{lasertagger_forward.3} parent=1 // loop_exit
      _
    %428 = vsyncpa [#allocation3], 1
    %s429 = scalar_lea.sflag [#allocation3], 1
    %430 = vsyncpa %s429, 1

// kernel: lasertagger_forward.2
$region0: #{lasertagger_forward.2}
  #allocation0 [shape = 'u32[]', space=smem, size = 0x4, offset = 0x4, fixed_abs, tag = 'smem constant byte address 0x4 - core index']
  #allocation1 [shape = 'u32[144,128]{1,0:T(1,128)}', space=vmem, size = 0x12000, scoped, tag = 'internal scratch']
  #allocation2 [shape = 'f32[16,32]{1,0:T(8,128)}', space=vmem, size = 0x2000, scoped, tag = 'scratch operand']
  %s0 = inlined_call_operand.vmem [shape: bf16[2,8,32], index: 0, kind: input, shape index: {}]
  %s1 = inlined_call_operand.vmem [shape: f32[2,1,8], index: 1, kind: input, shape index: {}]
  %s2 = inlined_call_operand.vmem [shape: f32[1,32], index: 2, kind: input, shape index: {}]
  %s3 = inlined_call_operand.vmem [shape: f32[1,32], index: 3, kind: input, shape index: {}]
  %s4 = inlined_call_operand.vmem [shape: bf16[2,32,96], index: 4, kind: input, shape index: {}]
  %s5 = inlined_call_operand.vmem [shape: f32[2,1,96], index: 5, kind: input, shape index: {}]
  %s6 = inlined_call_operand.vmem [shape: bf16[2,32,32], index: 6, kind: input, shape index: {}]
  %s7 = inlined_call_operand.vmem [shape: f32[2,1,32], index: 7, kind: input, shape index: {}]
  %s8 = inlined_call_operand.vmem [shape: f32[2,1,32], index: 8, kind: input, shape index: {}]
  %s9 = inlined_call_operand.vmem [shape: f32[2,1,32], index: 9, kind: input, shape index: {}]
  %s10 = inlined_call_operand.vmem [shape: bf16[2,32,64], index: 10, kind: input, shape index: {}]
  %s11 = inlined_call_operand.vmem [shape: f32[2,1,64], index: 11, kind: input, shape index: {}]
  %s12 = inlined_call_operand.vmem [shape: bf16[2,64,32], index: 12, kind: input, shape index: {}]
  %s13 = inlined_call_operand.vmem [shape: f32[2,1,32], index: 13, kind: input, shape index: {}]
  %s14 = inlined_call_operand.vmem [shape: f32[2,1,32], index: 14, kind: input, shape index: {}]
  %s15 = inlined_call_operand.vmem [shape: f32[2,1,32], index: 15, kind: input, shape index: {}]
  %s16 = inlined_call_operand.vmem [shape: bf16[2,8,32], index: 16, kind: output, shape index: {}]
  %s17 = sld [smem:[#allocation0]]
  $region105: #{lasertagger_forward.2} parent=0
    _
  %s19 = ssub.s32 1, %s17
  %s20 = scalar_select 0, %s19, %s17
  loop: start=0, step=1, limit=4
  $region2: #{lasertagger_forward.2} parent=0 // loop_pre_header
    _
  $region3: #{lasertagger_forward.2} parent=0 // loop_header
    %s22 = sphi 0, %s26
    %p23 = scmp.ge.s32.totalorder %s22, 4
    %s29 = sphi 0, %s41
    %s30 = sphi 0, %s37
    %s31 = sphi 0, %s29
    %s32 = sphi 0, %s30
    %s33 = sphi 0, %s31
    %s34 = sphi 0, %s32
    %s44 = sphi 0, %s46
    %s47 = sphi 0, %s44
    %s48 = sphi 0, %s47
    %s64 = sphi 0, %s48
    %s70 = sphi 0, %s72
    %s73 = sphi 0, %s70
    %s74 = sphi 0, %s73
    %s90 = sphi 0, %s74
    %s94 = sphi 0, %s94
    %s96 = sphi 0, %s94
    %s97 = sphi 0, %s96
    %s111 = sphi 0, %s97
    %s115 = sphi 0, %s115
    %s117 = sphi 0, %s115
    %s118 = sphi 0, %s117
    %s132 = sphi 0, %s118
    %s138 = sphi 0, %s140
    %s141 = sphi 0, %s138
    %s142 = sphi 0, %s141
    %s158 = sphi 0, %s142
    %s164 = sphi 0, %s166
    %s167 = sphi 0, %s164
    %s168 = sphi 0, %s167
    %s184 = sphi 0, %s168
    %s190 = sphi 0, %s192
    %s193 = sphi 0, %s190
    %s194 = sphi 0, %s193
    %s210 = sphi 0, %s194
    %s216 = sphi 0, %s218
    %s219 = sphi 0, %s216
    %s220 = sphi 0, %s219
    %s236 = sphi 0, %s220
    %s242 = sphi 0, %s244
    %s245 = sphi 0, %s242
    %s246 = sphi 0, %s245
    %s262 = sphi 0, %s246
    %s268 = sphi 0, %s270
    %s271 = sphi 0, %s268
    %s272 = sphi 0, %s271
    %s288 = sphi 0, %s272
    %s294 = sphi 0, %s296
    %s297 = sphi 0, %s294
    %s298 = sphi 0, %s297
    %s314 = sphi 0, %s298
    %s320 = sphi 0, %s322
    %s323 = sphi 0, %s320
    %s324 = sphi 0, %s323
    %s340 = sphi 0, %s324
    %s346 = sphi 0, %s348
    %s349 = sphi 0, %s346
    %s350 = sphi 0, %s349
    %s366 = sphi 0, %s350
    %s372 = sphi 0, %s374
    %s375 = sphi 0, %s372
    %s376 = sphi 0, %s375
    %s392 = sphi 0, %s376
    %s398 = sphi 0, %s400
    %s401 = sphi 0, %s398
    %s402 = sphi 0, %s401
    %s418 = sphi 0, %s402
    %s424 = sphi 0, %s426
    %s427 = sphi 0, %s424
    %s428 = sphi 0, %s427
    %s444 = sphi 0, %s428
    %s450 = sphi 0, %s452
    %s453 = sphi 0, %s450
    %s454 = sphi 0, %s453
    %s470 = sphi 0, %s454
  $region4: #{lasertagger_forward.2} parent=0 // loop_header_branch
    %25 = sbr.rel (%p23) target = $region8
  $region5: #{lasertagger_forward.2} parent=0 // loop_body
    %s27 = ssub.s32 %s22, 1
    %s28 = ssub.s32 %s22, 2
    %s35 = sadd.s32 1, %s30
    %p36 = scmp.ge.s32.totalorder %s35, 2
    %s37 = scalar_select %p36, 0, %s35
    %s38 = sadd.s32 1, %s29
    %s39 = scalar_select %p36, %s38, %s29
    %p40 = scmp.ge.s32.totalorder %s39, 1
    %s41 = scalar_select %p40, 0, %s39
    %s42 = ssub.s32 %s29, %s41
    %p43 = scmp.eq.s32.totalorder %s42, 0
    %s45 = sadd.s32 %s44, 1
    %s46 = scalar_select %p43, %s44, %s45
    %p49 = pneg %p43
    %p50 = scmp.eq.s32.totalorder %s22, 1
    %p51 = por %p49, %p50
    %p52 = scmp.ne.s32.totalorder %s44, %s47
    %p53 = scmp.eq.s32.totalorder %s22, 0
    %p54 = por %p52, %p53
    %p55 = scmp.ne.s32.totalorder %s44, %s47
    %p56 = scmp.eq.s32.totalorder %s27, 1
    %p57 = por %p55, %p56
    %p58 = scmp.ne.s32.totalorder %s47, %s48
    %p59 = scmp.eq.s32.totalorder %s27, 0
    %p60 = por %p58, %p59
    %p61 = scmp.ne.s32.totalorder %s47, %s48
    %p62 = scmp.eq.s32.totalorder %s28, 1
    %p63 = por %p61, %p62
    %p65 = scmp.ne.s32.totalorder %s48, %s64
    %p66 = scmp.eq.s32.totalorder %s28, 0
    %p67 = por %p65, %p66
    %s68 = ssub.s32 %s29, %s41
    %p69 = scmp.eq.s32.totalorder %s68, 0
    %s71 = sadd.s32 %s70, 1
    %s72 = scalar_select %p69, %s70, %s71
    %p75 = pneg %p69
    %p76 = scmp.eq.s32.totalorder %s22, 1
    %p77 = por %p75, %p76
    %p78 = scmp.ne.s32.totalorder %s70, %s73
    %p79 = scmp.eq.s32.totalorder %s22, 0
    %p80 = por %p78, %p79
    %p81 = scmp.ne.s32.totalorder %s70, %s73
    %p82 = scmp.eq.s32.totalorder %s27, 1
    %p83 = por %p81, %p82
    %p84 = scmp.ne.s32.totalorder %s73, %s74
    %p85 = scmp.eq.s32.totalorder %s27, 0
    %p86 = por %p84, %p85
    %p87 = scmp.ne.s32.totalorder %s73, %s74
    %p88 = scmp.eq.s32.totalorder %s28, 1
    %p89 = por %p87, %p88
    %p91 = scmp.ne.s32.totalorder %s74, %s90
    %p92 = scmp.eq.s32.totalorder %s28, 0
    %p93 = por %p91, %p92
    %s95 = sadd.s32 %s94, 1
    %p98 = scmp.eq.s32.totalorder %s22, 1
    %p99 = scmp.ne.s32.totalorder %s94, %s96
    %p100 = scmp.eq.s32.totalorder %s22, 0
    %p101 = por %p99, %p100
    %p102 = scmp.ne.s32.totalorder %s94, %s96
    %p103 = scmp.eq.s32.totalorder %s27, 1
    %p104 = por %p102, %p103
    %p105 = scmp.ne.s32.totalorder %s96, %s97
    %p106 = scmp.eq.s32.totalorder %s27, 0
    %p107 = por %p105, %p106
    %p108 = scmp.ne.s32.totalorder %s96, %s97
    %p109 = scmp.eq.s32.totalorder %s28, 1
    %p110 = por %p108, %p109
    %p112 = scmp.ne.s32.totalorder %s97, %s111
    %p113 = scmp.eq.s32.totalorder %s28, 0
    %p114 = por %p112, %p113
    %s116 = sadd.s32 %s115, 1
    %p119 = scmp.eq.s32.totalorder %s22, 1
    %p120 = scmp.ne.s32.totalorder %s115, %s117
    %p121 = scmp.eq.s32.totalorder %s22, 0
    %p122 = por %p120, %p121
    %p123 = scmp.ne.s32.totalorder %s115, %s117
    %p124 = scmp.eq.s32.totalorder %s27, 1
    %p125 = por %p123, %p124
    %p126 = scmp.ne.s32.totalorder %s117, %s118
    %p127 = scmp.eq.s32.totalorder %s27, 0
    %p128 = por %p126, %p127
    %p129 = scmp.ne.s32.totalorder %s117, %s118
    %p130 = scmp.eq.s32.totalorder %s28, 1
    %p131 = por %p129, %p130
    %p133 = scmp.ne.s32.totalorder %s118, %s132
    %p134 = scmp.eq.s32.totalorder %s28, 0
    %p135 = por %p133, %p134
    %s136 = ssub.s32 %s30, %s37
    %p137 = scmp.eq.s32.totalorder %s136, 0
    %s139 = sadd.s32 %s138, 1
    %s140 = scalar_select %p137, %s138, %s139
    %p143 = pneg %p137
    %p144 = scmp.eq.s32.totalorder %s22, 1
    %p145 = por %p143, %p144
    %p146 = scmp.ne.s32.totalorder %s138, %s141
    %p147 = scmp.eq.s32.totalorder %s22, 0
    %p148 = por %p146, %p147
    %p149 = scmp.ne.s32.totalorder %s138, %s141
    %p150 = scmp.eq.s32.totalorder %s27, 1
    %p151 = por %p149, %p150
    %p152 = scmp.ne.s32.totalorder %s141, %s142
    %p153 = scmp.eq.s32.totalorder %s27, 0
    %p154 = por %p152, %p153
    %p155 = scmp.ne.s32.totalorder %s141, %s142
    %p156 = scmp.eq.s32.totalorder %s28, 1
    %p157 = por %p155, %p156
    %p159 = scmp.ne.s32.totalorder %s142, %s158
    %p160 = scmp.eq.s32.totalorder %s28, 0
    %p161 = por %p159, %p160
    %s162 = ssub.s32 %s30, %s37
    %p163 = scmp.eq.s32.totalorder %s162, 0
    %s165 = sadd.s32 %s164, 1
    %s166 = scalar_select %p163, %s164, %s165
    %p169 = pneg %p163
    %p170 = scmp.eq.s32.totalorder %s22, 1
    %p171 = por %p169, %p170
    %p172 = scmp.ne.s32.totalorder %s164, %s167
    %p173 = scmp.eq.s32.totalorder %s22, 0
    %p174 = por %p172, %p173
    %p175 = scmp.ne.s32.totalorder %s164, %s167
    %p176 = scmp.eq.s32.totalorder %s27, 1
    %p177 = por %p175, %p176
    %p178 = scmp.ne.s32.totalorder %s167, %s168
    %p179 = scmp.eq.s32.totalorder %s27, 0
    %p180 = por %p178, %p179
    %p181 = scmp.ne.s32.totalorder %s167, %s168
    %p182 = scmp.eq.s32.totalorder %s28, 1
    %p183 = por %p181, %p182
    %p185 = scmp.ne.s32.totalorder %s168, %s184
    %p186 = scmp.eq.s32.totalorder %s28, 0
    %p187 = por %p185, %p186
    %s188 = ssub.s32 %s30, %s37
    %p189 = scmp.eq.s32.totalorder %s188, 0
    %s191 = sadd.s32 %s190, 1
    %s192 = scalar_select %p189, %s190, %s191
    %p195 = pneg %p189
    %p196 = scmp.eq.s32.totalorder %s22, 1
    %p197 = por %p195, %p196
    %p198 = scmp.ne.s32.totalorder %s190, %s193
    %p199 = scmp.eq.s32.totalorder %s22, 0
    %p200 = por %p198, %p199
    %p201 = scmp.ne.s32.totalorder %s190, %s193
    %p202 = scmp.eq.s32.totalorder %s27, 1
    %p203 = por %p201, %p202
    %p204 = scmp.ne.s32.totalorder %s193, %s194
    %p205 = scmp.eq.s32.totalorder %s27, 0
    %p206 = por %p204, %p205
    %p207 = scmp.ne.s32.totalorder %s193, %s194
    %p208 = scmp.eq.s32.totalorder %s28, 1
    %p209 = por %p207, %p208
    %p211 = scmp.ne.s32.totalorder %s194, %s210
    %p212 = scmp.eq.s32.totalorder %s28, 0
    %p213 = por %p211, %p212
    %s214 = ssub.s32 %s30, %s37
    %p215 = scmp.eq.s32.totalorder %s214, 0
    %s217 = sadd.s32 %s216, 1
    %s218 = scalar_select %p215, %s216, %s217
    %p221 = pneg %p215
    %p222 = scmp.eq.s32.totalorder %s22, 1
    %p223 = por %p221, %p222
    %p224 = scmp.ne.s32.totalorder %s216, %s219
    %p225 = scmp.eq.s32.totalorder %s22, 0
    %p226 = por %p224, %p225
    %p227 = scmp.ne.s32.totalorder %s216, %s219
    %p228 = scmp.eq.s32.totalorder %s27, 1
    %p229 = por %p227, %p228
    %p230 = scmp.ne.s32.totalorder %s219, %s220
    %p231 = scmp.eq.s32.totalorder %s27, 0
    %p232 = por %p230, %p231
    %p233 = scmp.ne.s32.totalorder %s219, %s220
    %p234 = scmp.eq.s32.totalorder %s28, 1
    %p235 = por %p233, %p234
    %p237 = scmp.ne.s32.totalorder %s220, %s236
    %p238 = scmp.eq.s32.totalorder %s28, 0
    %p239 = por %p237, %p238
    %s240 = ssub.s32 %s30, %s37
    %p241 = scmp.eq.s32.totalorder %s240, 0
    %s243 = sadd.s32 %s242, 1
    %s244 = scalar_select %p241, %s242, %s243
    %p247 = pneg %p241
    %p248 = scmp.eq.s32.totalorder %s22, 1
    %p249 = por %p247, %p248
    %p250 = scmp.ne.s32.totalorder %s242, %s245
    %p251 = scmp.eq.s32.totalorder %s22, 0
    %p252 = por %p250, %p251
    %p253 = scmp.ne.s32.totalorder %s242, %s245
    %p254 = scmp.eq.s32.totalorder %s27, 1
    %p255 = por %p253, %p254
    %p256 = scmp.ne.s32.totalorder %s245, %s246
    %p257 = scmp.eq.s32.totalorder %s27, 0
    %p258 = por %p256, %p257
    %p259 = scmp.ne.s32.totalorder %s245, %s246
    %p260 = scmp.eq.s32.totalorder %s28, 1
    %p261 = por %p259, %p260
    %p263 = scmp.ne.s32.totalorder %s246, %s262
    %p264 = scmp.eq.s32.totalorder %s28, 0
    %p265 = por %p263, %p264
    %s266 = ssub.s32 %s30, %s37
    %p267 = scmp.eq.s32.totalorder %s266, 0
    %s269 = sadd.s32 %s268, 1
    %s270 = scalar_select %p267, %s268, %s269
    %p273 = pneg %p267
    %p274 = scmp.eq.s32.totalorder %s22, 1
    %p275 = por %p273, %p274
    %p276 = scmp.ne.s32.totalorder %s268, %s271
    %p277 = scmp.eq.s32.totalorder %s22, 0
    %p278 = por %p276, %p277
    %p279 = scmp.ne.s32.totalorder %s268, %s271
    %p280 = scmp.eq.s32.totalorder %s27, 1
    %p281 = por %p279, %p280
    %p282 = scmp.ne.s32.totalorder %s271, %s272
    %p283 = scmp.eq.s32.totalorder %s27, 0
    %p284 = por %p282, %p283
    %p285 = scmp.ne.s32.totalorder %s271, %s272
    %p286 = scmp.eq.s32.totalorder %s28, 1
    %p287 = por %p285, %p286
    %p289 = scmp.ne.s32.totalorder %s272, %s288
    %p290 = scmp.eq.s32.totalorder %s28, 0
    %p291 = por %p289, %p290
    %s292 = ssub.s32 %s30, %s37
    %p293 = scmp.eq.s32.totalorder %s292, 0
    %s295 = sadd.s32 %s294, 1
    %s296 = scalar_select %p293, %s294, %s295
    %p299 = pneg %p293
    %p300 = scmp.eq.s32.totalorder %s22, 1
    %p301 = por %p299, %p300
    %p302 = scmp.ne.s32.totalorder %s294, %s297
    %p303 = scmp.eq.s32.totalorder %s22, 0
    %p304 = por %p302, %p303
    %p305 = scmp.ne.s32.totalorder %s294, %s297
    %p306 = scmp.eq.s32.totalorder %s27, 1
    %p307 = por %p305, %p306
    %p308 = scmp.ne.s32.totalorder %s297, %s298
    %p309 = scmp.eq.s32.totalorder %s27, 0
    %p310 = por %p308, %p309
    %p311 = scmp.ne.s32.totalorder %s297, %s298
    %p312 = scmp.eq.s32.totalorder %s28, 1
    %p313 = por %p311, %p312
    %p315 = scmp.ne.s32.totalorder %s298, %s314
    %p316 = scmp.eq.s32.totalorder %s28, 0
    %p317 = por %p315, %p316
    %s318 = ssub.s32 %s30, %s37
    %p319 = scmp.eq.s32.totalorder %s318, 0
    %s321 = sadd.s32 %s320, 1
    %s322 = scalar_select %p319, %s320, %s321
    %p325 = pneg %p319
    %p326 = scmp.eq.s32.totalorder %s22, 1
    %p327 = por %p325, %p326
    %p328 = scmp.ne.s32.totalorder %s320, %s323
    %p329 = scmp.eq.s32.totalorder %s22, 0
    %p330 = por %p328, %p329
    %p331 = scmp.ne.s32.totalorder %s320, %s323
    %p332 = scmp.eq.s32.totalorder %s27, 1
    %p333 = por %p331, %p332
    %p334 = scmp.ne.s32.totalorder %s323, %s324
    %p335 = scmp.eq.s32.totalorder %s27, 0
    %p336 = por %p334, %p335
    %p337 = scmp.ne.s32.totalorder %s323, %s324
    %p338 = scmp.eq.s32.totalorder %s28, 1
    %p339 = por %p337, %p338
    %p341 = scmp.ne.s32.totalorder %s324, %s340
    %p342 = scmp.eq.s32.totalorder %s28, 0
    %p343 = por %p341, %p342
    %s344 = ssub.s32 %s30, %s37
    %p345 = scmp.eq.s32.totalorder %s344, 0
    %s347 = sadd.s32 %s346, 1
    %s348 = scalar_select %p345, %s346, %s347
    %p351 = pneg %p345
    %p352 = scmp.eq.s32.totalorder %s22, 1
    %p353 = por %p351, %p352
    %p354 = scmp.ne.s32.totalorder %s346, %s349
    %p355 = scmp.eq.s32.totalorder %s22, 0
    %p356 = por %p354, %p355
    %p357 = scmp.ne.s32.totalorder %s346, %s349
    %p358 = scmp.eq.s32.totalorder %s27, 1
    %p359 = por %p357, %p358
    %p360 = scmp.ne.s32.totalorder %s349, %s350
    %p361 = scmp.eq.s32.totalorder %s27, 0
    %p362 = por %p360, %p361
    %p363 = scmp.ne.s32.totalorder %s349, %s350
    %p364 = scmp.eq.s32.totalorder %s28, 1
    %p365 = por %p363, %p364
    %p367 = scmp.ne.s32.totalorder %s350, %s366
    %p368 = scmp.eq.s32.totalorder %s28, 0
    %p369 = por %p367, %p368
    %s370 = ssub.s32 %s30, %s37
    %p371 = scmp.eq.s32.totalorder %s370, 0
    %s373 = sadd.s32 %s372, 1
    %s374 = scalar_select %p371, %s372, %s373
    %p377 = pneg %p371
    %p378 = scmp.eq.s32.totalorder %s22, 1
    %p379 = por %p377, %p378
    %p380 = scmp.ne.s32.totalorder %s372, %s375
    %p381 = scmp.eq.s32.totalorder %s22, 0
    %p382 = por %p380, %p381
    %p383 = scmp.ne.s32.totalorder %s372, %s375
    %p384 = scmp.eq.s32.totalorder %s27, 1
    %p385 = por %p383, %p384
    %p386 = scmp.ne.s32.totalorder %s375, %s376
    %p387 = scmp.eq.s32.totalorder %s27, 0
    %p388 = por %p386, %p387
    %p389 = scmp.ne.s32.totalorder %s375, %s376
    %p390 = scmp.eq.s32.totalorder %s28, 1
    %p391 = por %p389, %p390
    %p393 = scmp.ne.s32.totalorder %s376, %s392
    %p394 = scmp.eq.s32.totalorder %s28, 0
    %p395 = por %p393, %p394
    %s396 = ssub.s32 %s30, %s37
    %p397 = scmp.eq.s32.totalorder %s396, 0
    %s399 = sadd.s32 %s398, 1
    %s400 = scalar_select %p397, %s398, %s399
    %p403 = pneg %p397
    %p404 = scmp.eq.s32.totalorder %s22, 1
    %p405 = por %p403, %p404
    %p406 = scmp.ne.s32.totalorder %s398, %s401
    %p407 = scmp.eq.s32.totalorder %s22, 0
    %p408 = por %p406, %p407
    %p409 = scmp.ne.s32.totalorder %s398, %s401
    %p410 = scmp.eq.s32.totalorder %s27, 1
    %p411 = por %p409, %p410
    %p412 = scmp.ne.s32.totalorder %s401, %s402
    %p413 = scmp.eq.s32.totalorder %s27, 0
    %p414 = por %p412, %p413
    %p415 = scmp.ne.s32.totalorder %s401, %s402
    %p416 = scmp.eq.s32.totalorder %s28, 1
    %p417 = por %p415, %p416
    %p419 = scmp.ne.s32.totalorder %s402, %s418
    %p420 = scmp.eq.s32.totalorder %s28, 0
    %p421 = por %p419, %p420
    %s422 = ssub.s32 %s30, %s37
    %p423 = scmp.eq.s32.totalorder %s422, 0
    %s425 = sadd.s32 %s424, 1
    %s426 = scalar_select %p423, %s424, %s425
    %p429 = pneg %p423
    %p430 = scmp.eq.s32.totalorder %s22, 1
    %p431 = por %p429, %p430
    %p432 = scmp.ne.s32.totalorder %s424, %s427
    %p433 = scmp.eq.s32.totalorder %s22, 0
    %p434 = por %p432, %p433
    %p435 = scmp.ne.s32.totalorder %s424, %s427
    %p436 = scmp.eq.s32.totalorder %s27, 1
    %p437 = por %p435, %p436
    %p438 = scmp.ne.s32.totalorder %s427, %s428
    %p439 = scmp.eq.s32.totalorder %s27, 0
    %p440 = por %p438, %p439
    %p441 = scmp.ne.s32.totalorder %s427, %s428
    %p442 = scmp.eq.s32.totalorder %s28, 1
    %p443 = por %p441, %p442
    %p445 = scmp.ne.s32.totalorder %s428, %s444
    %p446 = scmp.eq.s32.totalorder %s28, 0
    %p447 = por %p445, %p446
    %s448 = ssub.s32 %s29, %s41
    %p449 = scmp.eq.s32.totalorder %s448, 0
    %s451 = sadd.s32 %s450, 1
    %s452 = scalar_select %p449, %s450, %s451
    %p455 = pneg %p449
    %p456 = scmp.eq.s32.totalorder %s22, 1
    %p457 = por %p455, %p456
    %p458 = scmp.ne.s32.totalorder %s450, %s453
    %p459 = scmp.eq.s32.totalorder %s22, 0
    %p460 = por %p458, %p459
    %p461 = scmp.ne.s32.totalorder %s450, %s453
    %p462 = scmp.eq.s32.totalorder %s27, 1
    %p463 = por %p461, %p462
    %p464 = scmp.ne.s32.totalorder %s453, %s454
    %p465 = scmp.eq.s32.totalorder %s27, 0
    %p466 = por %p464, %p465
    %p467 = scmp.ne.s32.totalorder %s453, %s454
    %p468 = scmp.eq.s32.totalorder %s28, 1
    %p469 = por %p467, %p468
    %p471 = scmp.ne.s32.totalorder %s454, %s470
    %p472 = scmp.eq.s32.totalorder %s28, 0
    %p473 = por %p471, %p472
    %p474 = scmp.le.s32.totalorder 1, %s22
    %p475 = scmp.lt.s32.totalorder %s22, 3
    %p476 = pnand %p474, %p475
    %p477 = pneg %p476
    // Predicated region
    $region9: #{lasertagger_forward.2} parent=5 // pred_check
      _
    $region10: #{lasertagger_forward.2} parent=5 // pred_check_branch
      %479 = sbr.rel (%p476) target = $region12
    $region11: #{lasertagger_forward.2} parent=5 // pred_region
      %s480 = ssub.s32 %s22, 1
      // Predicated region
      $region13: #{lasertagger_forward.2} parent=11 // pred_check
        %p481 = pneg %p60
      $region14: #{lasertagger_forward.2} parent=11 // pred_check_branch
        %483 = sbr.rel (%p481) target = $region16
      $region15: #{lasertagger_forward.2} parent=11 // pred_region
        %s484 = smul.u32 2, %s31
        %p485 = scmp.lt.s32.totalorder %s484, 1
        %s486 = scalar_select %p485, %s484, 1
        %s487 = smul.addr %s486, 4
        %s488 = scalar_lea.vmem %s0, %s487
        %s489 = smul.u32 2, %s31
      $region16: #{lasertagger_forward.2} parent=11 // pred_fallthru
        _
      // Predicated region
      $region17: #{lasertagger_forward.2} parent=11 // pred_check
        %p490 = pneg %p86
      $region18: #{lasertagger_forward.2} parent=11 // pred_check_branch
        %492 = sbr.rel (%p490) target = $region20
      $region19: #{lasertagger_forward.2} parent=11 // pred_region
        %s493 = smul.u32 2, %s31
        %p494 = scmp.lt.s32.totalorder %s493, 1
        %s495 = scalar_select %p494, %s493, 1
        %s496 = scalar_lea.vmem %s1, %s495
        %s497 = smul.u32 2, %s31
      $region20: #{lasertagger_forward.2} parent=11 // pred_fallthru
        _
      // Predicated region
      $region21: #{lasertagger_forward.2} parent=11 // pred_check
        %p498 = pneg %p107
      $region22: #{lasertagger_forward.2} parent=11 // pred_check_branch
        %500 = sbr.rel (%p498) target = $region24
      $region23: #{lasertagger_forward.2} parent=11 // pred_region
        _
      $region24: #{lasertagger_forward.2} parent=11 // pred_fallthru
        _
      // Predicated region
      $region25: #{lasertagger_forward.2} parent=11 // pred_check
        %p501 = pneg %p128
      $region26: #{lasertagger_forward.2} parent=11 // pred_check_branch
        %503 = sbr.rel (%p501) target = $region28
      $region27: #{lasertagger_forward.2} parent=11 // pred_region
        _
      $region28: #{lasertagger_forward.2} parent=11 // pred_fallthru
        _
    $region12: #{lasertagger_forward.2} parent=5 // pred_fallthru
      _
    %p504 = scmp.lt.s32.totalorder %s22, 2
    // Predicated region
    $region29: #{lasertagger_forward.2} parent=5 // pred_check
      %p505 = pneg %p504
    $region30: #{lasertagger_forward.2} parent=5 // pred_check_branch
      %507 = sbr.rel (%p505) target = $region32
    $region31: #{lasertagger_forward.2} parent=5 // pred_region
      // Predicated region
      $region33: #{lasertagger_forward.2} parent=31 // pred_check
        %p508 = pneg %p148
      $region34: #{lasertagger_forward.2} parent=31 // pred_check_branch
        %510 = sbr.rel (%p508) target = $region36
      $region35: #{lasertagger_forward.2} parent=31 // pred_region
        %p511 = scmp.lt.s32.totalorder %s30, 1
        %s512 = scalar_select %p511, %s30, 1
        %s513 = smul.addr %s512, 4
        %s514 = smul.addr %s513, 4
        %s515 = scalar_lea.vmem %s4, %s514
      $region36: #{lasertagger_forward.2} parent=31 // pred_fallthru
        _
      // Predicated region
      $region37: #{lasertagger_forward.2} parent=31 // pred_check
        %p516 = pneg %p174
      $region38: #{lasertagger_forward.2} parent=31 // pred_check_branch
        %518 = sbr.rel (%p516) target = $region40
      $region39: #{lasertagger_forward.2} parent=31 // pred_region
        %p519 = scmp.lt.s32.totalorder %s30, 1
        %s520 = scalar_select %p519, %s30, 1
        %s521 = scalar_lea.vmem %s5, %s520
      $region40: #{lasertagger_forward.2} parent=31 // pred_fallthru
        _
      // Predicated region
      $region41: #{lasertagger_forward.2} parent=31 // pred_check
        %p522 = pneg %p200
      $region42: #{lasertagger_forward.2} parent=31 // pred_check_branch
        %524 = sbr.rel (%p522) target = $region44
      $region43: #{lasertagger_forward.2} parent=31 // pred_region
        %p525 = scmp.lt.s32.totalorder %s30, 1
        %s526 = scalar_select %p525, %s30, 1
        %s527 = smul.addr %s526, 4
        %s528 = smul.addr %s527, 4
        %s529 = scalar_lea.vmem %s6, %s528
      $region44: #{lasertagger_forward.2} parent=31 // pred_fallthru
        _
      // Predicated region
      $region45: #{lasertagger_forward.2} parent=31 // pred_check
        %p530 = pneg %p226
      $region46: #{lasertagger_forward.2} parent=31 // pred_check_branch
        %532 = sbr.rel (%p530) target = $region48
      $region47: #{lasertagger_forward.2} parent=31 // pred_region
        %p533 = scmp.lt.s32.totalorder %s30, 1
        %s534 = scalar_select %p533, %s30, 1
        %s535 = scalar_lea.vmem %s7, %s534
      $region48: #{lasertagger_forward.2} parent=31 // pred_fallthru
        _
      // Predicated region
      $region49: #{lasertagger_forward.2} parent=31 // pred_check
        %p536 = pneg %p252
      $region50: #{lasertagger_forward.2} parent=31 // pred_check_branch
        %538 = sbr.rel (%p536) target = $region52
      $region51: #{lasertagger_forward.2} parent=31 // pred_region
        %p539 = scmp.lt.s32.totalorder %s30, 1
        %s540 = scalar_select %p539, %s30, 1
        %s541 = scalar_lea.vmem %s8, %s540
      $region52: #{lasertagger_forward.2} parent=31 // pred_fallthru
        _
      // Predicated region
      $region53: #{lasertagger_forward.2} parent=31 // pred_check
        %p542 = pneg %p278
      $region54: #{lasertagger_forward.2} parent=31 // pred_check_branch
        %544 = sbr.rel (%p542) target = $region56
      $region55: #{lasertagger_forward.2} parent=31 // pred_region
        %p545 = scmp.lt.s32.totalorder %s30, 1
        %s546 = scalar_select %p545, %s30, 1
        %s547 = scalar_lea.vmem %s9, %s546
      $region56: #{lasertagger_forward.2} parent=31 // pred_fallthru
        _
      // Predicated region
      $region57: #{lasertagger_forward.2} parent=31 // pred_check
        %p548 = pneg %p304
      $region58: #{lasertagger_forward.2} parent=31 // pred_check_branch
        %550 = sbr.rel (%p548) target = $region60
      $region59: #{lasertagger_forward.2} parent=31 // pred_region
        %p551 = scmp.lt.s32.totalorder %s30, 1
        %s552 = scalar_select %p551, %s30, 1
        %s553 = smul.addr %s552, 4
        %s554 = smul.addr %s553, 4
        %s555 = scalar_lea.vmem %s10, %s554
      $region60: #{lasertagger_forward.2} parent=31 // pred_fallthru
        _
      // Predicated region
      $region61: #{lasertagger_forward.2} parent=31 // pred_check
        %p556 = pneg %p330
      $region62: #{lasertagger_forward.2} parent=31 // pred_check_branch
        %558 = sbr.rel (%p556) target = $region64
      $region63: #{lasertagger_forward.2} parent=31 // pred_region
        %p559 = scmp.lt.s32.totalorder %s30, 1
        %s560 = scalar_select %p559, %s30, 1
        %s561 = scalar_lea.vmem %s11, %s560
      $region64: #{lasertagger_forward.2} parent=31 // pred_fallthru
        _
      // Predicated region
      $region65: #{lasertagger_forward.2} parent=31 // pred_check
        %p562 = pneg %p356
      $region66: #{lasertagger_forward.2} parent=31 // pred_check_branch
        %564 = sbr.rel (%p562) target = $region68
      $region67: #{lasertagger_forward.2} parent=31 // pred_region
        %p565 = scmp.lt.s32.totalorder %s30, 1
        %s566 = scalar_select %p565, %s30, 1
        %s567 = smul.addr %s566, 8
        %s568 = smul.addr %s567, 4
        %s569 = scalar_lea.vmem %s12, %s568
      $region68: #{lasertagger_forward.2} parent=31 // pred_fallthru
        _
      // Predicated region
      $region69: #{lasertagger_forward.2} parent=31 // pred_check
        %p570 = pneg %p382
      $region70: #{lasertagger_forward.2} parent=31 // pred_check_branch
        %572 = sbr.rel (%p570) target = $region72
      $region71: #{lasertagger_forward.2} parent=31 // pred_region
        %p573 = scmp.lt.s32.totalorder %s30, 1
        %s574 = scalar_select %p573, %s30, 1
        %s575 = scalar_lea.vmem %s13, %s574
      $region72: #{lasertagger_forward.2} parent=31 // pred_fallthru
        _
      // Predicated region
      $region73: #{lasertagger_forward.2} parent=31 // pred_check
        %p576 = pneg %p408
      $region74: #{lasertagger_forward.2} parent=31 // pred_check_branch
        %578 = sbr.rel (%p576) target = $region76
      $region75: #{lasertagger_forward.2} parent=31 // pred_region
        %p579 = scmp.lt.s32.totalorder %s30, 1
        %s580 = scalar_select %p579, %s30, 1
        %s581 = scalar_lea.vmem %s14, %s580
      $region76: #{lasertagger_forward.2} parent=31 // pred_fallthru
        _
      // Predicated region
      $region77: #{lasertagger_forward.2} parent=31 // pred_check
        %p582 = pneg %p434
      $region78: #{lasertagger_forward.2} parent=31 // pred_check_branch
        %584 = sbr.rel (%p582) target = $region80
      $region79: #{lasertagger_forward.2} parent=31 // pred_region
        %p585 = scmp.lt.s32.totalorder %s30, 1
        %s586 = scalar_select %p585, %s30, 1
        %s587 = scalar_lea.vmem %s15, %s586
      $region80: #{lasertagger_forward.2} parent=31 // pred_fallthru
        _
    $region32: #{lasertagger_forward.2} parent=5 // pred_fallthru
      _
    %p588 = scmp.le.s32.totalorder 1, %s22
    %p589 = scmp.lt.s32.totalorder %s22, 3
    %p590 = pnand %p588, %p589
    %p591 = pneg %p590
    // Predicated region
    $region81: #{lasertagger_forward.2} parent=5 // pred_check
      _
    $region82: #{lasertagger_forward.2} parent=5 // pred_check_branch
      %593 = sbr.rel (%p590) target = $region84
    $region83: #{lasertagger_forward.2} parent=5 // pred_region
      %s594 = ssub.s32 %s22, 1
      %s595 = smul.u32 2, %s31
      %p596 = scmp.lt.s32.totalorder %s595, 1
      %s597 = scalar_select %p596, %s595, 1
      %s598 = smul.addr %s597, 4
      %s599 = scalar_lea.vmem %s0, %s598
      %p600 = pneg %p60
      %p601 = pneg %p57
      %s602 = smul.u32 2, %s31
      %p603 = scmp.lt.s32.totalorder %s602, 1
      %s604 = scalar_select %p603, %s602, 1
      %s605 = scalar_lea.vmem %s1, %s604
      %p606 = pneg %p86
      %p607 = pneg %p83
      %p608 = pneg %p107
      %p609 = pneg %p104
      %p610 = pneg %p128
      %p611 = pneg %p125
      %p612 = scmp.lt.s32.totalorder %s32, 1
      %s613 = scalar_select %p612, %s32, 1
      %s614 = smul.addr %s613, 4
      %s615 = smul.addr %s614, 4
      %s616 = scalar_lea.vmem %s4, %s615
      %p617 = pneg %p154
      %p618 = pneg %p151
      %p619 = scmp.lt.s32.totalorder %s32, 1
      %s620 = scalar_select %p619, %s32, 1
      %s621 = scalar_lea.vmem %s5, %s620
      %p622 = pneg %p180
      %p623 = pneg %p177
      %p624 = scmp.lt.s32.totalorder %s32, 1
      %s625 = scalar_select %p624, %s32, 1
      %s626 = smul.addr %s625, 4
      %s627 = smul.addr %s626, 4
      %s628 = scalar_lea.vmem %s6, %s627
      %p629 = pneg %p206
      %p630 = pneg %p203
      %p631 = scmp.lt.s32.totalorder %s32, 1
      %s632 = scalar_select %p631, %s32, 1
      %s633 = scalar_lea.vmem %s7, %s632
      %p634 = pneg %p232
      %p635 = pneg %p229
      %p636 = scmp.lt.s32.totalorder %s32, 1
      %s637 = scalar_select %p636, %s32, 1
      %s638 = scalar_lea.vmem %s8, %s637
      %p639 = pneg %p258
      %p640 = pneg %p255
      %p641 = scmp.lt.s32.totalorder %s32, 1
      %s642 = scalar_select %p641, %s32, 1
      %s643 = scalar_lea.vmem %s9, %s642
      %p644 = pneg %p284
      %p645 = pneg %p281
      %p646 = scmp.lt.s32.totalorder %s32, 1
      %s647 = scalar_select %p646, %s32, 1
      %s648 = smul.addr %s647, 4
      %s649 = smul.addr %s648, 4
      %s650 = scalar_lea.vmem %s10, %s649
      %p651 = pneg %p310
      %p652 = pneg %p307
      %p653 = scmp.lt.s32.totalorder %s32, 1
      %s654 = scalar_select %p653, %s32, 1
      %s655 = scalar_lea.vmem %s11, %s654
      %p656 = pneg %p336
      %p657 = pneg %p333
      %p658 = scmp.lt.s32.totalorder %s32, 1
      %s659 = scalar_select %p658, %s32, 1
      %s660 = smul.addr %s659, 8
      %s661 = smul.addr %s660, 4
      %s662 = scalar_lea.vmem %s12, %s661
      %p663 = pneg %p362
      %p664 = pneg %p359
      %p665 = scmp.lt.s32.totalorder %s32, 1
      %s666 = scalar_select %p665, %s32, 1
      %s667 = scalar_lea.vmem %s13, %s666
      %p668 = pneg %p388
      %p669 = pneg %p385
      %p670 = scmp.lt.s32.totalorder %s32, 1
      %s671 = scalar_select %p670, %s32, 1
      %s672 = scalar_lea.vmem %s14, %s671
      %p673 = pneg %p414
      %p674 = pneg %p411
      %p675 = scmp.lt.s32.totalorder %s32, 1
      %s676 = scalar_select %p675, %s32, 1
      %s677 = scalar_lea.vmem %s15, %s676
      %p678 = pneg %p440
      %p679 = pneg %p437
      %p680 = pneg %p466
      %p681 = pneg %p463
      %s682 = smul.u32 2, %s31
      %p683 = scmp.lt.s32.totalorder %s682, 1
      %s684 = scalar_select %p683, %s682, 1
      %s685 = smul.addr %s684, 4
      %s686 = scalar_lea.vmem %s16, %s685
      %s687 = smul.u32 2, %s31
      %p688 = scmp.lt.s32.totalorder %s687, 1
      %s689 = scalar_select %p688, %s687, 1
      %s690 = smul.addr %s689, 4
      %s691 = scalar_lea.vmem %s0, %s690
      %s692 = smul.u32 2, %s31
      %s693 = smul.u32 2, %s31
      %p694 = scmp.lt.s32.totalorder %s693, 1
      %s695 = scalar_select %p694, %s693, 1
      %s696 = scalar_lea.vmem %s1, %s695
      %s697 = smul.u32 2, %s31
      %p698 = scmp.lt.s32.totalorder %s32, 1
      %s699 = scalar_select %p698, %s32, 1
      %s700 = smul.addr %s699, 4
      %s701 = smul.addr %s700, 4
      %s702 = scalar_lea.vmem %s4, %s701
      %p703 = scmp.lt.s32.totalorder %s32, 1
      %s704 = scalar_select %p703, %s32, 1
      %s705 = scalar_lea.vmem %s5, %s704
      %p706 = scmp.lt.s32.totalorder %s32, 1
      %s707 = scalar_select %p706, %s32, 1
      %s708 = smul.addr %s707, 4
      %s709 = smul.addr %s708, 4
      %s710 = scalar_lea.vmem %s6, %s709
      %p711 = scmp.lt.s32.totalorder %s32, 1
      %s712 = scalar_select %p711, %s32, 1
      %s713 = scalar_lea.vmem %s7, %s712
      %p714 = scmp.lt.s32.totalorder %s32, 1
      %s715 = scalar_select %p714, %s32, 1
      %s716 = scalar_lea.vmem %s8, %s715
      %p717 = scmp.lt.s32.totalorder %s32, 1
      %s718 = scalar_select %p717, %s32, 1
      %s719 = scalar_lea.vmem %s9, %s718
      %p720 = scmp.lt.s32.totalorder %s32, 1
      %s721 = scalar_select %p720, %s32, 1
      %s722 = smul.addr %s721, 4
      %s723 = smul.addr %s722, 4
      %s724 = scalar_lea.vmem %s10, %s723
      %p725 = scmp.lt.s32.totalorder %s32, 1
      %s726 = scalar_select %p725, %s32, 1
      %s727 = scalar_lea.vmem %s11, %s726
      %p728 = scmp.lt.s32.totalorder %s32, 1
      %s729 = scalar_select %p728, %s32, 1
      %s730 = smul.addr %s729, 8
      %s731 = smul.addr %s730, 4
      %s732 = scalar_lea.vmem %s12, %s731
      %p733 = scmp.lt.s32.totalorder %s32, 1
      %s734 = scalar_select %p733, %s32, 1
      %s735 = scalar_lea.vmem %s13, %s734
      %p736 = scmp.lt.s32.totalorder %s32, 1
      %s737 = scalar_select %p736, %s32, 1
      %s738 = scalar_lea.vmem %s14, %s737
      %p739 = scmp.lt.s32.totalorder %s32, 1
      %s740 = scalar_select %p739, %s32, 1
      %s741 = scalar_lea.vmem %s15, %s740
      %s742 = smul.u32 2, %s31
      %p743 = scmp.lt.s32.totalorder %s742, 1
      %s744 = scalar_select %p743, %s742, 1
      %s745 = smul.addr %s744, 4
      %s746 = scalar_lea.vmem %s16, %s745
      %s747 = smul.u32 2, %s31
      %p749 = scmp.eq.s32.totalorder %s32, 0
      // Predicated region
      $region85: #{lasertagger_forward.2} parent=83 // pred_check
        %p750 = pneg %p749
      $region86: #{lasertagger_forward.2} parent=83 // pred_check_branch
        %752 = sbr.rel (%p750) target = $region88
      $region87: #{lasertagger_forward.2} parent=83 // pred_region
        %v753 = vld [vmem:[%s691] sm:$0xf]
        %v754 = vld [vmem:[%s691 + $0x4] sm:$0xf]
        %v755 = vunpack.c.l.bf16 %v753
        %v756 = vunpack.c.l.bf16 %v754
        %v757 = vld [vmem:[%s2] sm:$0x1]
        %v758 = vld [vmem:[%s3] sm:$0x1]
        %vm759 = vcmask 261120
        %v760 = vsel %vm759, %v755, 0.0
        %761 = vadd.xlane.f32.xlu0 %v760
        %v762 = vpop.xlane.xlu0 %761
        %v763 = vsel %vm759, %v756, 0.0
        %764 = vadd.xlane.f32.xlu0 %v763
        %v765 = vpop.xlane.xlu0 %764
        %v766 = vrcp.pop 32.0
        %v767 = vmul.f32 %v762, %v766
        %v768 = vmul.f32 %v765, %v766
        %v769 = vsub.f32 %v755, %v767
        %v770 = vsub.f32 %v756, %v768
        %v771 = vmul.f32 %v769, %v769
        %v772 = vmul.f32 %v770, %v770
        %v773 = vsel %vm759, %v771, 0.0
        %774 = vadd.xlane.f32.xlu0 %v773
        %v775 = vpop.xlane.xlu0 %774
        %v776 = vsel %vm759, %v772, 0.0
        %777 = vadd.xlane.f32.xlu0 %v776
        %v778 = vpop.xlane.xlu0 %777
        %v779 = vmul.f32 %v775, %v766
        %v780 = vmul.f32 %v778, %v766
        %v781 = vadd.f32 %v779, 1e-12
        %v782 = vadd.f32 %v780, 1e-12
        %v783 = vrsqrt.pop %v781
        %v784 = vrsqrt.pop %v782
        %v785 = vmul.f32 %v769, %v783
        %v786 = vmul.f32 %v770, %v784
        %v788 = vlaneseq
        %v789 = vshrl.u32 %v788, 7
        %v790 = vsub.s32 0, %v789
        %v791 = vrot.slane %v757, %v790
        %v793 = vmul.f32 %v785, %v791
        %v794 = vmul.f32 %v786, %v791
        %v796 = vlaneseq
        %v797 = vshrl.u32 %v796, 7
        %v798 = vsub.s32 0, %v797
        %v799 = vrot.slane %v758, %v798
        %v801 = vadd.f32 %v793, %v799
        %v802 = vadd.f32 %v794, %v799
        %803 = vst.msk [vmem:[#allocation2] sm:$0xff] %vm759, %v801
        %804 = vst.msk [vmem:[#allocation2 + $0x8] sm:$0xff] %vm759, %v802
      $region88: #{lasertagger_forward.2} parent=83 // pred_fallthru
        _
      %v805 = vld [vmem:[#allocation2] sm:$0xff]
      %v806 = vld [vmem:[#allocation2 + $0x8] sm:$0xff]
      %v807 = vpack.c.bf16 %v806, %v805
      %v808 = vld [vmem:[%s702] sm:$0xf]
      %v809 = vld [vmem:[%s702 + $0x4] sm:$0xf]
      %v810 = vld [vmem:[%s702 + $0x8] sm:$0xf]
      %v811 = vld [vmem:[%s702 + $0xc] sm:$0xf]
      %v812 = vld [vmem:[%s705] sm:$0x1]
      %v814 = vlaneseq
      %v815 = vshrl.u32 %v814, 7
      %v816 = vsub.s32 0, %v815
      %v817 = vrot.slane %v812, %v816
      %v823 = vunpack.c.l.b16 %v808
      %v824 = vunpack.c.l.b16 %v809
      %v825 = vunpack.c.l.b16 %v810
      %v826 = vunpack.c.l.b16 %v811
      %v827 = vpack.c.b16 %v824, %v823
      %v828 = vpack.c.b16 %v826, %v825
      %vm831 = vcmask 261120
      %v833 = vsel %vm831, %v807, 0
      %835 = vmatprep.subr.bf16.mxu0 0
      %836 = vmatpush1.bf16.msra.mxu0 %v827
      %837 = vmatprep.subr.bf16.mxu0 0
      %838 = vmatpush1.bf16.msra.mxu0 %v828
      %839 = vmatprep.subr.bf16.mxu0 0
      %840 = vmatpush1.bf16.msra.mxu0 0
      %841 = vmatprep.subr.bf16.mxu0 0
      %842 = vmatpush1.bf16.msra.mxu0 0
      %843 = vmatprep.subr.bf16.mxu0 0
      %844 = vmatpush1.bf16.msra.mxu0 0
      %845 = vmatprep.subr.bf16.mxu0 0
      %846 = vmatpush1.bf16.msra.mxu0 0
      %847 = vmatprep.subr.bf16.mxu0 0
      %848 = vmatpush1.bf16.msra.mxu0 0
      %849 = vmatprep.subr.bf16.mxu0 0
      %850 = vmatpush1.bf16.msra.mxu0 0
      %851 = vmatprep.subr.bf16.mxu0 0
      %852 = vmatpush1.bf16.msra.mxu0 0
      %853 = vmatprep.subr.bf16.mxu0 0
      %854 = vmatpush1.bf16.msra.mxu0 0
      %855 = vmatprep.subr.bf16.mxu0 0
      %856 = vmatpush1.bf16.msra.mxu0 0
      %857 = vmatprep.subr.bf16.mxu0 0
      %858 = vmatpush1.bf16.msra.mxu0 0
      %859 = vmatprep.subr.bf16.mxu0 0
      %860 = vmatpush1.bf16.msra.mxu0 0
      %861 = vmatprep.subr.bf16.mxu0 0
      %862 = vmatpush1.bf16.msra.mxu0 0
      %863 = vmatprep.subr.bf16.mxu0 0
      %864 = vmatpush1.bf16.msra.mxu0 0
      %865 = vmatprep.subr.bf16.mxu0 0
      %866 = vmatpush1.bf16.msra.mxu0 0
      %867 = vmatprep.mubr.bf16.mxu0 0
      %868 = vmatmul.mubr.bf16.gmra.mrb[0].mxu0 %v833
      %v869 = vpop.f32.mrb[0].mxu0
      %v870 = vadd.f32 %v817, %v869
      %v871 = vpop.f32.mrb[0].mxu0
      %v872 = vpop.f32.mrb[0].mxu0
      %v873 = vadd.f32 %v817, %v872
      %v874 = vpop.f32.mrb[0].mxu0
      %875 = vdwg.mxu0
      %877 = vrot.lane.b32.xlu0 %v870, 120
      %v878 = vpop.permute.xlu0 %877
      %880 = vrot.lane.b32.xlu0 %v870, 112
      %v881 = vpop.permute.xlu0 %880
      %883 = vrot.lane.b32.xlu0 %v870, 104
      %v884 = vpop.permute.xlu0 %883
      %v886 = vpack.c.bf16 %v870, %v870
      %v887 = vpack.c.bf16 %v878, %v878
      %v888 = vpack.c.bf16 %v881, %v881
      %v889 = vpack.c.bf16 %v884, %v884
      %v890 = vld [vmem:[%s696] sm:$0x1]
      %v892 = vlaneseq
      %v893 = vshrl.u32 %v892, 7
      %v894 = vsub.s32 0, %v893
      %v895 = vrot.slane %v890, %v894
      %898 = vrot.lane.b32.xlu0 %v886, 96
      %v899 = vpop.permute.xlu0 %898
      %vm900 = vcmask 64512
      %v902 = vsel %vm900, %v886, 0
      %v905 = vsel %vm900, %v899, 0
      %907 = vmatprep.subr.bf16.mxu0 0
      %908 = vmatpush1.bf16.xpose.msra.mxu0 %v905
      %909 = vmatprep.subr.bf16.mxu0 0
      %910 = vmatpush1.bf16.xpose.msra.mxu0 0
      %911 = vmatprep.subr.bf16.mxu0 0
      %912 = vmatpush1.bf16.xpose.msra.mxu0 0
      %913 = vmatprep.subr.bf16.mxu0 0
      %914 = vmatpush1.bf16.xpose.msra.mxu0 0
      %915 = vmatprep.subr.bf16.mxu0 0
      %916 = vmatpush1.bf16.xpose.msra.mxu0 0
      %917 = vmatprep.subr.bf16.mxu0 0
      %918 = vmatpush1.bf16.xpose.msra.mxu0 0
      %919 = vmatprep.subr.bf16.mxu0 0
      %920 = vmatpush1.bf16.xpose.msra.mxu0 0
      %921 = vmatprep.subr.bf16.mxu0 0
      %922 = vmatpush1.bf16.xpose.msra.mxu0 0
      %923 = vmatprep.subr.bf16.mxu0 0
      %924 = vmatpush1.bf16.xpose.msra.mxu0 0
      %925 = vmatprep.subr.bf16.mxu0 0
      %926 = vmatpush1.bf16.xpose.msra.mxu0 0
      %927 = vmatprep.subr.bf16.mxu0 0
      %928 = vmatpush1.bf16.xpose.msra.mxu0 0
      %929 = vmatprep.subr.bf16.mxu0 0
      %930 = vmatpush1.bf16.xpose.msra.mxu0 0
      %931 = vmatprep.subr.bf16.mxu0 0
      %932 = vmatpush1.bf16.xpose.msra.mxu0 0
      %933 = vmatprep.subr.bf16.mxu0 0
      %934 = vmatpush1.bf16.xpose.msra.mxu0 0
      %935 = vmatprep.subr.bf16.mxu0 0
      %936 = vmatpush1.bf16.xpose.msra.mxu0 0
      %937 = vmatprep.subr.bf16.mxu0 0
      %938 = vmatpush1.bf16.xpose.msra.mxu0 0
      %939 = vmatprep.mubr.bf16.mxu0 0
      %940 = vmatmul.mubr.bf16.gmra.mrb[0].mxu0 %v902
      %v941 = vpop.f32.mrb[0].mxu0
      %v942 = vadd.f32 %v895, %v941
      %v943 = vpop.f32.mrb[0].mxu0
      %v944 = vpop.f32.mrb[0].mxu0
      %v945 = vpop.f32.mrb[0].mxu0
      %946 = vdwg.mxu0
      %948 = vrot.lane.b32.xlu0 %v887, 96
      %v949 = vpop.permute.xlu0 %948
      %v951 = vsel %vm900, %v887, 0
      %v954 = vsel %vm900, %v949, 0
      %956 = vmatprep.subr.bf16.mxu0 0
      %957 = vmatpush1.bf16.xpose.msra.mxu0 %v954
      %958 = vmatprep.subr.bf16.mxu0 0
      %959 = vmatpush1.bf16.xpose.msra.mxu0 0
      %960 = vmatprep.subr.bf16.mxu0 0
      %961 = vmatpush1.bf16.xpose.msra.mxu0 0
      %962 = vmatprep.subr.bf16.mxu0 0
      %963 = vmatpush1.bf16.xpose.msra.mxu0 0
      %964 = vmatprep.subr.bf16.mxu0 0
      %965 = vmatpush1.bf16.xpose.msra.mxu0 0
      %966 = vmatprep.subr.bf16.mxu0 0
      %967 = vmatpush1.bf16.xpose.msra.mxu0 0
      %968 = vmatprep.subr.bf16.mxu0 0
      %969 = vmatpush1.bf16.xpose.msra.mxu0 0
      %970 = vmatprep.subr.bf16.mxu0 0
      %971 = vmatpush1.bf16.xpose.msra.mxu0 0
      %972 = vmatprep.subr.bf16.mxu0 0
      %973 = vmatpush1.bf16.xpose.msra.mxu0 0
      %974 = vmatprep.subr.bf16.mxu0 0
      %975 = vmatpush1.bf16.xpose.msra.mxu0 0
      %976 = vmatprep.subr.bf16.mxu0 0
      %977 = vmatpush1.bf16.xpose.msra.mxu0 0
      %978 = vmatprep.subr.bf16.mxu0 0
      %979 = vmatpush1.bf16.xpose.msra.mxu0 0
      %980 = vmatprep.subr.bf16.mxu0 0
      %981 = vmatpush1.bf16.xpose.msra.mxu0 0
      %982 = vmatprep.subr.bf16.mxu0 0
      %983 = vmatpush1.bf16.xpose.msra.mxu0 0
      %984 = vmatprep.subr.bf16.mxu0 0
      %985 = vmatpush1.bf16.xpose.msra.mxu0 0
      %986 = vmatprep.subr.bf16.mxu0 0
      %987 = vmatpush1.bf16.xpose.msra.mxu0 0
      %988 = vmatprep.mubr.bf16.mxu0 0
      %989 = vmatmul.mubr.bf16.gmra.mrb[0].mxu0 %v951
      %v990 = vpop.f32.mrb[0].mxu0
      %v991 = vadd.f32 %v895, %v990
      %v992 = vpop.f32.mrb[0].mxu0
      %v993 = vpop.f32.mrb[0].mxu0
      %v994 = vpop.f32.mrb[0].mxu0
      %995 = vdwg.mxu0
      %997 = vrot.lane.b32.xlu0 %v888, 96
      %v998 = vpop.permute.xlu0 %997
      %v1000 = vsel %vm900, %v888, 0
      %v1003 = vsel %vm900, %v998, 0
      %1005 = vmatprep.subr.bf16.mxu0 0
      %1006 = vmatpush1.bf16.xpose.msra.mxu0 %v1003
      %1007 = vmatprep.subr.bf16.mxu0 0
      %1008 = vmatpush1.bf16.xpose.msra.mxu0 0
      %1009 = vmatprep.subr.bf16.mxu0 0
      %1010 = vmatpush1.bf16.xpose.msra.mxu0 0
      %1011 = vmatprep.subr.bf16.mxu0 0
      %1012 = vmatpush1.bf16.xpose.msra.mxu0 0
      %1013 = vmatprep.subr.bf16.mxu0 0
      %1014 = vmatpush1.bf16.xpose.msra.mxu0 0
      %1015 = vmatprep.subr.bf16.mxu0 0
      %1016 = vmatpush1.bf16.xpose.msra.mxu0 0
      %1017 = vmatprep.subr.bf16.mxu0 0
      %1018 = vmatpush1.bf16.xpose.msra.mxu0 0
      %1019 = vmatprep.subr.bf16.mxu0 0
      %1020 = vmatpush1.bf16.xpose.msra.mxu0 0
      %1021 = vmatprep.subr.bf16.mxu0 0
      %1022 = vmatpush1.bf16.xpose.msra.mxu0 0
      %1023 = vmatprep.subr.bf16.mxu0 0
      %1024 = vmatpush1.bf16.xpose.msra.mxu0 0
      %1025 = vmatprep.subr.bf16.mxu0 0
      %1026 = vmatpush1.bf16.xpose.msra.mxu0 0
      %1027 = vmatprep.subr.bf16.mxu0 0
      %1028 = vmatpush1.bf16.xpose.msra.mxu0 0
      %1029 = vmatprep.subr.bf16.mxu0 0
      %1030 = vmatpush1.bf16.xpose.msra.mxu0 0
      %1031 = vmatprep.subr.bf16.mxu0 0
      %1032 = vmatpush1.bf16.xpose.msra.mxu0 0
      %1033 = vmatprep.subr.bf16.mxu0 0
      %1034 = vmatpush1.bf16.xpose.msra.mxu0 0
      %1035 = vmatprep.subr.bf16.mxu0 0
      %1036 = vmatpush1.bf16.xpose.msra.mxu0 0
      %1037 = vmatprep.mubr.bf16.mxu0 0
      %1038 = vmatmul.mubr.bf16.gmra.mrb[0].mxu0 %v1000
      %v1039 = vpop.f32.mrb[0].mxu0
      %v1040 = vadd.f32 %v895, %v1039
      %v1041 = vpop.f32.mrb[0].mxu0
      %v1042 = vpop.f32.mrb[0].mxu0
      %v1043 = vpop.f32.mrb[0].mxu0
      %1044 = vdwg.mxu0
      %1046 = vrot.lane.b32.xlu0 %v889, 96
      %v1047 = vpop.permute.xlu0 %1046
      %v1049 = vsel %vm900, %v889, 0
      %v1052 = vsel %vm900, %v1047, 0
      %1054 = vmatprep.subr.bf16.mxu0 0
      %1055 = vmatpush1.bf16.xpose.msra.mxu0 %v1052
      %1056 = vmatprep.subr.bf16.mxu0 0
      %1057 = vmatpush1.bf16.xpose.msra.mxu0 0
      %1058 = vmatprep.subr.bf16.mxu0 0
      %1059 = vmatpush1.bf16.xpose.msra.mxu0 0
      %1060 = vmatprep.subr.bf16.mxu0 0
      %1061 = vmatpush1.bf16.xpose.msra.mxu0 0
      %1062 = vmatprep.subr.bf16.mxu0 0
      %1063 = vmatpush1.bf16.xpose.msra.mxu0 0
      %1064 = vmatprep.subr.bf16.mxu0 0
      %1065 = vmatpush1.bf16.xpose.msra.mxu0 0
      %1066 = vmatprep.subr.bf16.mxu0 0
      %1067 = vmatpush1.bf16.xpose.msra.mxu0 0
      %1068 = vmatprep.subr.bf16.mxu0 0
      %1069 = vmatpush1.bf16.xpose.msra.mxu0 0
      %1070 = vmatprep.subr.bf16.mxu0 0
      %1071 = vmatpush1.bf16.xpose.msra.mxu0 0
      %1072 = vmatprep.subr.bf16.mxu0 0
      %1073 = vmatpush1.bf16.xpose.msra.mxu0 0
      %1074 = vmatprep.subr.bf16.mxu0 0
      %1075 = vmatpush1.bf16.xpose.msra.mxu0 0
      %1076 = vmatprep.subr.bf16.mxu0 0
      %1077 = vmatpush1.bf16.xpose.msra.mxu0 0
      %1078 = vmatprep.subr.bf16.mxu0 0
      %1079 = vmatpush1.bf16.xpose.msra.mxu0 0
      %1080 = vmatprep.subr.bf16.mxu0 0
      %1081 = vmatpush1.bf16.xpose.msra.mxu0 0
      %1082 = vmatprep.subr.bf16.mxu0 0
      %1083 = vmatpush1.bf16.xpose.msra.mxu0 0
      %1084 = vmatprep.subr.bf16.mxu0 0
      %1085 = vmatpush1.bf16.xpose.msra.mxu0 0
      %1086 = vmatprep.mubr.bf16.mxu0 0
      %1087 = vmatmul.mubr.bf16.gmra.mrb[0].mxu0 %v1049
      %v1088 = vpop.f32.mrb[0].mxu0
      %v1089 = vadd.f32 %v895, %v1088
      %v1090 = vpop.f32.mrb[0].mxu0
      %v1091 = vpop.f32.mrb[0].mxu0
      %v1092 = vpop.f32.mrb[0].mxu0
      %1093 = vdwg.mxu0
      %v1094 = vsel %vm900, %v942, -inf
      %1095 = vmax.xlane.f32.xlu0 %v1094
      %v1096 = vpop.xlane.xlu0 %1095
      %v1097 = vsel %vm900, %v991, -inf
      %1098 = vmax.xlane.f32.xlu0 %v1097
      %v1099 = vpop.xlane.xlu0 %1098
      %v1100 = vsel %vm900, %v1040, -inf
      %1101 = vmax.xlane.f32.xlu0 %v1100
      %v1102 = vpop.xlane.xlu0 %1101
      %v1103 = vsel %vm900, %v1089, -inf
      %1104 = vmax.xlane.f32.xlu0 %v1103
      %v1105 = vpop.xlane.xlu0 %1104
      %v1106 = vsub.f32 %v942, %v1096
      %v1107 = vsub.f32 %v991, %v1099
      %v1108 = vsub.f32 %v1040, %v1102
      %v1109 = vsub.f32 %v1089, %v1105
      %v1110 = vmul.f32 %v1106, 1.442695
      %v1111 = vpow.pop %v1110
      %v1112 = vmul.f32 %v1107, 1.442695
      %v1113 = vpow.pop %v1112
      %v1114 = vmul.f32 %v1108, 1.442695
      %v1115 = vpow.pop %v1114
      %v1116 = vmul.f32 %v1109, 1.442695
      %v1117 = vpow.pop %v1116
      %v1118 = vsel %vm900, %v1111, 0.0
      %1119 = vadd.xlane.f32.xlu0 %v1118
      %v1120 = vpop.xlane.xlu0 %1119
      %v1121 = vsel %vm900, %v1113, 0.0
      %1122 = vadd.xlane.f32.xlu0 %v1121
      %v1123 = vpop.xlane.xlu0 %1122
      %v1124 = vsel %vm900, %v1115, 0.0
      %1125 = vadd.xlane.f32.xlu0 %v1124
      %v1126 = vpop.xlane.xlu0 %1125
      %v1127 = vsel %vm900, %v1117, 0.0
      %1128 = vadd.xlane.f32.xlu0 %v1127
      %v1129 = vpop.xlane.xlu0 %1128
      %v1130 = vrcp.pop %v1120
      %v1131 = vrcp.pop %v1123
      %v1132 = vrcp.pop %v1126
      %v1133 = vrcp.pop %v1129
      %v1134 = vmul.f32 %v1111, %v1130
      %v1135 = vmul.f32 %v1113, %v1131
      %v1136 = vmul.f32 %v1115, %v1132
      %v1137 = vmul.f32 %v1117, %v1133
      %v1138 = vpack.c.bf16 %v1134, %v1134
      %v1139 = vpack.c.bf16 %v1135, %v1135
      %v1140 = vpack.c.bf16 %v1136, %v1136
      %v1141 = vpack.c.bf16 %v1137, %v1137
      %1142 = vrot.lane.b32.xlu0 %v886, 64
      %v1143 = vpop.permute.xlu0 %1142
      %v1145 = vsel %vm900, %v1138, 0
      %vm1147 = vcmask 1043456
      %v1149 = vsel %vm1147, %v1143, 0
      %1151 = vmatprep.subr.bf16.mxu0 0
      %1152 = vmatpush1.bf16.msra.mxu0 %v1149
      %1153 = vmatprep.subr.bf16.mxu0 0
      %1154 = vmatpush1.bf16.msra.mxu0 0
      %1155 = vmatprep.subr.bf16.mxu0 0
      %1156 = vmatpush1.bf16.msra.mxu0 0
      %1157 = vmatprep.subr.bf16.mxu0 0
      %1158 = vmatpush1.bf16.msra.mxu0 0
      %1159 = vmatprep.subr.bf16.mxu0 0
      %1160 = vmatpush1.bf16.msra.mxu0 0
      %1161 = vmatprep.subr.bf16.mxu0 0
      %1162 = vmatpush1.bf16.msra.mxu0 0
      %1163 = vmatprep.subr.bf16.mxu0 0
      %1164 = vmatpush1.bf16.msra.mxu0 0
      %1165 = vmatprep.subr.bf16.mxu0 0
      %1166 = vmatpush1.bf16.msra.mxu0 0
      %1167 = vmatprep.subr.bf16.mxu0 0
      %1168 = vmatpush1.bf16.msra.mxu0 0
      %1169 = vmatprep.subr.bf16.mxu0 0
      %1170 = vmatpush1.bf16.msra.mxu0 0
      %1171 = vmatprep.subr.bf16.mxu0 0
      %1172 = vmatpush1.bf16.msra.mxu0 0
      %1173 = vmatprep.subr.bf16.mxu0 0
      %1174 = vmatpush1.bf16.msra.mxu0 0
      %1175 = vmatprep.subr.bf16.mxu0 0
      %1176 = vmatpush1.bf16.msra.mxu0 0
      %1177 = vmatprep.subr.bf16.mxu0 0
      %1178 = vmatpush1.bf16.msra.mxu0 0
      %1179 = vmatprep.subr.bf16.mxu0 0
      %1180 = vmatpush1.bf16.msra.mxu0 0
      %1181 = vmatprep.subr.bf16.mxu0 0
      %1182 = vmatpush1.bf16.msra.mxu0 0
      %1183 = vmatprep.mubr.bf16.mxu0 0
      %1184 = vmatmul.mubr.bf16.gmra.mrb[0].mxu0 %v1145
      %v1185 = vpop.f32.mrb[0].mxu0
      %v1186 = vadd.f32 0.0, %v1185
      %v1187 = vpop.f32.mrb[0].mxu0
      %v1188 = vpop.f32.mrb[0].mxu0
      %v1189 = vpop.f32.mrb[0].mxu0
      %1190 = vdwg.mxu0
      %1191 = vrot.lane.b32.xlu0 %v887, 64
      %v1192 = vpop.permute.xlu0 %1191
      %v1194 = vsel %vm900, %v1139, 0
      %v1197 = vsel %vm1147, %v1192, 0
      %1199 = vmatprep.subr.bf16.mxu0 0
      %1200 = vmatpush1.bf16.msra.mxu0 %v1197
      %1201 = vmatprep.subr.bf16.mxu0 0
      %1202 = vmatpush1.bf16.msra.mxu0 0
      %1203 = vmatprep.subr.bf16.mxu0 0
      %1204 = vmatpush1.bf16.msra.mxu0 0
      %1205 = vmatprep.subr.bf16.mxu0 0
      %1206 = vmatpush1.bf16.msra.mxu0 0
      %1207 = vmatprep.subr.bf16.mxu0 0
      %1208 = vmatpush1.bf16.msra.mxu0 0
      %1209 = vmatprep.subr.bf16.mxu0 0
      %1210 = vmatpush1.bf16.msra.mxu0 0
      %1211 = vmatprep.subr.bf16.mxu0 0
      %1212 = vmatpush1.bf16.msra.mxu0 0
      %1213 = vmatprep.subr.bf16.mxu0 0
      %1214 = vmatpush1.bf16.msra.mxu0 0
      %1215 = vmatprep.subr.bf16.mxu0 0
      %1216 = vmatpush1.bf16.msra.mxu0 0
      %1217 = vmatprep.subr.bf16.mxu0 0
      %1218 = vmatpush1.bf16.msra.mxu0 0
      %1219 = vmatprep.subr.bf16.mxu0 0
      %1220 = vmatpush1.bf16.msra.mxu0 0
      %1221 = vmatprep.subr.bf16.mxu0 0
      %1222 = vmatpush1.bf16.msra.mxu0 0
      %1223 = vmatprep.subr.bf16.mxu0 0
      %1224 = vmatpush1.bf16.msra.mxu0 0
      %1225 = vmatprep.subr.bf16.mxu0 0
      %1226 = vmatpush1.bf16.msra.mxu0 0
      %1227 = vmatprep.subr.bf16.mxu0 0
      %1228 = vmatpush1.bf16.msra.mxu0 0
      %1229 = vmatprep.subr.bf16.mxu0 0
      %1230 = vmatpush1.bf16.msra.mxu0 0
      %1231 = vmatprep.mubr.bf16.mxu0 0
      %1232 = vmatmul.mubr.bf16.gmra.mrb[0].mxu0 %v1194
      %v1233 = vpop.f32.mrb[0].mxu0
      %v1234 = vadd.f32 0.0, %v1233
      %v1235 = vpop.f32.mrb[0].mxu0
      %v1236 = vpop.f32.mrb[0].mxu0
      %v1237 = vpop.f32.mrb[0].mxu0
      %1238 = vdwg.mxu0
      %1239 = vrot.lane.b32.xlu0 %v888, 64
      %v1240 = vpop.permute.xlu0 %1239
      %v1242 = vsel %vm900, %v1140, 0
      %v1245 = vsel %vm1147, %v1240, 0
      %1247 = vmatprep.subr.bf16.mxu0 0
      %1248 = vmatpush1.bf16.msra.mxu0 %v1245
      %1249 = vmatprep.subr.bf16.mxu0 0
      %1250 = vmatpush1.bf16.msra.mxu0 0
      %1251 = vmatprep.subr.bf16.mxu0 0
      %1252 = vmatpush1.bf16.msra.mxu0 0
      %1253 = vmatprep.subr.bf16.mxu0 0
      %1254 = vmatpush1.bf16.msra.mxu0 0
      %1255 = vmatprep.subr.bf16.mxu0 0
      %1256 = vmatpush1.bf16.msra.mxu0 0
      %1257 = vmatprep.subr.bf16.mxu0 0
      %1258 = vmatpush1.bf16.msra.mxu0 0
      %1259 = vmatprep.subr.bf16.mxu0 0
      %1260 = vmatpush1.bf16.msra.mxu0 0
      %1261 = vmatprep.subr.bf16.mxu0 0
      %1262 = vmatpush1.bf16.msra.mxu0 0
      %1263 = vmatprep.subr.bf16.mxu0 0
      %1264 = vmatpush1.bf16.msra.mxu0 0
      %1265 = vmatprep.subr.bf16.mxu0 0
      %1266 = vmatpush1.bf16.msra.mxu0 0
      %1267 = vmatprep.subr.bf16.mxu0 0
      %1268 = vmatpush1.bf16.msra.mxu0 0
      %1269 = vmatprep.subr.bf16.mxu0 0
      %1270 = vmatpush1.bf16.msra.mxu0 0
      %1271 = vmatprep.subr.bf16.mxu0 0
      %1272 = vmatpush1.bf16.msra.mxu0 0
      %1273 = vmatprep.subr.bf16.mxu0 0
      %1274 = vmatpush1.bf16.msra.mxu0 0
      %1275 = vmatprep.subr.bf16.mxu0 0
      %1276 = vmatpush1.bf16.msra.mxu0 0
      %1277 = vmatprep.subr.bf16.mxu0 0
      %1278 = vmatpush1.bf16.msra.mxu0 0
      %1279 = vmatprep.mubr.bf16.mxu0 0
      %1280 = vmatmul.mubr.bf16.gmra.mrb[0].mxu0 %v1242
      %v1281 = vpop.f32.mrb[0].mxu0
      %v1282 = vadd.f32 0.0, %v1281
      %v1283 = vpop.f32.mrb[0].mxu0
      %v1284 = vpop.f32.mrb[0].mxu0
      %v1285 = vpop.f32.mrb[0].mxu0
      %1286 = vdwg.mxu0
      %1287 = vrot.lane.b32.xlu0 %v889, 64
      %v1288 = vpop.permute.xlu0 %1287
      %v1290 = vsel %vm900, %v1141, 0
      %v1293 = vsel %vm1147, %v1288, 0
      %1295 = vmatprep.subr.bf16.mxu0 0
      %1296 = vmatpush1.bf16.msra.mxu0 %v1293
      %1297 = vmatprep.subr.bf16.mxu0 0
      %1298 = vmatpush1.bf16.msra.mxu0 0
      %1299 = vmatprep.subr.bf16.mxu0 0
      %1300 = vmatpush1.bf16.msra.mxu0 0
      %1301 = vmatprep.subr.bf16.mxu0 0
      %1302 = vmatpush1.bf16.msra.mxu0 0
      %1303 = vmatprep.subr.bf16.mxu0 0
      %1304 = vmatpush1.bf16.msra.mxu0 0
      %1305 = vmatprep.subr.bf16.mxu0 0
      %1306 = vmatpush1.bf16.msra.mxu0 0
      %1307 = vmatprep.subr.bf16.mxu0 0
      %1308 = vmatpush1.bf16.msra.mxu0 0
      %1309 = vmatprep.subr.bf16.mxu0 0
      %1310 = vmatpush1.bf16.msra.mxu0 0
      %1311 = vmatprep.subr.bf16.mxu0 0
      %1312 = vmatpush1.bf16.msra.mxu0 0
      %1313 = vmatprep.subr.bf16.mxu0 0
      %1314 = vmatpush1.bf16.msra.mxu0 0
      %1315 = vmatprep.subr.bf16.mxu0 0
      %1316 = vmatpush1.bf16.msra.mxu0 0
      %1317 = vmatprep.subr.bf16.mxu0 0
      %1318 = vmatpush1.bf16.msra.mxu0 0
      %1319 = vmatprep.subr.bf16.mxu0 0
      %1320 = vmatpush1.bf16.msra.mxu0 0
      %1321 = vmatprep.subr.bf16.mxu0 0
      %1322 = vmatpush1.bf16.msra.mxu0 0
      %1323 = vmatprep.subr.bf16.mxu0 0
      %1324 = vmatpush1.bf16.msra.mxu0 0
      %1325 = vmatprep.subr.bf16.mxu0 0
      %1326 = vmatpush1.bf16.msra.mxu0 0
      %1327 = vmatprep.mubr.bf16.mxu0 0
      %1328 = vmatmul.mubr.bf16.gmra.mrb[0].mxu0 %v1290
      %v1329 = vpop.f32.mrb[0].mxu0
      %v1330 = vadd.f32 0.0, %v1329
      %v1331 = vpop.f32.mrb[0].mxu0
      %v1332 = vpop.f32.mrb[0].mxu0
      %v1333 = vpop.f32.mrb[0].mxu0
      %1334 = vdwg.mxu0
      %1336 = vrot.lane.b32.xlu0 %v1234, 8
      %v1337 = vpop.permute.xlu0 %1336
      %1340 = vrot.lane.b32.xlu0 %v1282, 16
      %v1341 = vpop.permute.xlu0 %1340
      %1344 = vrot.lane.b32.xlu0 %v1330, 24
      %v1345 = vpop.permute.xlu0 %1344
      %v1347 = vsel %vm900, %v1186, %v1337
      %vm1348 = vcmask 130048
      %v1349 = vsel %vm1348, %v1347, %v1341
      %vm1350 = vcmask 195584
      %v1351 = vsel %vm1350, %v1349, %v1345
      %1353 = vrot.lane.b32.xlu0 %v873, 120
      %v1354 = vpop.permute.xlu0 %1353
      %1356 = vrot.lane.b32.xlu0 %v873, 112
      %v1357 = vpop.permute.xlu0 %1356
      %1359 = vrot.lane.b32.xlu0 %v873, 104
      %v1360 = vpop.permute.xlu0 %1359
      %v1362 = vpack.c.bf16 %v873, %v873
      %v1363 = vpack.c.bf16 %v1354, %v1354
      %v1364 = vpack.c.bf16 %v1357, %v1357
      %v1365 = vpack.c.bf16 %v1360, %v1360
      %s1366 = scalar_lea.vmem %s696, 1
      %v1367 = vld [vmem:[%s1366] sm:$0x1]
      %v1369 = vlaneseq
      %v1370 = vshrl.u32 %v1369, 7
      %v1371 = vsub.s32 0, %v1370
      %v1372 = vrot.slane %v1367, %v1371
      %1375 = vrot.lane.b32.xlu0 %v1362, 96
      %v1376 = vpop.permute.xlu0 %1375
      %v1378 = vsel %vm900, %v1362, 0
      %v1381 = vsel %vm900, %v1376, 0
      %1383 = vmatprep.subr.bf16.mxu0 0
      %1384 = vmatpush1.bf16.xpose.msra.mxu0 %v1381
      %1385 = vmatprep.subr.bf16.mxu0 0
      %1386 = vmatpush1.bf16.xpose.msra.mxu0 0
      %1387 = vmatprep.subr.bf16.mxu0 0
      %1388 = vmatpush1.bf16.xpose.msra.mxu0 0
      %1389 = vmatprep.subr.bf16.mxu0 0
      %1390 = vmatpush1.bf16.xpose.msra.mxu0 0
      %1391 = vmatprep.subr.bf16.mxu0 0
      %1392 = vmatpush1.bf16.xpose.msra.mxu0 0
      %1393 = vmatprep.subr.bf16.mxu0 0
      %1394 = vmatpush1.bf16.xpose.msra.mxu0 0
      %1395 = vmatprep.subr.bf16.mxu0 0
      %1396 = vmatpush1.bf16.xpose.msra.mxu0 0
      %1397 = vmatprep.subr.bf16.mxu0 0
      %1398 = vmatpush1.bf16.xpose.msra.mxu0 0
      %1399 = vmatprep.subr.bf16.mxu0 0
      %1400 = vmatpush1.bf16.xpose.msra.mxu0 0
      %1401 = vmatprep.subr.bf16.mxu0 0
      %1402 = vmatpush1.bf16.xpose.msra.mxu0 0
      %1403 = vmatprep.subr.bf16.mxu0 0
      %1404 = vmatpush1.bf16.xpose.msra.mxu0 0
      %1405 = vmatprep.subr.bf16.mxu0 0
      %1406 = vmatpush1.bf16.xpose.msra.mxu0 0
      %1407 = vmatprep.subr.bf16.mxu0 0
      %1408 = vmatpush1.bf16.xpose.msra.mxu0 0
      %1409 = vmatprep.subr.bf16.mxu0 0
      %1410 = vmatpush1.bf16.xpose.msra.mxu0 0
      %1411 = vmatprep.subr.bf16.mxu0 0
      %1412 = vmatpush1.bf16.xpose.msra.mxu0 0
      %1413 = vmatprep.subr.bf16.mxu0 0
      %1414 = vmatpush1.bf16.xpose.msra.mxu0 0
      %1415 = vmatprep.mubr.bf16.mxu0 0
      %1416 = vmatmul.mubr.bf16.gmra.mrb[0].mxu0 %v1378
      %v1417 = vpop.f32.mrb[0].mxu0
      %v1418 = vadd.f32 %v1372, %v1417
      %v1419 = vpop.f32.mrb[0].mxu0
      %v1420 = vpop.f32.mrb[0].mxu0
      %v1421 = vpop.f32.mrb[0].mxu0
      %1422 = vdwg.mxu0
      %1424 = vrot.lane.b32.xlu0 %v1363, 96
      %v1425 = vpop.permute.xlu0 %1424
      %v1427 = vsel %vm900, %v1363, 0
      %v1430 = vsel %vm900, %v1425, 0
      %1432 = vmatprep.subr.bf16.mxu0 0
      %1433 = vmatpush1.bf16.xpose.msra.mxu0 %v1430
      %1434 = vmatprep.subr.bf16.mxu0 0
      %1435 = vmatpush1.bf16.xpose.msra.mxu0 0
      %1436 = vmatprep.subr.bf16.mxu0 0
      %1437 = vmatpush1.bf16.xpose.msra.mxu0 0
      %1438 = vmatprep.subr.bf16.mxu0 0
      %1439 = vmatpush1.bf16.xpose.msra.mxu0 0
      %1440 = vmatprep.subr.bf16.mxu0 0
      %1441 = vmatpush1.bf16.xpose.msra.mxu0 0
      %1442 = vmatprep.subr.bf16.mxu0 0
      %1443 = vmatpush1.bf16.xpose.msra.mxu0 0
      %1444 = vmatprep.subr.bf16.mxu0 0
      %1445 = vmatpush1.bf16.xpose.msra.mxu0 0
      %1446 = vmatprep.subr.bf16.mxu0 0
      %1447 = vmatpush1.bf16.xpose.msra.mxu0 0
      %1448 = vmatprep.subr.bf16.mxu0 0
      %1449 = vmatpush1.bf16.xpose.msra.mxu0 0
      %1450 = vmatprep.subr.bf16.mxu0 0
      %1451 = vmatpush1.bf16.xpose.msra.mxu0 0
      %1452 = vmatprep.subr.bf16.mxu0 0
      %1453 = vmatpush1.bf16.xpose.msra.mxu0 0
      %1454 = vmatprep.subr.bf16.mxu0 0
      %1455 = vmatpush1.bf16.xpose.msra.mxu0 0
      %1456 = vmatprep.subr.bf16.mxu0 0
      %1457 = vmatpush1.bf16.xpose.msra.mxu0 0
      %1458 = vmatprep.subr.bf16.mxu0 0
      %1459 = vmatpush1.bf16.xpose.msra.mxu0 0
      %1460 = vmatprep.subr.bf16.mxu0 0
      %1461 = vmatpush1.bf16.xpose.msra.mxu0 0
      %1462 = vmatprep.subr.bf16.mxu0 0
      %1463 = vmatpush1.bf16.xpose.msra.mxu0 0
      %1464 = vmatprep.mubr.bf16.mxu0 0
      %1465 = vmatmul.mubr.bf16.gmra.mrb[0].mxu0 %v1427
      %v1466 = vpop.f32.mrb[0].mxu0
      %v1467 = vadd.f32 %v1372, %v1466
      %v1468 = vpop.f32.mrb[0].mxu0
      %v1469 = vpop.f32.mrb[0].mxu0
      %v1470 = vpop.f32.mrb[0].mxu0
      %1471 = vdwg.mxu0
      %1473 = vrot.lane.b32.xlu0 %v1364, 96
      %v1474 = vpop.permute.xlu0 %1473
      %v1476 = vsel %vm900, %v1364, 0
      %v1479 = vsel %vm900, %v1474, 0
      %1481 = vmatprep.subr.bf16.mxu0 0
      %1482 = vmatpush1.bf16.xpose.msra.mxu0 %v1479
      %1483 = vmatprep.subr.bf16.mxu0 0
      %1484 = vmatpush1.bf16.xpose.msra.mxu0 0
      %1485 = vmatprep.subr.bf16.mxu0 0
      %1486 = vmatpush1.bf16.xpose.msra.mxu0 0
      %1487 = vmatprep.subr.bf16.mxu0 0
      %1488 = vmatpush1.bf16.xpose.msra.mxu0 0
      %1489 = vmatprep.subr.bf16.mxu0 0
      %1490 = vmatpush1.bf16.xpose.msra.mxu0 0
      %1491 = vmatprep.subr.bf16.mxu0 0
      %1492 = vmatpush1.bf16.xpose.msra.mxu0 0
      %1493 = vmatprep.subr.bf16.mxu0 0
      %1494 = vmatpush1.bf16.xpose.msra.mxu0 0
      %1495 = vmatprep.subr.bf16.mxu0 0
      %1496 = vmatpush1.bf16.xpose.msra.mxu0 0
      %1497 = vmatprep.subr.bf16.mxu0 0
      %1498 = vmatpush1.bf16.xpose.msra.mxu0 0
      %1499 = vmatprep.subr.bf16.mxu0 0
      %1500 = vmatpush1.bf16.xpose.msra.mxu0 0
      %1501 = vmatprep.subr.bf16.mxu0 0
      %1502 = vmatpush1.bf16.xpose.msra.mxu0 0
      %1503 = vmatprep.subr.bf16.mxu0 0
      %1504 = vmatpush1.bf16.xpose.msra.mxu0 0
      %1505 = vmatprep.subr.bf16.mxu0 0
      %1506 = vmatpush1.bf16.xpose.msra.mxu0 0
      %1507 = vmatprep.subr.bf16.mxu0 0
      %1508 = vmatpush1.bf16.xpose.msra.mxu0 0
      %1509 = vmatprep.subr.bf16.mxu0 0
      %1510 = vmatpush1.bf16.xpose.msra.mxu0 0
      %1511 = vmatprep.subr.bf16.mxu0 0
      %1512 = vmatpush1.bf16.xpose.msra.mxu0 0
      %1513 = vmatprep.mubr.bf16.mxu0 0
      %1514 = vmatmul.mubr.bf16.gmra.mrb[0].mxu0 %v1476
      %v1515 = vpop.f32.mrb[0].mxu0
      %v1516 = vadd.f32 %v1372, %v1515
      %v1517 = vpop.f32.mrb[0].mxu0
      %v1518 = vpop.f32.mrb[0].mxu0
      %v1519 = vpop.f32.mrb[0].mxu0
      %1520 = vdwg.mxu0
      %1522 = vrot.lane.b32.xlu0 %v1365, 96
      %v1523 = vpop.permute.xlu0 %1522
      %v1525 = vsel %vm900, %v1365, 0
      %v1528 = vsel %vm900, %v1523, 0
      %1530 = vmatprep.subr.bf16.mxu0 0
      %1531 = vmatpush1.bf16.xpose.msra.mxu0 %v1528
      %1532 = vmatprep.subr.bf16.mxu0 0
      %1533 = vmatpush1.bf16.xpose.msra.mxu0 0
      %1534 = vmatprep.subr.bf16.mxu0 0
      %1535 = vmatpush1.bf16.xpose.msra.mxu0 0
      %1536 = vmatprep.subr.bf16.mxu0 0
      %1537 = vmatpush1.bf16.xpose.msra.mxu0 0
      %1538 = vmatprep.subr.bf16.mxu0 0
      %1539 = vmatpush1.bf16.xpose.msra.mxu0 0
      %1540 = vmatprep.subr.bf16.mxu0 0
      %1541 = vmatpush1.bf16.xpose.msra.mxu0 0
      %1542 = vmatprep.subr.bf16.mxu0 0
      %1543 = vmatpush1.bf16.xpose.msra.mxu0 0
      %1544 = vmatprep.subr.bf16.mxu0 0
      %1545 = vmatpush1.bf16.xpose.msra.mxu0 0
      %1546 = vmatprep.subr.bf16.mxu0 0
      %1547 = vmatpush1.bf16.xpose.msra.mxu0 0
      %1548 = vmatprep.subr.bf16.mxu0 0
      %1549 = vmatpush1.bf16.xpose.msra.mxu0 0
      %1550 = vmatprep.subr.bf16.mxu0 0
      %1551 = vmatpush1.bf16.xpose.msra.mxu0 0
      %1552 = vmatprep.subr.bf16.mxu0 0
      %1553 = vmatpush1.bf16.xpose.msra.mxu0 0
      %1554 = vmatprep.subr.bf16.mxu0 0
      %1555 = vmatpush1.bf16.xpose.msra.mxu0 0
      %1556 = vmatprep.subr.bf16.mxu0 0
      %1557 = vmatpush1.bf16.xpose.msra.mxu0 0
      %1558 = vmatprep.subr.bf16.mxu0 0
      %1559 = vmatpush1.bf16.xpose.msra.mxu0 0
      %1560 = vmatprep.subr.bf16.mxu0 0
      %1561 = vmatpush1.bf16.xpose.msra.mxu0 0
      %1562 = vmatprep.mubr.bf16.mxu0 0
      %1563 = vmatmul.mubr.bf16.gmra.mrb[0].mxu0 %v1525
      %v1564 = vpop.f32.mrb[0].mxu0
      %v1565 = vadd.f32 %v1372, %v1564
      %v1566 = vpop.f32.mrb[0].mxu0
      %v1567 = vpop.f32.mrb[0].mxu0
      %v1568 = vpop.f32.mrb[0].mxu0
      %1569 = vdwg.mxu0
      %v1570 = vsel %vm900, %v1418, -inf
      %1571 = vmax.xlane.f32.xlu0 %v1570
      %v1572 = vpop.xlane.xlu0 %1571
      %v1573 = vsel %vm900, %v1467, -inf
      %1574 = vmax.xlane.f32.xlu0 %v1573
      %v1575 = vpop.xlane.xlu0 %1574
      %v1576 = vsel %vm900, %v1516, -inf
      %1577 = vmax.xlane.f32.xlu0 %v1576
      %v1578 = vpop.xlane.xlu0 %1577
      %v1579 = vsel %vm900, %v1565, -inf
      %1580 = vmax.xlane.f32.xlu0 %v1579
      %v1581 = vpop.xlane.xlu0 %1580
      %v1582 = vsub.f32 %v1418, %v1572
      %v1583 = vsub.f32 %v1467, %v1575
      %v1584 = vsub.f32 %v1516, %v1578
      %v1585 = vsub.f32 %v1565, %v1581
      %v1586 = vmul.f32 %v1582, 1.442695
      %v1587 = vpow.pop %v1586
      %v1588 = vmul.f32 %v1583, 1.442695
      %v1589 = vpow.pop %v1588
      %v1590 = vmul.f32 %v1584, 1.442695
      %v1591 = vpow.pop %v1590
      %v1592 = vmul.f32 %v1585, 1.442695
      %v1593 = vpow.pop %v1592
      %v1594 = vsel %vm900, %v1587, 0.0
      %1595 = vadd.xlane.f32.xlu0 %v1594
      %v1596 = vpop.xlane.xlu0 %1595
      %v1597 = vsel %vm900, %v1589, 0.0
      %1598 = vadd.xlane.f32.xlu0 %v1597
      %v1599 = vpop.xlane.xlu0 %1598
      %v1600 = vsel %vm900, %v1591, 0.0
      %1601 = vadd.xlane.f32.xlu0 %v1600
      %v1602 = vpop.xlane.xlu0 %1601
      %v1603 = vsel %vm900, %v1593, 0.0
      %1604 = vadd.xlane.f32.xlu0 %v1603
      %v1605 = vpop.xlane.xlu0 %1604
      %v1606 = vrcp.pop %v1596
      %v1607 = vrcp.pop %v1599
      %v1608 = vrcp.pop %v1602
      %v1609 = vrcp.pop %v1605
      %v1610 = vmul.f32 %v1587, %v1606
      %v1611 = vmul.f32 %v1589, %v1607
      %v1612 = vmul.f32 %v1591, %v1608
      %v1613 = vmul.f32 %v1593, %v1609
      %v1614 = vpack.c.bf16 %v1610, %v1610
      %v1615 = vpack.c.bf16 %v1611, %v1611
      %v1616 = vpack.c.bf16 %v1612, %v1612
      %v1617 = vpack.c.bf16 %v1613, %v1613
      %1618 = vrot.lane.b32.xlu0 %v1362, 64
      %v1619 = vpop.permute.xlu0 %1618
      %v1621 = vsel %vm900, %v1614, 0
      %v1624 = vsel %vm1147, %v1619, 0
      %1626 = vmatprep.subr.bf16.mxu0 0
      %1627 = vmatpush1.bf16.msra.mxu0 %v1624
      %1628 = vmatprep.subr.bf16.mxu0 0
      %1629 = vmatpush1.bf16.msra.mxu0 0
      %1630 = vmatprep.subr.bf16.mxu0 0
      %1631 = vmatpush1.bf16.msra.mxu0 0
      %1632 = vmatprep.subr.bf16.mxu0 0
      %1633 = vmatpush1.bf16.msra.mxu0 0
      %1634 = vmatprep.subr.bf16.mxu0 0
      %1635 = vmatpush1.bf16.msra.mxu0 0
      %1636 = vmatprep.subr.bf16.mxu0 0
      %1637 = vmatpush1.bf16.msra.mxu0 0
      %1638 = vmatprep.subr.bf16.mxu0 0
      %1639 = vmatpush1.bf16.msra.mxu0 0
      %1640 = vmatprep.subr.bf16.mxu0 0
      %1641 = vmatpush1.bf16.msra.mxu0 0
      %1642 = vmatprep.subr.bf16.mxu0 0
      %1643 = vmatpush1.bf16.msra.mxu0 0
      %1644 = vmatprep.subr.bf16.mxu0 0
      %1645 = vmatpush1.bf16.msra.mxu0 0
      %1646 = vmatprep.subr.bf16.mxu0 0
      %1647 = vmatpush1.bf16.msra.mxu0 0
      %1648 = vmatprep.subr.bf16.mxu0 0
      %1649 = vmatpush1.bf16.msra.mxu0 0
      %1650 = vmatprep.subr.bf16.mxu0 0
      %1651 = vmatpush1.bf16.msra.mxu0 0
      %1652 = vmatprep.subr.bf16.mxu0 0
      %1653 = vmatpush1.bf16.msra.mxu0 0
      %1654 = vmatprep.subr.bf16.mxu0 0
      %1655 = vmatpush1.bf16.msra.mxu0 0
      %1656 = vmatprep.subr.bf16.mxu0 0
      %1657 = vmatpush1.bf16.msra.mxu0 0
      %1658 = vmatprep.mubr.bf16.mxu0 0
      %1659 = vmatmul.mubr.bf16.gmra.mrb[0].mxu0 %v1621
      %v1660 = vpop.f32.mrb[0].mxu0
      %v1661 = vadd.f32 0.0, %v1660
      %v1662 = vpop.f32.mrb[0].mxu0
      %v1663 = vpop.f32.mrb[0].mxu0
      %v1664 = vpop.f32.mrb[0].mxu0
      %1665 = vdwg.mxu0
      %1666 = vrot.lane.b32.xlu0 %v1363, 64
      %v1667 = vpop.permute.xlu0 %1666
      %v1669 = vsel %vm900, %v1615, 0
      %v1672 = vsel %vm1147, %v1667, 0
      %1674 = vmatprep.subr.bf16.mxu0 0
      %1675 = vmatpush1.bf16.msra.mxu0 %v1672
      %1676 = vmatprep.subr.bf16.mxu0 0
      %1677 = vmatpush1.bf16.msra.mxu0 0
      %1678 = vmatprep.subr.bf16.mxu0 0
      %1679 = vmatpush1.bf16.msra.mxu0 0
      %1680 = vmatprep.subr.bf16.mxu0 0
      %1681 = vmatpush1.bf16.msra.mxu0 0
      %1682 = vmatprep.subr.bf16.mxu0 0
      %1683 = vmatpush1.bf16.msra.mxu0 0
      %1684 = vmatprep.subr.bf16.mxu0 0
      %1685 = vmatpush1.bf16.msra.mxu0 0
      %1686 = vmatprep.subr.bf16.mxu0 0
      %1687 = vmatpush1.bf16.msra.mxu0 0
      %1688 = vmatprep.subr.bf16.mxu0 0
      %1689 = vmatpush1.bf16.msra.mxu0 0
      %1690 = vmatprep.subr.bf16.mxu0 0
      %1691 = vmatpush1.bf16.msra.mxu0 0
      %1692 = vmatprep.subr.bf16.mxu0 0
      %1693 = vmatpush1.bf16.msra.mxu0 0
      %1694 = vmatprep.subr.bf16.mxu0 0
      %1695 = vmatpush1.bf16.msra.mxu0 0
      %1696 = vmatprep.subr.bf16.mxu0 0
      %1697 = vmatpush1.bf16.msra.mxu0 0
      %1698 = vmatprep.subr.bf16.mxu0 0
      %1699 = vmatpush1.bf16.msra.mxu0 0
      %1700 = vmatprep.subr.bf16.mxu0 0
      %1701 = vmatpush1.bf16.msra.mxu0 0
      %1702 = vmatprep.subr.bf16.mxu0 0
      %1703 = vmatpush1.bf16.msra.mxu0 0
      %1704 = vmatprep.subr.bf16.mxu0 0
      %1705 = vmatpush1.bf16.msra.mxu0 0
      %1706 = vmatprep.mubr.bf16.mxu0 0
      %1707 = vmatmul.mubr.bf16.gmra.mrb[0].mxu0 %v1669
      %v1708 = vpop.f32.mrb[0].mxu0
      %v1709 = vadd.f32 0.0, %v1708
      %v1710 = vpop.f32.mrb[0].mxu0
      %v1711 = vpop.f32.mrb[0].mxu0
      %v1712 = vpop.f32.mrb[0].mxu0
      %1713 = vdwg.mxu0
      %1714 = vrot.lane.b32.xlu0 %v1364, 64
      %v1715 = vpop.permute.xlu0 %1714
      %v1717 = vsel %vm900, %v1616, 0
      %v1720 = vsel %vm1147, %v1715, 0
      %1722 = vmatprep.subr.bf16.mxu0 0
      %1723 = vmatpush1.bf16.msra.mxu0 %v1720
      %1724 = vmatprep.subr.bf16.mxu0 0
      %1725 = vmatpush1.bf16.msra.mxu0 0
      %1726 = vmatprep.subr.bf16.mxu0 0
      %1727 = vmatpush1.bf16.msra.mxu0 0
      %1728 = vmatprep.subr.bf16.mxu0 0
      %1729 = vmatpush1.bf16.msra.mxu0 0
      %1730 = vmatprep.subr.bf16.mxu0 0
      %1731 = vmatpush1.bf16.msra.mxu0 0
      %1732 = vmatprep.subr.bf16.mxu0 0
      %1733 = vmatpush1.bf16.msra.mxu0 0
      %1734 = vmatprep.subr.bf16.mxu0 0
      %1735 = vmatpush1.bf16.msra.mxu0 0
      %1736 = vmatprep.subr.bf16.mxu0 0
      %1737 = vmatpush1.bf16.msra.mxu0 0
      %1738 = vmatprep.subr.bf16.mxu0 0
      %1739 = vmatpush1.bf16.msra.mxu0 0
      %1740 = vmatprep.subr.bf16.mxu0 0
      %1741 = vmatpush1.bf16.msra.mxu0 0
      %1742 = vmatprep.subr.bf16.mxu0 0
      %1743 = vmatpush1.bf16.msra.mxu0 0
      %1744 = vmatprep.subr.bf16.mxu0 0
      %1745 = vmatpush1.bf16.msra.mxu0 0
      %1746 = vmatprep.subr.bf16.mxu0 0
      %1747 = vmatpush1.bf16.msra.mxu0 0
      %1748 = vmatprep.subr.bf16.mxu0 0
      %1749 = vmatpush1.bf16.msra.mxu0 0
      %1750 = vmatprep.subr.bf16.mxu0 0
      %1751 = vmatpush1.bf16.msra.mxu0 0
      %1752 = vmatprep.subr.bf16.mxu0 0
      %1753 = vmatpush1.bf16.msra.mxu0 0
      %1754 = vmatprep.mubr.bf16.mxu0 0
      %1755 = vmatmul.mubr.bf16.gmra.mrb[0].mxu0 %v1717
      %v1756 = vpop.f32.mrb[0].mxu0
      %v1757 = vadd.f32 0.0, %v1756
      %v1758 = vpop.f32.mrb[0].mxu0
      %v1759 = vpop.f32.mrb[0].mxu0
      %v1760 = vpop.f32.mrb[0].mxu0
      %1761 = vdwg.mxu0
      %1762 = vrot.lane.b32.xlu0 %v1365, 64
      %v1763 = vpop.permute.xlu0 %1762
      %v1765 = vsel %vm900, %v1617, 0
      %v1768 = vsel %vm1147, %v1763, 0
      %1770 = vmatprep.subr.bf16.mxu0 0
      %1771 = vmatpush1.bf16.msra.mxu0 %v1768
      %1772 = vmatprep.subr.bf16.mxu0 0
      %1773 = vmatpush1.bf16.msra.mxu0 0
      %1774 = vmatprep.subr.bf16.mxu0 0
      %1775 = vmatpush1.bf16.msra.mxu0 0
      %1776 = vmatprep.subr.bf16.mxu0 0
      %1777 = vmatpush1.bf16.msra.mxu0 0
      %1778 = vmatprep.subr.bf16.mxu0 0
      %1779 = vmatpush1.bf16.msra.mxu0 0
      %1780 = vmatprep.subr.bf16.mxu0 0
      %1781 = vmatpush1.bf16.msra.mxu0 0
      %1782 = vmatprep.subr.bf16.mxu0 0
      %1783 = vmatpush1.bf16.msra.mxu0 0
      %1784 = vmatprep.subr.bf16.mxu0 0
      %1785 = vmatpush1.bf16.msra.mxu0 0
      %1786 = vmatprep.subr.bf16.mxu0 0
      %1787 = vmatpush1.bf16.msra.mxu0 0
      %1788 = vmatprep.subr.bf16.mxu0 0
      %1789 = vmatpush1.bf16.msra.mxu0 0
      %1790 = vmatprep.subr.bf16.mxu0 0
      %1791 = vmatpush1.bf16.msra.mxu0 0
      %1792 = vmatprep.subr.bf16.mxu0 0
      %1793 = vmatpush1.bf16.msra.mxu0 0
      %1794 = vmatprep.subr.bf16.mxu0 0
      %1795 = vmatpush1.bf16.msra.mxu0 0
      %1796 = vmatprep.subr.bf16.mxu0 0
      %1797 = vmatpush1.bf16.msra.mxu0 0
      %1798 = vmatprep.subr.bf16.mxu0 0
      %1799 = vmatpush1.bf16.msra.mxu0 0
      %1800 = vmatprep.subr.bf16.mxu0 0
      %1801 = vmatpush1.bf16.msra.mxu0 0
      %1802 = vmatprep.mubr.bf16.mxu0 0
      %1803 = vmatmul.mubr.bf16.gmra.mrb[0].mxu0 %v1765
      %v1804 = vpop.f32.mrb[0].mxu0
      %v1805 = vadd.f32 0.0, %v1804
      %v1806 = vpop.f32.mrb[0].mxu0
      %v1807 = vpop.f32.mrb[0].mxu0
      %v1808 = vpop.f32.mrb[0].mxu0
      %1809 = vdwg.mxu0
      %1811 = vrot.lane.b32.xlu0 %v1709, 8
      %v1812 = vpop.permute.xlu0 %1811
      %1815 = vrot.lane.b32.xlu0 %v1757, 16
      %v1816 = vpop.permute.xlu0 %1815
      %1819 = vrot.lane.b32.xlu0 %v1805, 24
      %v1820 = vpop.permute.xlu0 %1819
      %v1822 = vsel %vm900, %v1661, %v1812
      %v1823 = vsel %vm1348, %v1822, %v1816
      %v1824 = vsel %vm1350, %v1823, %v1820
      %v1825 = vpack.c.bf16 %v1824, %v1351
      %v1826 = vld [vmem:[%s710] sm:$0xf]
      %v1827 = vld [vmem:[%s710 + $0x4] sm:$0xf]
      %v1828 = vld [vmem:[%s710 + $0x8] sm:$0xf]
      %v1829 = vld [vmem:[%s710 + $0xc] sm:$0xf]
      %v1830 = vld [vmem:[%s713] sm:$0x1]
      %v1832 = vlaneseq
      %v1833 = vshrl.u32 %v1832, 7
      %v1834 = vsub.s32 0, %v1833
      %v1835 = vrot.slane %v1830, %v1834
      %v1841 = vunpack.c.l.b16 %v1826
      %v1842 = vunpack.c.l.b16 %v1827
      %v1843 = vunpack.c.l.b16 %v1828
      %v1844 = vunpack.c.l.b16 %v1829
      %v1845 = vpack.c.b16 %v1842, %v1841
      %v1846 = vpack.c.b16 %v1844, %v1843
      %v1850 = vsel %vm831, %v1825, 0
      %1852 = vmatprep.subr.bf16.mxu0 0
      %1853 = vmatpush1.bf16.msra.mxu0 %v1845
      %1854 = vmatprep.subr.bf16.mxu0 0
      %1855 = vmatpush1.bf16.msra.mxu0 %v1846
      %1856 = vmatprep.subr.bf16.mxu0 0
      %1857 = vmatpush1.bf16.msra.mxu0 0
      %1858 = vmatprep.subr.bf16.mxu0 0
      %1859 = vmatpush1.bf16.msra.mxu0 0
      %1860 = vmatprep.subr.bf16.mxu0 0
      %1861 = vmatpush1.bf16.msra.mxu0 0
      %1862 = vmatprep.subr.bf16.mxu0 0
      %1863 = vmatpush1.bf16.msra.mxu0 0
      %1864 = vmatprep.subr.bf16.mxu0 0
      %1865 = vmatpush1.bf16.msra.mxu0 0
      %1866 = vmatprep.subr.bf16.mxu0 0
      %1867 = vmatpush1.bf16.msra.mxu0 0
      %1868 = vmatprep.subr.bf16.mxu0 0
      %1869 = vmatpush1.bf16.msra.mxu0 0
      %1870 = vmatprep.subr.bf16.mxu0 0
      %1871 = vmatpush1.bf16.msra.mxu0 0
      %1872 = vmatprep.subr.bf16.mxu0 0
      %1873 = vmatpush1.bf16.msra.mxu0 0
      %1874 = vmatprep.subr.bf16.mxu0 0
      %1875 = vmatpush1.bf16.msra.mxu0 0
      %1876 = vmatprep.subr.bf16.mxu0 0
      %1877 = vmatpush1.bf16.msra.mxu0 0
      %1878 = vmatprep.subr.bf16.mxu0 0
      %1879 = vmatpush1.bf16.msra.mxu0 0
      %1880 = vmatprep.subr.bf16.mxu0 0
      %1881 = vmatpush1.bf16.msra.mxu0 0
      %1882 = vmatprep.subr.bf16.mxu0 0
      %1883 = vmatpush1.bf16.msra.mxu0 0
      %1884 = vmatprep.mubr.bf16.mxu0 0
      %1885 = vmatmul.mubr.bf16.gmra.mrb[0].mxu0 %v1850
      %v1886 = vpop.f32.mrb[0].mxu0
      %v1887 = vadd.f32 %v1835, %v1886
      %v1888 = vpop.f32.mrb[0].mxu0
      %v1889 = vpop.f32.mrb[0].mxu0
      %v1890 = vadd.f32 %v1835, %v1889
      %v1891 = vpop.f32.mrb[0].mxu0
      %1892 = vdwg.mxu0
      %v1893 = vadd.f32 %v805, %v1887
      %v1894 = vadd.f32 %v806, %v1890
      %v1895 = vld [vmem:[%s716] sm:$0x1]
      %v1896 = vld [vmem:[%s719] sm:$0x1]
      %v1897 = vsel %vm831, %v1893, 0.0
      %1898 = vadd.xlane.f32.xlu0 %v1897
      %v1899 = vpop.xlane.xlu0 %1898
      %v1900 = vsel %vm831, %v1894, 0.0
      %1901 = vadd.xlane.f32.xlu0 %v1900
      %v1902 = vpop.xlane.xlu0 %1901
      %v1903 = vrcp.pop 32.0
      %v1904 = vmul.f32 %v1899, %v1903
      %v1905 = vmul.f32 %v1902, %v1903
      %v1906 = vsub.f32 %v1893, %v1904
      %v1907 = vsub.f32 %v1894, %v1905
      %v1908 = vmul.f32 %v1906, %v1906
      %v1909 = vmul.f32 %v1907, %v1907
      %v1910 = vsel %vm831, %v1908, 0.0
      %1911 = vadd.xlane.f32.xlu0 %v1910
      %v1912 = vpop.xlane.xlu0 %1911
      %v1913 = vsel %vm831, %v1909, 0.0
      %1914 = vadd.xlane.f32.xlu0 %v1913
      %v1915 = vpop.xlane.xlu0 %1914
      %v1916 = vmul.f32 %v1912, %v1903
      %v1917 = vmul.f32 %v1915, %v1903
      %v1918 = vadd.f32 %v1916, 1e-12
      %v1919 = vadd.f32 %v1917, 1e-12
      %v1920 = vrsqrt.pop %v1918
      %v1921 = vrsqrt.pop %v1919
      %v1922 = vmul.f32 %v1906, %v1920
      %v1923 = vmul.f32 %v1907, %v1921
      %v1925 = vlaneseq
      %v1926 = vshrl.u32 %v1925, 7
      %v1927 = vsub.s32 0, %v1926
      %v1928 = vrot.slane %v1895, %v1927
      %v1930 = vmul.f32 %v1922, %v1928
      %v1931 = vmul.f32 %v1923, %v1928
      %v1933 = vlaneseq
      %v1934 = vshrl.u32 %v1933, 7
      %v1935 = vsub.s32 0, %v1934
      %v1936 = vrot.slane %v1896, %v1935
      %v1938 = vadd.f32 %v1930, %v1936
      %v1939 = vadd.f32 %v1931, %v1936
      %v1940 = vpack.c.bf16 %v1939, %v1938
      %v1941 = vld [vmem:[%s724] sm:$0xf]
      %v1942 = vld [vmem:[%s724 + $0x4] sm:$0xf]
      %v1943 = vld [vmem:[%s724 + $0x8] sm:$0xf]
      %v1944 = vld [vmem:[%s724 + $0xc] sm:$0xf]
      %v1945 = vld [vmem:[%s727] sm:$0x1]
      %v1947 = vlaneseq
      %v1948 = vshrl.u32 %v1947, 7
      %v1949 = vsub.s32 0, %v1948
      %v1950 = vrot.slane %v1945, %v1949
      %v1956 = vunpack.c.l.b16 %v1941
      %v1957 = vunpack.c.l.b16 %v1942
      %v1958 = vunpack.c.l.b16 %v1943
      %v1959 = vunpack.c.l.b16 %v1944
      %v1960 = vpack.c.b16 %v1957, %v1956
      %v1961 = vpack.c.b16 %v1959, %v1958
      %v1965 = vsel %vm831, %v1940, 0
      %1967 = vmatprep.subr.bf16.mxu0 0
      %1968 = vmatpush1.bf16.msra.mxu0 %v1960
      %1969 = vmatprep.subr.bf16.mxu0 0
      %1970 = vmatpush1.bf16.msra.mxu0 %v1961
      %1971 = vmatprep.subr.bf16.mxu0 0
      %1972 = vmatpush1.bf16.msra.mxu0 0
      %1973 = vmatprep.subr.bf16.mxu0 0
      %1974 = vmatpush1.bf16.msra.mxu0 0
      %1975 = vmatprep.subr.bf16.mxu0 0
      %1976 = vmatpush1.bf16.msra.mxu0 0
      %1977 = vmatprep.subr.bf16.mxu0 0
      %1978 = vmatpush1.bf16.msra.mxu0 0
      %1979 = vmatprep.subr.bf16.mxu0 0
      %1980 = vmatpush1.bf16.msra.mxu0 0
      %1981 = vmatprep.subr.bf16.mxu0 0
      %1982 = vmatpush1.bf16.msra.mxu0 0
      %1983 = vmatprep.subr.bf16.mxu0 0
      %1984 = vmatpush1.bf16.msra.mxu0 0
      %1985 = vmatprep.subr.bf16.mxu0 0
      %1986 = vmatpush1.bf16.msra.mxu0 0
      %1987 = vmatprep.subr.bf16.mxu0 0
      %1988 = vmatpush1.bf16.msra.mxu0 0
      %1989 = vmatprep.subr.bf16.mxu0 0
      %1990 = vmatpush1.bf16.msra.mxu0 0
      %1991 = vmatprep.subr.bf16.mxu0 0
      %1992 = vmatpush1.bf16.msra.mxu0 0
      %1993 = vmatprep.subr.bf16.mxu0 0
      %1994 = vmatpush1.bf16.msra.mxu0 0
      %1995 = vmatprep.subr.bf16.mxu0 0
      %1996 = vmatpush1.bf16.msra.mxu0 0
      %1997 = vmatprep.subr.bf16.mxu0 0
      %1998 = vmatpush1.bf16.msra.mxu0 0
      %1999 = vmatprep.mubr.bf16.mxu0 0
      %2000 = vmatmul.mubr.bf16.gmra.mrb[0].mxu0 %v1965
      %v2001 = vpop.f32.mrb[0].mxu0
      %v2002 = vadd.f32 %v1950, %v2001
      %v2003 = vpop.f32.mrb[0].mxu0
      %v2004 = vpop.f32.mrb[0].mxu0
      %v2005 = vadd.f32 %v1950, %v2004
      %v2006 = vpop.f32.mrb[0].mxu0
      %2007 = vdwg.mxu0
      %v2008 = vmul.f32 %v2002, 0.5
      %v2009 = vmul.f32 %v2005, 0.5
      %v2010 = vmul.f32 %v2002, 0.044715
      %v2011 = vmul.f32 %v2005, 0.044715
      %v2012 = vmul.f32 %v2010, %v2002
      %v2013 = vmul.f32 %v2011, %v2005
      %v2014 = vmul.f32 %v2012, %v2002
      %v2015 = vmul.f32 %v2013, %v2005
      %v2016 = vadd.f32 %v2002, %v2014
      %v2017 = vadd.f32 %v2005, %v2015
      %v2018 = vmul.f32 %v2016, 0.7978846
      %v2019 = vmul.f32 %v2017, 0.7978846
      %v2020 = vtanh.pop %v2018
      %v2021 = vtanh.pop %v2019
      %v2022 = vadd.f32 %v2020, 1.0
      %v2023 = vadd.f32 %v2021, 1.0
      %v2024 = vmul.f32 %v2008, %v2022
      %v2025 = vmul.f32 %v2009, %v2023
      %v2026 = vpack.c.bf16 %v2025, %v2024
      %v2027 = vld [vmem:[%s732] sm:$0xf]
      %v2028 = vld [vmem:[%s732 + $0x4] sm:$0xf]
      %v2029 = vld [vmem:[%s732 + $0x8] sm:$0xf]
      %v2030 = vld [vmem:[%s732 + $0xc] sm:$0xf]
      %v2031 = vld [vmem:[%s732 + $0x10] sm:$0xf]
      %v2032 = vld [vmem:[%s732 + $0x14] sm:$0xf]
      %v2033 = vld [vmem:[%s732 + $0x18] sm:$0xf]
      %v2034 = vld [vmem:[%s732 + $0x1c] sm:$0xf]
      %v2035 = vld [vmem:[%s735] sm:$0x1]
      %v2037 = vlaneseq
      %v2038 = vshrl.u32 %v2037, 7
      %v2039 = vsub.s32 0, %v2038
      %v2040 = vrot.slane %v2035, %v2039
      %v2050 = vunpack.c.l.b16 %v2027
      %v2051 = vunpack.c.l.b16 %v2028
      %v2052 = vunpack.c.l.b16 %v2029
      %v2053 = vunpack.c.l.b16 %v2030
      %v2054 = vunpack.c.l.b16 %v2031
      %v2055 = vunpack.c.l.b16 %v2032
      %v2056 = vunpack.c.l.b16 %v2033
      %v2057 = vunpack.c.l.b16 %v2034
      %v2058 = vpack.c.b16 %v2051, %v2050
      %v2059 = vpack.c.b16 %v2053, %v2052
      %v2060 = vpack.c.b16 %v2055, %v2054
      %v2061 = vpack.c.b16 %v2057, %v2056
      %vm2066 = vcmask 523264
      %v2068 = vsel %vm2066, %v2026, 0
      %2070 = vmatprep.subr.bf16.mxu0 0
      %2071 = vmatpush1.bf16.msra.mxu0 %v2058
      %2072 = vmatprep.subr.bf16.mxu0 0
      %2073 = vmatpush1.bf16.msra.mxu0 %v2059
      %2074 = vmatprep.subr.bf16.mxu0 0
      %2075 = vmatpush1.bf16.msra.mxu0 %v2060
      %2076 = vmatprep.subr.bf16.mxu0 0
      %2077 = vmatpush1.bf16.msra.mxu0 %v2061
      %2078 = vmatprep.subr.bf16.mxu0 0
      %2079 = vmatpush1.bf16.msra.mxu0 0
      %2080 = vmatprep.subr.bf16.mxu0 0
      %2081 = vmatpush1.bf16.msra.mxu0 0
      %2082 = vmatprep.subr.bf16.mxu0 0
      %2083 = vmatpush1.bf16.msra.mxu0 0
      %2084 = vmatprep.subr.bf16.mxu0 0
      %2085 = vmatpush1.bf16.msra.mxu0 0
      %2086 = vmatprep.subr.bf16.mxu0 0
      %2087 = vmatpush1.bf16.msra.mxu0 0
      %2088 = vmatprep.subr.bf16.mxu0 0
      %2089 = vmatpush1.bf16.msra.mxu0 0
      %2090 = vmatprep.subr.bf16.mxu0 0
      %2091 = vmatpush1.bf16.msra.mxu0 0
      %2092 = vmatprep.subr.bf16.mxu0 0
      %2093 = vmatpush1.bf16.msra.mxu0 0
      %2094 = vmatprep.subr.bf16.mxu0 0
      %2095 = vmatpush1.bf16.msra.mxu0 0
      %2096 = vmatprep.subr.bf16.mxu0 0
      %2097 = vmatpush1.bf16.msra.mxu0 0
      %2098 = vmatprep.subr.bf16.mxu0 0
      %2099 = vmatpush1.bf16.msra.mxu0 0
      %2100 = vmatprep.subr.bf16.mxu0 0
      %2101 = vmatpush1.bf16.msra.mxu0 0
      %2102 = vmatprep.mubr.bf16.mxu0 0
      %2103 = vmatmul.mubr.bf16.gmra.mrb[0].mxu0 %v2068
      %v2104 = vpop.f32.mrb[0].mxu0
      %v2105 = vadd.f32 %v2040, %v2104
      %v2106 = vpop.f32.mrb[0].mxu0
      %v2107 = vpop.f32.mrb[0].mxu0
      %v2108 = vadd.f32 %v2040, %v2107
      %v2109 = vpop.f32.mrb[0].mxu0
      %2110 = vdwg.mxu0
      %v2111 = vadd.f32 %v1938, %v2105
      %v2112 = vadd.f32 %v1939, %v2108
      %v2113 = vld [vmem:[%s738] sm:$0x1]
      %v2114 = vld [vmem:[%s741] sm:$0x1]
      %v2115 = vsel %vm831, %v2111, 0.0
      %2116 = vadd.xlane.f32.xlu0 %v2115
      %v2117 = vpop.xlane.xlu0 %2116
      %v2118 = vsel %vm831, %v2112, 0.0
      %2119 = vadd.xlane.f32.xlu0 %v2118
      %v2120 = vpop.xlane.xlu0 %2119
      %v2121 = vmul.f32 %v2117, %v1903
      %v2122 = vmul.f32 %v2120, %v1903
      %v2123 = vsub.f32 %v2111, %v2121
      %v2124 = vsub.f32 %v2112, %v2122
      %v2125 = vmul.f32 %v2123, %v2123
      %v2126 = vmul.f32 %v2124, %v2124
      %v2127 = vsel %vm831, %v2125, 0.0
      %2128 = vadd.xlane.f32.xlu0 %v2127
      %v2129 = vpop.xlane.xlu0 %2128
      %v2130 = vsel %vm831, %v2126, 0.0
      %2131 = vadd.xlane.f32.xlu0 %v2130
      %v2132 = vpop.xlane.xlu0 %2131
      %v2133 = vmul.f32 %v2129, %v1903
      %v2134 = vmul.f32 %v2132, %v1903
      %v2135 = vadd.f32 %v2133, 1e-12
      %v2136 = vadd.f32 %v2134, 1e-12
      %v2137 = vrsqrt.pop %v2135
      %v2138 = vrsqrt.pop %v2136
      %v2139 = vmul.f32 %v2123, %v2137
      %v2140 = vmul.f32 %v2124, %v2138
      %v2142 = vlaneseq
      %v2143 = vshrl.u32 %v2142, 7
      %v2144 = vsub.s32 0, %v2143
      %v2145 = vrot.slane %v2113, %v2144
      %v2147 = vmul.f32 %v2139, %v2145
      %v2148 = vmul.f32 %v2140, %v2145
      %v2150 = vlaneseq
      %v2151 = vshrl.u32 %v2150, 7
      %v2152 = vsub.s32 0, %v2151
      %v2153 = vrot.slane %v2114, %v2152
      %v2155 = vadd.f32 %v2147, %v2153
      %v2156 = vadd.f32 %v2148, %v2153
      %2157 = vst.msk [vmem:[#allocation2] sm:$0xff] %vm831, %v2155
      %2158 = vst.msk [vmem:[#allocation2 + $0x8] sm:$0xff] %vm831, %v2156
      %p2159 = scmp.eq.s32.totalorder %s32, 1
      // Predicated region
      $region89: #{lasertagger_forward.2} parent=83 // pred_check
        %p2160 = pneg %p2159
      $region90: #{lasertagger_forward.2} parent=83 // pred_check_branch
        %2162 = sbr.rel (%p2160) target = $region92
      $region91: #{lasertagger_forward.2} parent=83 // pred_region
        %v2163 = vld [vmem:[#allocation2] sm:$0xff]
        %v2164 = vld [vmem:[#allocation2 + $0x8] sm:$0xff]
        %v2165 = vpack.c.bf16 %v2163, %v2163
        %v2166 = vpack.c.bf16 %v2164, %v2164
        %vm2167 = vcmask 257024
        %2168 = vst.msk [vmem:[%s746] sm:$0xf] %vm2167, %v2165
        %2169 = vst.msk [vmem:[%s746 + $0x4] sm:$0xf] %vm2167, %v2166
      $region92: #{lasertagger_forward.2} parent=83 // pred_fallthru
        _
      %s2170 = smul.u32 2, %s31
      %p2171 = scmp.lt.s32.totalorder %s2170, 1
      %s2172 = scalar_select %p2171, %s2170, 1
      %s2173 = smul.addr %s2172, 4
      %s2174 = scalar_lea.vmem %s16, %s2173
      // Predicated region
      $region93: #{lasertagger_forward.2} parent=83 // pred_check
        %p2175 = pneg %p463
      $region94: #{lasertagger_forward.2} parent=83 // pred_check_branch
        %2177 = sbr.rel (%p2175) target = $region96
      $region95: #{lasertagger_forward.2} parent=83 // pred_region
        %s2178 = smul.u32 2, %s31
      $region96: #{lasertagger_forward.2} parent=83 // pred_fallthru
        _
      // Predicated region
      $region97: #{lasertagger_forward.2} parent=83 // pred_check
        %p2179 = pneg %p463
      $region98: #{lasertagger_forward.2} parent=83 // pred_check_branch
        %2181 = sbr.rel (%p2179) target = $region100
      $region99: #{lasertagger_forward.2} parent=83 // pred_region
        %s2182 = smul.u32 2, %s31
        %p2183 = scmp.lt.s32.totalorder %s2182, 1
        %s2184 = scalar_select %p2183, %s2182, 1
        %s2185 = smul.addr %s2184, 4
        %s2186 = scalar_lea.vmem %s16, %s2185
      $region100: #{lasertagger_forward.2} parent=83 // pred_fallthru
        _
    $region84: #{lasertagger_forward.2} parent=5 // pred_fallthru
      _
    %p2187 = scmp.le.s32.totalorder 2, %s22
    // Predicated region
    $region101: #{lasertagger_forward.2} parent=5 // pred_check
      %p2188 = pneg %p2187
    $region102: #{lasertagger_forward.2} parent=5 // pred_check_branch
      %2190 = sbr.rel (%p2188) target = $region104
    $region103: #{lasertagger_forward.2} parent=5 // pred_region
      %s2191 = ssub.s32 %s22, 2
    $region104: #{lasertagger_forward.2} parent=5 // pred_fallthru
      _
  $region6: #{lasertagger_forward.2} parent=0 // loop_footer
    %s26 = sadd.s32 1, %s22
  $region7: #{lasertagger_forward.2} parent=0 // loop_footer_branch
    %21 = sbr.rel target = $region3
  $region8: #{lasertagger_forward.2} parent=0 // loop_exit
    _

</llo_original>
